<compile_context>
chip_gen: v7x
topology: tpu7x:2x2x1
jax: 0.10.0
libtpu: 0.0.40
codegen_flags: <defaults>
</compile_context>

<pallas_src>
import functools
import math

import jax
import jax.numpy as jnp
from jax import lax
from jax.experimental import pallas as pl
from jax.experimental.pallas import tpu as pltpu

BERT_MAX_LEN = 512  # same constant as the PyTorch module


# ----------------------------- small helpers --------------------------------
def _layer_norm(x, g, b, eps=1e-12):
    mu = jnp.mean(x, axis=-1, keepdims=True)
    var = jnp.mean((x - mu) ** 2, axis=-1, keepdims=True)
    return (x - mu) * lax.rsqrt(var + eps) * g + b


def _gelu(x):
    # tanh-approx GELU (EUP friendly); synthetic weights so erf parity not needed.
    c = math.sqrt(2.0 / math.pi)
    return 0.5 * x * (1.0 + jnp.tanh(c * (x + 0.044715 * x * x * x)))


# --------------- Pallas kernel: full encoder stack (grid = (L,)) -------------
def encoder_stack_kernel(x_ref, m_ref,
                         wqkv_ref, bqkv_ref, wo_ref, bo_ref, g1_ref, b1_ref,
                         wi_ref, bi_ref, wf_ref, bf_ref, g2_ref, b2_ref,
                         out_ref, h_ref, *, num_heads):
    l = pl.program_id(0)

    # Layer 0: load the (B, S, D) embedding block into the resident scratch.
    @pl.when(l == 0)
    def _():
        h_ref[...] = x_ref[...]

    B = h_ref.shape[0]
    H = num_heads

    # Per-layer weights (fetched from HBM exactly once per layer).
    wqkv = wqkv_ref[0]
    bqkv = bqkv_ref[0]
    wo = wo_ref[0]
    bo = bo_ref[0]
    g1 = g1_ref[0]
    b1 = b1_ref[0]
    wi = wi_ref[0]
    bi = bi_ref[0]
    wf = wf_ref[0]
    bfb = bf_ref[0]
    g2 = g2_ref[0]
    b2 = b2_ref[0]

    # Small static batch loop: every batch element reuses the same resident
    # layer weights, so weight HBM traffic is L * weights (not B * L).
    for b in range(B):
        x = h_ref[b]                            # (S, D) f32, resident activation
        S, D = x.shape
        dh = D // H
        scale = 1.0 / math.sqrt(dh)

        # BERT-style additive attention bias, computed once per (layer, batch).
        bias = (1.0 - m_ref[b]) * -10000.0      # (1, S)

        # Fused QKV projection: one (S,D)x(D,3D) bf16 MXU matmul, f32 accumulate.
        x_bf = x.astype(jnp.bfloat16)
        qkv = jnp.dot(x_bf, wqkv, preferred_element_type=jnp.float32) + bqkv
        qkv_bf = qkv.astype(jnp.bfloat16)

        # Split heads onto a leading batch axis (dh stays on the lane axis).
        def heads(base):                        # (S, 3D)-block -> (H, S, dh)
            return jnp.stack(
                [qkv_bf[:, base + h * dh: base + (h + 1) * dh] for h in range(H)],
                axis=0)

        q, k, v = heads(0), heads(D), heads(2 * D)

        # Batched-over-heads attention, single f32 softmax over (H, S, S).
        s = jnp.einsum('hqd,hkd->hqk', q, k,
                       preferred_element_type=jnp.float32) * scale + bias[None]
        s = s - jnp.max(s, axis=-1, keepdims=True)
        p = jnp.exp(s)
        p = p * pl.reciprocal(jnp.sum(p, axis=-1, keepdims=True), approx=True)
        ctx = jnp.einsum('hqk,hkd->hqd', p.astype(jnp.bfloat16), v,
                         preferred_element_type=jnp.float32)     # (H, S, dh)
        ctx = jnp.concatenate([ctx[h] for h in range(H)], axis=-1)  # (S, D)

        attn = jnp.dot(ctx.astype(jnp.bfloat16), wo,
                       preferred_element_type=jnp.float32) + bo
        h1 = _layer_norm(x + attn, g1, b1)

        inter = _gelu(jnp.dot(h1.astype(jnp.bfloat16), wi,
                              preferred_element_type=jnp.float32) + bi)
        ff = jnp.dot(inter.astype(jnp.bfloat16), wf,
                     preferred_element_type=jnp.float32) + bfb
        h_ref[b] = _layer_norm(h1 + ff, g2, b2)

    # Only the last encoder layer is written back to HBM, in bf16.
    @pl.when(l == pl.num_programs(0) - 1)
    def _():
        out_ref[...] = h_ref[...].astype(out_ref.dtype)


def encoder_stack(x, mask3, params, num_heads):
    """All L encoder layers in one pallas_call; activation stays in VMEM.

    Grid is (L,) only: per-layer bf16 weights are streamed from HBM exactly
    once; the full (B, S, D) activation is resident in a VMEM scratch, and the
    bf16 output block (constant index map) is written back once at the end.
    """
    B, S, D = x.shape
    L, _, F = params["wi"].shape
    bf16 = jnp.bfloat16

    def wspec(r, c):  # per-layer weight tile, streamed along the L grid axis
        return pl.BlockSpec((1, r, c), lambda l: (l, 0, 0))

    in_specs = [
        pl.BlockSpec((B, S, D), lambda l: (0, 0, 0)),   # x: fetched once (l==0)
        pl.BlockSpec((B, 1, S), lambda l: (0, 0, 0)),   # attention mask
        wspec(D, 3 * D), wspec(1, 3 * D),               # wqkv, bqkv
        wspec(D, D), wspec(1, D),                       # wo, bo
        wspec(1, D), wspec(1, D),                       # ln1 gamma/beta
        wspec(D, F), wspec(1, F),                       # wi, bi
        wspec(F, D), wspec(1, D),                       # wf, bf
        wspec(1, D), wspec(1, D),                       # ln2 gamma/beta
    ]
    return pl.pallas_call(
        functools.partial(encoder_stack_kernel, num_heads=num_heads),
        out_shape=jax.ShapeDtypeStruct((B, S, D), jnp.bfloat16),
        grid=(L,),
        in_specs=in_specs,
        out_specs=pl.BlockSpec((B, S, D), lambda l: (0, 0, 0)),
        scratch_shapes=[pltpu.VMEM((B, S, D), jnp.float32)],  # resident activation
        compiler_params=pltpu.CompilerParams(
            dimension_semantics=("arbitrary",),
            # < 64 MiB so v7x keeps headroom; > default scoped limit on v5e/v6e.
            vmem_limit_bytes=48 * 1024 * 1024),
    )(x, mask3,
      params["wqkv"].astype(bf16), params["bqkv"],
      params["wo"].astype(bf16), params["bo"],
      params["ln1_g"], params["ln1_b"],
      params["wi"].astype(bf16), params["bi"],
      params["wf"].astype(bf16), params["bf"],
      params["ln2_g"], params["ln2_b"])


# ------------------- Pallas kernel: subword -> word pooling ------------------
# meta kept as a (W, 3) VMEM block (tiny; the (W,S)x(S,D) matmul dominates).
# The indicator matmul runs in bf16 (f32 accumulation); the 1/count averaging
# scale stays in f32 and is applied after the matmul.
def subword_pool_kernel(meta_ref, emb_ref, out_ref):
    meta = meta_ref[0]                    # (W, 3) int32: [st, ed, word_mask]
    emb = emb_ref[0]                      # (S, D) bfloat16
    Wn = meta.shape[0]
    S = emb.shape[0]
    st = meta[:, 0:1]
    ed = meta[:, 1:2]
    wm = meta[:, 2:3]
    idx = lax.broadcasted_iota(jnp.int32, (Wn, S), 1)
    ind = jnp.logical_and(idx >= st, idx < ed).astype(jnp.float32)   # (W, S) 0/1
    cnt = (ed - st).astype(jnp.float32)
    scale = jnp.where(cnt > 0.0, 1.0 / jnp.maximum(cnt, 1.0), 0.0)
    scale = scale * (wm > 0).astype(jnp.float32)                     # (W, 1) f32
    summed = jnp.dot(ind.astype(jnp.bfloat16), emb,
                     preferred_element_type=jnp.float32)             # (W, D) f32
    out_ref[0] = summed * scale


def subword_pool(meta, bert_embedding):
    B, S, D = bert_embedding.shape
    W = meta.shape[1]
    return pl.pallas_call(
        subword_pool_kernel,
        out_shape=jax.ShapeDtypeStruct((B, W, D), jnp.float32),
        grid=(B,),
        in_specs=[pl.BlockSpec((1, W, 3), lambda b: (b, 0, 0)),
                  pl.BlockSpec((1, S, D), lambda b: (b, 0, 0))],
        out_specs=pl.BlockSpec((1, W, D), lambda b: (b, 0, 0)),
        compiler_params=pltpu.CompilerParams(dimension_semantics=("parallel",)),
    )(meta, bert_embedding)


# ------------------------------- JAX glue ------------------------------------
def init_params(key, num_layers, D, num_heads, F, vocab, max_pos):
    def nrm(k, shape):
        return jax.random.normal(k, shape, jnp.float32) * 0.02

    ks = jax.random.split(key, 16)
    L = num_layers
    return {
        "word_emb": nrm(ks[0], (vocab, D)),
        "pos_emb": nrm(ks[1], (max_pos, D)),
        "type_emb": nrm(ks[2], (2, D)),
        "emb_ln_g": jnp.ones((D,), jnp.float32),
        "emb_ln_b": jnp.zeros((D,), jnp.float32),
        # Per-layer weights stacked along a leading L axis so the single
        # pallas_call can pipeline layer l+1's weight DMA behind layer l.
        "wqkv": nrm(ks[3], (L, D, 3 * D)),
        "bqkv": nrm(ks[4], (L, 1, 3 * D)),
        "wo": nrm(ks[5], (L, D, D)),
        "bo": nrm(ks[6], (L, 1, D)),
        "ln1_g": 1.0 + nrm(ks[7], (L, 1, D)),
        "ln1_b": nrm(ks[8], (L, 1, D)),
        "wi": nrm(ks[9], (L, D, F)),
        "bi": nrm(ks[10], (L, 1, F)),
        "wf": nrm(ks[11], (L, F, D)),
        "bf": nrm(ks[12], (L, 1, D)),
        "ln2_g": 1.0 + nrm(ks[13], (L, 1, D)),
        "ln2_b": nrm(ks[14], (L, 1, D)),
    }


def embed(params, ids):
    B, S = ids.shape
    e = (params["word_emb"][ids]
         + params["pos_emb"][:S][None, :, :]
         + params["type_emb"][0][None, None, :])
    return _layer_norm(e, params["emb_ln_g"], params["emb_ln_b"])


def bert_forward(params, x_bert, x_bert_mask, x_bert_offset, x_mask, num_heads):
    """Mirrors Bert.forward (non linear-combine branch)."""
    B, sent_len = x_bert.shape
    last_layers = []
    p = 0
    while p < sent_len:                                   # chunking loop (== module)
        ids = x_bert[:, p:p + BERT_MAX_LEN]
        am = x_bert_mask[:, p:p + BERT_MAX_LEN]
        h = embed(params, ids)
        mask3 = am.astype(jnp.float32)[:, None, :]        # (B, 1, S)
        h = encoder_stack(h, mask3, params, num_heads)    # all layers, one call (bf16 out)
        last_layers.append(h)
        p += BERT_MAX_LEN
    bert_embedding = jnp.concatenate(last_layers, axis=1)  # (B, bert_sent_len, D) bf16

    meta = jnp.concatenate(
        [x_bert_offset.astype(jnp.int32),
         x_mask.astype(jnp.int32)[:, :, None]], axis=-1)   # (B, W, 3)
    return subword_pool(meta, bert_embedding)               # (B, W, D) f32


# ---------------------------- pure-JAX reference -----------------------------
def _ref_encoder_layer(x, mask3, params, l, num_heads):
    B, S, D = x.shape
    dh = D // num_heads
    bias = (1.0 - mask3) * -10000.0                       # (B, 1, S)
    qkv = jnp.einsum("bsd,de->bse", x, params["wqkv"][l]) + params["bqkv"][l]
    q = qkv[..., :D].reshape(B, S, num_heads, dh)
    k = qkv[..., D:2 * D].reshape(B, S, num_heads, dh)
    v = qkv[..., 2 * D:].reshape(B, S, num_heads, dh)
    s = jnp.einsum("bqhd,bkhd->bhqk", q, k) / math.sqrt(dh) + bias[:, :, None, :]
    p = jax.nn.softmax(s, axis=-1)
    ctx = jnp.einsum("bhqk,bkhd->bqhd", p, v).reshape(B, S, D)
    attn = jnp.einsum("bsd,de->bse", ctx, params["wo"][l]) + params["bo"][l]
    h1 = _layer_norm(x + attn, params["ln1_g"][l], params["ln1_b"][l])
    inter = _gelu(jnp.einsum("bsd,df->bsf", h1, params["wi"][l]) + params["bi"][l])
    ff = jnp.einsum("bsf,fd->bsd", inter, params["wf"][l]) + params["bf"][l]
    return _layer_norm(h1 + ff, params["ln2_g"][l], params["ln2_b"][l])


def reference_forward(params, x_bert, x_bert_mask, x_bert_offset, x_mask, num_heads):
    B, sent_len = x_bert.shape
    L = params["wqkv"].shape[0]
    last_layers = []
    p = 0
    while p < sent_len:
        ids = x_bert[:, p:p + BERT_MAX_LEN]
        am = x_bert_mask[:, p:p + BERT_MAX_LEN]
        h = embed(params, ids)
        mask3 = am.astype(jnp.float32)[:, None, :]
        for l in range(L):
            h = _ref_encoder_layer(h, mask3, params, l, num_heads)
        last_layers.append(h)
        p += BERT_MAX_LEN
    emb = jnp.concatenate(last_layers, axis=1)
    st = x_bert_offset[..., 0:1].astype(jnp.int32)
    ed = x_bert_offset[..., 1:2].astype(jnp.int32)
    wm = x_mask.astype(jnp.int32)[:, :, None]
    idx = jnp.arange(emb.shape[1], dtype=jnp.int32)[None, None, :]
    ind = ((idx >= st) & (idx < ed)).astype(jnp.float32)
    cnt = (ed - st).astype(jnp.float32)
    scale = jnp.where(cnt > 0, 1.0 / jnp.maximum(cnt, 1.0), 0.0) * (wm > 0)
    return jnp.einsum("bws,bsd->bwd", ind * scale, emb)


# --------------------------------- main ---------------------------------------
if __name__ == "__main__":
    B, S, W, D, H, F, L = 2, 16, 8, 32, 4, 64, 2
    vocab, max_pos = 100, 64

    key = jax.random.PRNGKey(0)
    kp, kid = jax.random.split(key)
    params = init_params(kp, L, D, H, F, vocab, max_pos)

    x_bert = jax.random.randint(kid, (B, S), 1, vocab, dtype=jnp.int32)
    x_bert_mask = jnp.array(
        [[1] * S,
         [1] * 12 + [0] * 4], dtype=jnp.int32)

    # batch 0: each word spans 2 subwords [2j, 2j+2); batch 1: single subwords,
    # word 6 has a degenerate span (st == ed -> zeros), word 7 is mask==0.
    off0 = jnp.stack([jnp.arange(W) * 2, jnp.arange(W) * 2 + 2], axis=-1)
    off1 = jnp.stack([jnp.arange(W), jnp.arange(W) + 1], axis=-1)
    off1 = off1.at[6].set(jnp.array([6, 6]))
    x_bert_offset = jnp.stack([off0, off1]).astype(jnp.int32)   # (B, W, 2)
    x_mask = jnp.array([[1] * W, [1] * 7 + [0]], dtype=jnp.int32)

    out = bert_forward(params, x_bert, x_bert_mask, x_bert_offset, x_mask, H)
    out = jax.block_until_ready(out)

    ref = reference_forward(params, x_bert, x_bert_mask, x_bert_offset, x_mask, H)
    assert out.shape == (B, W, D), out.shape
    assert bool(jnp.all(jnp.isfinite(out)))
    assert bool(jnp.allclose(out, ref, atol=3e-2, rtol=3e-2)), float(
        jnp.max(jnp.abs(out - ref)))
    print("KERNEL_OK")
</pallas_src>

<mosaic_0001>
module attributes {stable_mosaic.version = 11 : i64} {
  func.func @encoder_stack_kernel(%arg0: i32, %arg1: memref<2x16x32xf32, #tpu.memory_space<vmem>>, %arg2: memref<2x1x16xf32, #tpu.memory_space<vmem>>, %arg3: memref<1x32x96xbf16, #tpu.memory_space<vmem>>, %arg4: memref<1x1x96xf32, #tpu.memory_space<vmem>>, %arg5: memref<1x32x32xbf16, #tpu.memory_space<vmem>>, %arg6: memref<1x1x32xf32, #tpu.memory_space<vmem>>, %arg7: memref<1x1x32xf32, #tpu.memory_space<vmem>>, %arg8: memref<1x1x32xf32, #tpu.memory_space<vmem>>, %arg9: memref<1x32x64xbf16, #tpu.memory_space<vmem>>, %arg10: memref<1x1x64xf32, #tpu.memory_space<vmem>>, %arg11: memref<1x64x32xbf16, #tpu.memory_space<vmem>>, %arg12: memref<1x1x32xf32, #tpu.memory_space<vmem>>, %arg13: memref<1x1x32xf32, #tpu.memory_space<vmem>>, %arg14: memref<1x1x32xf32, #tpu.memory_space<vmem>>, %arg15: memref<2x16x32xbf16, #tpu.memory_space<vmem>>, %arg16: memref<2x16x32xf32, #tpu.memory_space<vmem>>) attributes {dimension_semantics = [#tpu.dimension_semantics<arbitrary>], iteration_bounds = array<i64: 2>, scalar_prefetch = 0 : i64, scratch_operands = 1 : i64, tpu.core_type = #tpu.core_type<tc>, window_params = [{pipeline_mode = #tpu.pipeline_mode<synchronous>, transform_indices = @transform_0, window_bounds = array<i64: 2, 16, 32>}, {pipeline_mode = #tpu.pipeline_mode<synchronous>, transform_indices = @transform_1, window_bounds = array<i64: 2, 1, 16>}, {transform_indices = @transform_2, window_bounds = array<i64: 1, 32, 96>}, {transform_indices = @transform_3, window_bounds = array<i64: 1, 1, 96>}, {transform_indices = @transform_4, window_bounds = array<i64: 1, 32, 32>}, {transform_indices = @transform_5, window_bounds = array<i64: 1, 1, 32>}, {transform_indices = @transform_6, window_bounds = array<i64: 1, 1, 32>}, {transform_indices = @transform_7, window_bounds = array<i64: 1, 1, 32>}, {transform_indices = @transform_8, window_bounds = array<i64: 1, 32, 64>}, {transform_indices = @transform_9, window_bounds = array<i64: 1, 1, 64>}, {transform_indices = @transform_10, window_bounds = array<i64: 1, 64, 32>}, {transform_indices = @transform_11, window_bounds = array<i64: 1, 1, 32>}, {transform_indices = @transform_12, window_bounds = array<i64: 1, 1, 32>}, {transform_indices = @transform_13, window_bounds = array<i64: 1, 1, 32>}, {pipeline_mode = #tpu.pipeline_mode<synchronous>, transform_indices = @transform_14, window_bounds = array<i64: 2, 16, 32>}]} {
    %c0_i32 = arith.constant 0 : i32
    %0 = arith.cmpi eq, %arg0, %c0_i32 : i32
    %1 = arith.extui %0 : i1 to i32
    %c0_i32_0 = arith.constant 0 : i32
    %2 = arith.cmpi ne, %1, %c0_i32_0 : i32
    scf.if %2 {
      %c0_103 = arith.constant 0 : index
      %c0_104 = arith.constant 0 : index
      %c0_105 = arith.constant 0 : index
      %312 = vector.load %arg1[%c0_103, %c0_104, %c0_105] : memref<2x16x32xf32, #tpu.memory_space<vmem>>, vector<2x16x32xf32>
      %c0_106 = arith.constant 0 : index
      %c0_107 = arith.constant 0 : index
      %c0_108 = arith.constant 0 : index
      %313 = vector.load %arg16[%c0_106, %c0_107, %c0_108] : memref<2x16x32xf32, #tpu.memory_space<vmem>>, vector<2x16x32xf32>
      tpu.vector_store %arg16[%c0_106, %c0_107, %c0_108], %312 {strides = array<i32>} : memref<2x16x32xf32, #tpu.memory_space<vmem>>, vector<2x16x32xf32>,
    } else {
    }
    %c0 = arith.constant 0 : index
    %c0_1 = arith.constant 0 : index
    %c0_2 = arith.constant 0 : index
    %3 = vector.load %arg3[%c0, %c0_1, %c0_2] : memref<1x32x96xbf16, #tpu.memory_space<vmem>>, vector<1x32x96xbf16>
    %4 = vector.shape_cast %3 : vector<1x32x96xbf16> to vector<32x96xbf16>
    %c0_3 = arith.constant 0 : index
    %c0_4 = arith.constant 0 : index
    %c0_5 = arith.constant 0 : index
    %5 = vector.load %arg4[%c0_3, %c0_4, %c0_5] : memref<1x1x96xf32, #tpu.memory_space<vmem>>, vector<1x1x96xf32>
    %6 = vector.shape_cast %5 : vector<1x1x96xf32> to vector<1x96xf32>
    %c0_6 = arith.constant 0 : index
    %c0_7 = arith.constant 0 : index
    %c0_8 = arith.constant 0 : index
    %7 = vector.load %arg5[%c0_6, %c0_7, %c0_8] : memref<1x32x32xbf16, #tpu.memory_space<vmem>>, vector<1x32x32xbf16>
    %8 = vector.shape_cast %7 : vector<1x32x32xbf16> to vector<32x32xbf16>
    %c0_9 = arith.constant 0 : index
    %c0_10 = arith.constant 0 : index
    %c0_11 = arith.constant 0 : index
    %9 = vector.load %arg6[%c0_9, %c0_10, %c0_11] : memref<1x1x32xf32, #tpu.memory_space<vmem>>, vector<1x1x32xf32>
    %10 = vector.shape_cast %9 : vector<1x1x32xf32> to vector<1x32xf32>
    %c0_12 = arith.constant 0 : index
    %c0_13 = arith.constant 0 : index
    %c0_14 = arith.constant 0 : index
    %11 = vector.load %arg7[%c0_12, %c0_13, %c0_14] : memref<1x1x32xf32, #tpu.memory_space<vmem>>, vector<1x1x32xf32>
    %12 = vector.shape_cast %11 : vector<1x1x32xf32> to vector<1x32xf32>
    %c0_15 = arith.constant 0 : index
    %c0_16 = arith.constant 0 : index
    %c0_17 = arith.constant 0 : index
    %13 = vector.load %arg8[%c0_15, %c0_16, %c0_17] : memref<1x1x32xf32, #tpu.memory_space<vmem>>, vector<1x1x32xf32>
    %14 = vector.shape_cast %13 : vector<1x1x32xf32> to vector<1x32xf32>
    %c0_18 = arith.constant 0 : index
    %c0_19 = arith.constant 0 : index
    %c0_20 = arith.constant 0 : index
    %15 = vector.load %arg9[%c0_18, %c0_19, %c0_20] : memref<1x32x64xbf16, #tpu.memory_space<vmem>>, vector<1x32x64xbf16>
    %16 = vector.shape_cast %15 : vector<1x32x64xbf16> to vector<32x64xbf16>
    %c0_21 = arith.constant 0 : index
    %c0_22 = arith.constant 0 : index
    %c0_23 = arith.constant 0 : index
    %17 = vector.load %arg10[%c0_21, %c0_22, %c0_23] : memref<1x1x64xf32, #tpu.memory_space<vmem>>, vector<1x1x64xf32>
    %18 = vector.shape_cast %17 : vector<1x1x64xf32> to vector<1x64xf32>
    %c0_24 = arith.constant 0 : index
    %c0_25 = arith.constant 0 : index
    %c0_26 = arith.constant 0 : index
    %19 = vector.load %arg11[%c0_24, %c0_25, %c0_26] : memref<1x64x32xbf16, #tpu.memory_space<vmem>>, vector<1x64x32xbf16>
    %20 = vector.shape_cast %19 : vector<1x64x32xbf16> to vector<64x32xbf16>
    %c0_27 = arith.constant 0 : index
    %c0_28 = arith.constant 0 : index
    %c0_29 = arith.constant 0 : index
    %21 = vector.load %arg12[%c0_27, %c0_28, %c0_29] : memref<1x1x32xf32, #tpu.memory_space<vmem>>, vector<1x1x32xf32>
    %22 = vector.shape_cast %21 : vector<1x1x32xf32> to vector<1x32xf32>
    %c0_30 = arith.constant 0 : index
    %c0_31 = arith.constant 0 : index
    %c0_32 = arith.constant 0 : index
    %23 = vector.load %arg13[%c0_30, %c0_31, %c0_32] : memref<1x1x32xf32, #tpu.memory_space<vmem>>, vector<1x1x32xf32>
    %24 = vector.shape_cast %23 : vector<1x1x32xf32> to vector<1x32xf32>
    %c0_33 = arith.constant 0 : index
    %c0_34 = arith.constant 0 : index
    %c0_35 = arith.constant 0 : index
    %25 = vector.load %arg14[%c0_33, %c0_34, %c0_35] : memref<1x1x32xf32, #tpu.memory_space<vmem>>, vector<1x1x32xf32>
    %26 = vector.shape_cast %25 : vector<1x1x32xf32> to vector<1x32xf32>
    %c0_36 = arith.constant 0 : index
    %c0_37 = arith.constant 0 : index
    %c0_38 = arith.constant 0 : index
    %27 = vector.load %arg16[%c0_36, %c0_37, %c0_38] : memref<2x16x32xf32, #tpu.memory_space<vmem>>, vector<1x16x32xf32>
    %28 = vector.shape_cast %27 : vector<1x16x32xf32> to vector<16x32xf32>
    %c0_39 = arith.constant 0 : index
    %c0_40 = arith.constant 0 : index
    %c0_41 = arith.constant 0 : index
    %29 = vector.load %arg2[%c0_39, %c0_40, %c0_41] : memref<2x1x16xf32, #tpu.memory_space<vmem>>, vector<1x1x16xf32>
    %30 = vector.shape_cast %29 : vector<1x1x16xf32> to vector<1x16xf32>
    %cst = arith.constant 1.000000e+00 : f32
    %31 = vector.broadcast %cst : f32 to vector<1x16xf32>
    %32 = arith.subf %31, %30 : vector<1x16xf32>
    %cst_42 = arith.constant -1.000000e+04 : f32
    %33 = vector.broadcast %cst_42 : f32 to vector<1x16xf32>
    %34 = arith.mulf %32, %33 : vector<1x16xf32>
    %35 = arith.truncf %28 : vector<16x32xf32> to vector<16x32xbf16>
    %cst_43 = arith.constant dense<0.000000e+00> : vector<16x96xf32>
    %36 = tpu.matmul %35, %4, %cst_43 {dimension_numbers = #tpu.dot_dimension_numbers<[1], [0], [0], [1], [0, 0, 1, 1], [], []>} : vector<16x32xbf16>, vector<32x96xbf16>, vector<16x96xf32> -> vector<16x96xf32>
    %37 = vector.broadcast %6 : vector<1x96xf32> to vector<16x96xf32>
    %38 = arith.addf %36, %37 : vector<16x96xf32>
    %39 = arith.truncf %38 : vector<16x96xf32> to vector<16x96xbf16>
    %40 = vector.extract_strided_slice %39 {offsets = [0, 0], sizes = [16, 8], strides = [1, 1]} : vector<16x96xbf16> to vector<16x8xbf16>
    %41 = vector.extract_strided_slice %39 {offsets = [0, 8], sizes = [16, 8], strides = [1, 1]} : vector<16x96xbf16> to vector<16x8xbf16>
    %42 = vector.extract_strided_slice %39 {offsets = [0, 16], sizes = [16, 8], strides = [1, 1]} : vector<16x96xbf16> to vector<16x8xbf16>
    %43 = vector.extract_strided_slice %39 {offsets = [0, 24], sizes = [16, 8], strides = [1, 1]} : vector<16x96xbf16> to vector<16x8xbf16>
    %44 = vector.shape_cast %40 : vector<16x8xbf16> to vector<1x16x8xbf16>
    %45 = vector.shape_cast %41 : vector<16x8xbf16> to vector<1x16x8xbf16>
    %46 = vector.shape_cast %42 : vector<16x8xbf16> to vector<1x16x8xbf16>
    %47 = vector.shape_cast %43 : vector<16x8xbf16> to vector<1x16x8xbf16>
    %48 = tpu.concatenate %44, %45, %46, %47 in 0 : vector<1x16x8xbf16>, vector<1x16x8xbf16>, vector<1x16x8xbf16>, vector<1x16x8xbf16> -> vector<4x16x8xbf16>
    %49 = vector.extract_strided_slice %39 {offsets = [0, 32], sizes = [16, 8], strides = [1, 1]} : vector<16x96xbf16> to vector<16x8xbf16>
    %50 = vector.extract_strided_slice %39 {offsets = [0, 40], sizes = [16, 8], strides = [1, 1]} : vector<16x96xbf16> to vector<16x8xbf16>
    %51 = vector.extract_strided_slice %39 {offsets = [0, 48], sizes = [16, 8], strides = [1, 1]} : vector<16x96xbf16> to vector<16x8xbf16>
    %52 = vector.extract_strided_slice %39 {offsets = [0, 56], sizes = [16, 8], strides = [1, 1]} : vector<16x96xbf16> to vector<16x8xbf16>
    %53 = vector.shape_cast %49 : vector<16x8xbf16> to vector<1x16x8xbf16>
    %54 = vector.shape_cast %50 : vector<16x8xbf16> to vector<1x16x8xbf16>
    %55 = vector.shape_cast %51 : vector<16x8xbf16> to vector<1x16x8xbf16>
    %56 = vector.shape_cast %52 : vector<16x8xbf16> to vector<1x16x8xbf16>
    %57 = tpu.concatenate %53, %54, %55, %56 in 0 : vector<1x16x8xbf16>, vector<1x16x8xbf16>, vector<1x16x8xbf16>, vector<1x16x8xbf16> -> vector<4x16x8xbf16>
    %58 = vector.extract_strided_slice %39 {offsets = [0, 64], sizes = [16, 8], strides = [1, 1]} : vector<16x96xbf16> to vector<16x8xbf16>
    %59 = vector.extract_strided_slice %39 {offsets = [0, 72], sizes = [16, 8], strides = [1, 1]} : vector<16x96xbf16> to vector<16x8xbf16>
    %60 = vector.extract_strided_slice %39 {offsets = [0, 80], sizes = [16, 8], strides = [1, 1]} : vector<16x96xbf16> to vector<16x8xbf16>
    %61 = vector.extract_strided_slice %39 {offsets = [0, 88], sizes = [16, 8], strides = [1, 1]} : vector<16x96xbf16> to vector<16x8xbf16>
    %62 = vector.shape_cast %58 : vector<16x8xbf16> to vector<1x16x8xbf16>
    %63 = vector.shape_cast %59 : vector<16x8xbf16> to vector<1x16x8xbf16>
    %64 = vector.shape_cast %60 : vector<16x8xbf16> to vector<1x16x8xbf16>
    %65 = vector.shape_cast %61 : vector<16x8xbf16> to vector<1x16x8xbf16>
    %66 = tpu.concatenate %62, %63, %64, %65 in 0 : vector<1x16x8xbf16>, vector<1x16x8xbf16>, vector<1x16x8xbf16>, vector<1x16x8xbf16> -> vector<4x16x8xbf16>
    "tpu.trace_start"() <{level = 10 : i32, message = "hqd,hkd->hqk"}> : () -> ()
    %cst_44 = arith.constant dense<0.000000e+00> : vector<4x16x16xf32>
    %67 = tpu.matmul %48, %57, %cst_44 {dimension_numbers = #tpu.dot_dimension_numbers<[2], [2], [1], [1], [0, 0, 0, 1, 1, 1], [0], [0]>} : vector<4x16x8xbf16>, vector<4x16x8xbf16>, vector<4x16x16xf32> -> vector<4x16x16xf32>
    "tpu.trace_stop"() : () -> ()
    %cst_45 = arith.constant 0.353553385 : f32
    %68 = vector.broadcast %cst_45 : f32 to vector<4x16x16xf32>
    %69 = arith.mulf %67, %68 : vector<4x16x16xf32>
    %70 = vector.shape_cast %34 : vector<1x16xf32> to vector<1x1x16xf32>
    %71 = vector.broadcast %70 : vector<1x1x16xf32> to vector<4x16x16xf32>
    %72 = arith.addf %69, %71 : vector<4x16x16xf32>
    %cst_46 = arith.constant dense<0xFF800000> : vector<4x16xf32>
    %73 = vector.multi_reduction <maximumf>, %72, %cst_46 [2] : vector<4x16x16xf32> to vector<4x16xf32>
    %74 = vector.shape_cast %73 : vector<4x16xf32> to vector<4x16x1xf32>
    %75 = vector.broadcast %74 : vector<4x16x1xf32> to vector<4x16x16xf32>
    %76 = arith.subf %72, %75 : vector<4x16x16xf32>
    %77 = math.exp %76 : vector<4x16x16xf32>
    %cst_47 = arith.constant dense<0.000000e+00> : vector<4x16xf32>
    %78 = vector.multi_reduction <add>, %77, %cst_47 [2] : vector<4x16x16xf32> to vector<4x16xf32>
    %79 = vector.shape_cast %78 : vector<4x16xf32> to vector<4x16x1xf32>
    %80 = tpu.reciprocal %79 {approx = true} : vector<4x16x1xf32> -> vector<4x16x1xf32>
    %81 = vector.broadcast %80 : vector<4x16x1xf32> to vector<4x16x16xf32>
    %82 = arith.mulf %77, %81 : vector<4x16x16xf32>
    %83 = arith.truncf %82 : vector<4x16x16xf32> to vector<4x16x16xbf16>
    "tpu.trace_start"() <{level = 10 : i32, message = "hqk,hkd->hqd"}> : () -> ()
    %cst_48 = arith.constant dense<0.000000e+00> : vector<4x16x8xf32>
    %84 = tpu.matmul %83, %66, %cst_48 {dimension_numbers = #tpu.dot_dimension_numbers<[2], [1], [1], [2], [0, 0, 0, 1, 1, 2], [0], [0]>} : vector<4x16x16xbf16>, vector<4x16x8xbf16>, vector<4x16x8xf32> -> vector<4x16x8xf32>
    "tpu.trace_stop"() : () -> ()
    %85 = vector.extract_strided_slice %84 {offsets = [0, 0, 0], sizes = [1, 16, 8], strides = [1, 1, 1]} : vector<4x16x8xf32> to vector<1x16x8xf32>
    %86 = vector.shape_cast %85 : vector<1x16x8xf32> to vector<16x8xf32>
    %87 = vector.extract_strided_slice %84 {offsets = [1, 0, 0], sizes = [1, 16, 8], strides = [1, 1, 1]} : vector<4x16x8xf32> to vector<1x16x8xf32>
    %88 = vector.shape_cast %87 : vector<1x16x8xf32> to vector<16x8xf32>
    %89 = vector.extract_strided_slice %84 {offsets = [2, 0, 0], sizes = [1, 16, 8], strides = [1, 1, 1]} : vector<4x16x8xf32> to vector<1x16x8xf32>
    %90 = vector.shape_cast %89 : vector<1x16x8xf32> to vector<16x8xf32>
    %91 = vector.extract_strided_slice %84 {offsets = [3, 0, 0], sizes = [1, 16, 8], strides = [1, 1, 1]} : vector<4x16x8xf32> to vector<1x16x8xf32>
    %92 = vector.shape_cast %91 : vector<1x16x8xf32> to vector<16x8xf32>
    %93 = tpu.concatenate %86, %88, %90, %92 in 1 : vector<16x8xf32>, vector<16x8xf32>, vector<16x8xf32>, vector<16x8xf32> -> vector<16x32xf32>
    %94 = arith.truncf %93 : vector<16x32xf32> to vector<16x32xbf16>
    %cst_49 = arith.constant dense<0.000000e+00> : vector<16x32xf32>
    %95 = tpu.matmul %94, %8, %cst_49 {dimension_numbers = #tpu.dot_dimension_numbers<[1], [0], [0], [1], [0, 0, 1, 1], [], []>} : vector<16x32xbf16>, vector<32x32xbf16>, vector<16x32xf32> -> vector<16x32xf32>
    %96 = vector.broadcast %10 : vector<1x32xf32> to vector<16x32xf32>
    %97 = arith.addf %95, %96 : vector<16x32xf32>
    %98 = arith.addf %28, %97 : vector<16x32xf32>
    %cst_50 = arith.constant dense<0.000000e+00> : vector<16xf32>
    %99 = vector.multi_reduction <add>, %98, %cst_50 [1] : vector<16x32xf32> to vector<16xf32>
    %100 = vector.shape_cast %99 : vector<16xf32> to vector<16x1xf32>
    %cst_51 = arith.constant 3.200000e+01 : f32
    %101 = vector.broadcast %cst_51 : f32 to vector<16x1xf32>
    %102 = arith.divf %100, %101 : vector<16x1xf32>
    %103 = vector.broadcast %102 : vector<16x1xf32> to vector<16x32xf32>
    %104 = arith.subf %98, %103 : vector<16x32xf32>
    %105 = arith.mulf %104, %104 : vector<16x32xf32>
    %cst_52 = arith.constant dense<0.000000e+00> : vector<16xf32>
    %106 = vector.multi_reduction <add>, %105, %cst_52 [1] : vector<16x32xf32> to vector<16xf32>
    %107 = vector.shape_cast %106 : vector<16xf32> to vector<16x1xf32>
    %cst_53 = arith.constant 3.200000e+01 : f32
    %108 = vector.broadcast %cst_53 : f32 to vector<16x1xf32>
    %109 = arith.divf %107, %108 : vector<16x1xf32>
    %110 = vector.broadcast %102 : vector<16x1xf32> to vector<16x32xf32>
    %111 = arith.subf %98, %110 : vector<16x32xf32>
    %cst_54 = arith.constant 9.99999996E-13 : f32
    %112 = vector.broadcast %cst_54 : f32 to vector<16x1xf32>
    %113 = arith.addf %109, %112 : vector<16x1xf32>
    %114 = math.rsqrt %113 : vector<16x1xf32>
    %115 = vector.broadcast %114 : vector<16x1xf32> to vector<16x32xf32>
    %116 = arith.mulf %111, %115 : vector<16x32xf32>
    %117 = vector.broadcast %12 : vector<1x32xf32> to vector<16x32xf32>
    %118 = arith.mulf %116, %117 : vector<16x32xf32>
    %119 = vector.broadcast %14 : vector<1x32xf32> to vector<16x32xf32>
    %120 = arith.addf %118, %119 : vector<16x32xf32>
    %121 = arith.truncf %120 : vector<16x32xf32> to vector<16x32xbf16>
    %cst_55 = arith.constant dense<0.000000e+00> : vector<16x64xf32>
    %122 = tpu.matmul %121, %16, %cst_55 {dimension_numbers = #tpu.dot_dimension_numbers<[1], [0], [0], [1], [0, 0, 1, 1], [], []>} : vector<16x32xbf16>, vector<32x64xbf16>, vector<16x64xf32> -> vector<16x64xf32>
    %123 = vector.broadcast %18 : vector<1x64xf32> to vector<16x64xf32>
    %124 = arith.addf %122, %123 : vector<16x64xf32>
    %cst_56 = arith.constant 5.000000e-01 : f32
    %125 = vector.broadcast %cst_56 : f32 to vector<16x64xf32>
    %126 = arith.mulf %125, %124 : vector<16x64xf32>
    %cst_57 = arith.constant 4.471500e-02 : f32
    %127 = vector.broadcast %cst_57 : f32 to vector<16x64xf32>
    %128 = arith.mulf %127, %124 : vector<16x64xf32>
    %129 = arith.mulf %128, %124 : vector<16x64xf32>
    %130 = arith.mulf %129, %124 : vector<16x64xf32>
    %131 = arith.addf %124, %130 : vector<16x64xf32>
    %cst_58 = arith.constant 0.797884583 : f32
    %132 = vector.broadcast %cst_58 : f32 to vector<16x64xf32>
    %133 = arith.mulf %132, %131 : vector<16x64xf32>
    %134 = math.tanh %133 : vector<16x64xf32>
    %cst_59 = arith.constant 1.000000e+00 : f32
    %135 = vector.broadcast %cst_59 : f32 to vector<16x64xf32>
    %136 = arith.addf %135, %134 : vector<16x64xf32>
    %137 = arith.mulf %126, %136 : vector<16x64xf32>
    %138 = arith.truncf %137 : vector<16x64xf32> to vector<16x64xbf16>
    %cst_60 = arith.constant dense<0.000000e+00> : vector<16x32xf32>
    %139 = tpu.matmul %138, %20, %cst_60 {dimension_numbers = #tpu.dot_dimension_numbers<[1], [0], [0], [1], [0, 0, 1, 1], [], []>} : vector<16x64xbf16>, vector<64x32xbf16>, vector<16x32xf32> -> vector<16x32xf32>
    %140 = vector.broadcast %22 : vector<1x32xf32> to vector<16x32xf32>
    %141 = arith.addf %139, %140 : vector<16x32xf32>
    %142 = arith.addf %120, %141 : vector<16x32xf32>
    %cst_61 = arith.constant dense<0.000000e+00> : vector<16xf32>
    %143 = vector.multi_reduction <add>, %142, %cst_61 [1] : vector<16x32xf32> to vector<16xf32>
    %144 = vector.shape_cast %143 : vector<16xf32> to vector<16x1xf32>
    %cst_62 = arith.constant 3.200000e+01 : f32
    %145 = vector.broadcast %cst_62 : f32 to vector<16x1xf32>
    %146 = arith.divf %144, %145 : vector<16x1xf32>
    %147 = vector.broadcast %146 : vector<16x1xf32> to vector<16x32xf32>
    %148 = arith.subf %142, %147 : vector<16x32xf32>
    %149 = arith.mulf %148, %148 : vector<16x32xf32>
    %cst_63 = arith.constant dense<0.000000e+00> : vector<16xf32>
    %150 = vector.multi_reduction <add>, %149, %cst_63 [1] : vector<16x32xf32> to vector<16xf32>
    %151 = vector.shape_cast %150 : vector<16xf32> to vector<16x1xf32>
    %cst_64 = arith.constant 3.200000e+01 : f32
    %152 = vector.broadcast %cst_64 : f32 to vector<16x1xf32>
    %153 = arith.divf %151, %152 : vector<16x1xf32>
    %154 = vector.broadcast %146 : vector<16x1xf32> to vector<16x32xf32>
    %155 = arith.subf %142, %154 : vector<16x32xf32>
    %cst_65 = arith.constant 9.99999996E-13 : f32
    %156 = vector.broadcast %cst_65 : f32 to vector<16x1xf32>
    %157 = arith.addf %153, %156 : vector<16x1xf32>
    %158 = math.rsqrt %157 : vector<16x1xf32>
    %159 = vector.broadcast %158 : vector<16x1xf32> to vector<16x32xf32>
    %160 = arith.mulf %155, %159 : vector<16x32xf32>
    %161 = vector.broadcast %24 : vector<1x32xf32> to vector<16x32xf32>
    %162 = arith.mulf %160, %161 : vector<16x32xf32>
    %163 = vector.broadcast %26 : vector<1x32xf32> to vector<16x32xf32>
    %164 = arith.addf %162, %163 : vector<16x32xf32>
    %c0_66 = arith.constant 0 : index
    %c0_67 = arith.constant 0 : index
    %c0_68 = arith.constant 0 : index
    %165 = vector.load %arg16[%c0_66, %c0_67, %c0_68] : memref<2x16x32xf32, #tpu.memory_space<vmem>>, vector<1x16x32xf32>
    %166 = vector.shape_cast %165 : vector<1x16x32xf32> to vector<16x32xf32>
    %167 = vector.shape_cast %164 : vector<16x32xf32> to vector<1x16x32xf32>
    tpu.vector_store %arg16[%c0_66, %c0_67, %c0_68], %167 {strides = array<i32>} : memref<2x16x32xf32, #tpu.memory_space<vmem>>, vector<1x16x32xf32>,
    %c1 = arith.constant 1 : index
    %c0_69 = arith.constant 0 : index
    %c0_70 = arith.constant 0 : index
    %168 = vector.load %arg16[%c1, %c0_69, %c0_70] : memref<2x16x32xf32, #tpu.memory_space<vmem>>, vector<1x16x32xf32>
    %169 = vector.shape_cast %168 : vector<1x16x32xf32> to vector<16x32xf32>
    %c1_71 = arith.constant 1 : index
    %c0_72 = arith.constant 0 : index
    %c0_73 = arith.constant 0 : index
    %170 = vector.load %arg2[%c1_71, %c0_72, %c0_73] : memref<2x1x16xf32, #tpu.memory_space<vmem>>, vector<1x1x16xf32>
    %171 = vector.shape_cast %170 : vector<1x1x16xf32> to vector<1x16xf32>
    %cst_74 = arith.constant 1.000000e+00 : f32
    %172 = vector.broadcast %cst_74 : f32 to vector<1x16xf32>
    %173 = arith.subf %172, %171 : vector<1x16xf32>
    %cst_75 = arith.constant -1.000000e+04 : f32
    %174 = vector.broadcast %cst_75 : f32 to vector<1x16xf32>
    %175 = arith.mulf %173, %174 : vector<1x16xf32>
    %176 = arith.truncf %169 : vector<16x32xf32> to vector<16x32xbf16>
    %cst_76 = arith.constant dense<0.000000e+00> : vector<16x96xf32>
    %177 = tpu.matmul %176, %4, %cst_76 {dimension_numbers = #tpu.dot_dimension_numbers<[1], [0], [0], [1], [0, 0, 1, 1], [], []>} : vector<16x32xbf16>, vector<32x96xbf16>, vector<16x96xf32> -> vector<16x96xf32>
    %178 = vector.broadcast %6 : vector<1x96xf32> to vector<16x96xf32>
    %179 = arith.addf %177, %178 : vector<16x96xf32>
    %180 = arith.truncf %179 : vector<16x96xf32> to vector<16x96xbf16>
    %181 = vector.extract_strided_slice %180 {offsets = [0, 0], sizes = [16, 8], strides = [1, 1]} : vector<16x96xbf16> to vector<16x8xbf16>
    %182 = vector.extract_strided_slice %180 {offsets = [0, 8], sizes = [16, 8], strides = [1, 1]} : vector<16x96xbf16> to vector<16x8xbf16>
    %183 = vector.extract_strided_slice %180 {offsets = [0, 16], sizes = [16, 8], strides = [1, 1]} : vector<16x96xbf16> to vector<16x8xbf16>
    %184 = vector.extract_strided_slice %180 {offsets = [0, 24], sizes = [16, 8], strides = [1, 1]} : vector<16x96xbf16> to vector<16x8xbf16>
    %185 = vector.shape_cast %181 : vector<16x8xbf16> to vector<1x16x8xbf16>
    %186 = vector.shape_cast %182 : vector<16x8xbf16> to vector<1x16x8xbf16>
    %187 = vector.shape_cast %183 : vector<16x8xbf16> to vector<1x16x8xbf16>
    %188 = vector.shape_cast %184 : vector<16x8xbf16> to vector<1x16x8xbf16>
    %189 = tpu.concatenate %185, %186, %187, %188 in 0 : vector<1x16x8xbf16>, vector<1x16x8xbf16>, vector<1x16x8xbf16>, vector<1x16x8xbf16> -> vector<4x16x8xbf16>
    %190 = vector.extract_strided_slice %180 {offsets = [0, 32], sizes = [16, 8], strides = [1, 1]} : vector<16x96xbf16> to vector<16x8xbf16>
    %191 = vector.extract_strided_slice %180 {offsets = [0, 40], sizes = [16, 8], strides = [1, 1]} : vector<16x96xbf16> to vector<16x8xbf16>
    %192 = vector.extract_strided_slice %180 {offsets = [0, 48], sizes = [16, 8], strides = [1, 1]} : vector<16x96xbf16> to vector<16x8xbf16>
    %193 = vector.extract_strided_slice %180 {offsets = [0, 56], sizes = [16, 8], strides = [1, 1]} : vector<16x96xbf16> to vector<16x8xbf16>
    %194 = vector.shape_cast %190 : vector<16x8xbf16> to vector<1x16x8xbf16>
    %195 = vector.shape_cast %191 : vector<16x8xbf16> to vector<1x16x8xbf16>
    %196 = vector.shape_cast %192 : vector<16x8xbf16> to vector<1x16x8xbf16>
    %197 = vector.shape_cast %193 : vector<16x8xbf16> to vector<1x16x8xbf16>
    %198 = tpu.concatenate %194, %195, %196, %197 in 0 : vector<1x16x8xbf16>, vector<1x16x8xbf16>, vector<1x16x8xbf16>, vector<1x16x8xbf16> -> vector<4x16x8xbf16>
    %199 = vector.extract_strided_slice %180 {offsets = [0, 64], sizes = [16, 8], strides = [1, 1]} : vector<16x96xbf16> to vector<16x8xbf16>
    %200 = vector.extract_strided_slice %180 {offsets = [0, 72], sizes = [16, 8], strides = [1, 1]} : vector<16x96xbf16> to vector<16x8xbf16>
    %201 = vector.extract_strided_slice %180 {offsets = [0, 80], sizes = [16, 8], strides = [1, 1]} : vector<16x96xbf16> to vector<16x8xbf16>
    %202 = vector.extract_strided_slice %180 {offsets = [0, 88], sizes = [16, 8], strides = [1, 1]} : vector<16x96xbf16> to vector<16x8xbf16>
    %203 = vector.shape_cast %199 : vector<16x8xbf16> to vector<1x16x8xbf16>
    %204 = vector.shape_cast %200 : vector<16x8xbf16> to vector<1x16x8xbf16>
    %205 = vector.shape_cast %201 : vector<16x8xbf16> to vector<1x16x8xbf16>
    %206 = vector.shape_cast %202 : vector<16x8xbf16> to vector<1x16x8xbf16>
    %207 = tpu.concatenate %203, %204, %205, %206 in 0 : vector<1x16x8xbf16>, vector<1x16x8xbf16>, vector<1x16x8xbf16>, vector<1x16x8xbf16> -> vector<4x16x8xbf16>
    "tpu.trace_start"() <{level = 10 : i32, message = "hqd,hkd->hqk"}> : () -> ()
    %cst_77 = arith.constant dense<0.000000e+00> : vector<4x16x16xf32>
    %208 = tpu.matmul %189, %198, %cst_77 {dimension_numbers = #tpu.dot_dimension_numbers<[2], [2], [1], [1], [0, 0, 0, 1, 1, 1], [0], [0]>} : vector<4x16x8xbf16>, vector<4x16x8xbf16>, vector<4x16x16xf32> -> vector<4x16x16xf32>
    "tpu.trace_stop"() : () -> ()
    %cst_78 = arith.constant 0.353553385 : f32
    %209 = vector.broadcast %cst_78 : f32 to vector<4x16x16xf32>
    %210 = arith.mulf %208, %209 : vector<4x16x16xf32>
    %211 = vector.shape_cast %175 : vector<1x16xf32> to vector<1x1x16xf32>
    %212 = vector.broadcast %211 : vector<1x1x16xf32> to vector<4x16x16xf32>
    %213 = arith.addf %210, %212 : vector<4x16x16xf32>
    %cst_79 = arith.constant dense<0xFF800000> : vector<4x16xf32>
    %214 = vector.multi_reduction <maximumf>, %213, %cst_79 [2] : vector<4x16x16xf32> to vector<4x16xf32>
    %215 = vector.shape_cast %214 : vector<4x16xf32> to vector<4x16x1xf32>
    %216 = vector.broadcast %215 : vector<4x16x1xf32> to vector<4x16x16xf32>
    %217 = arith.subf %213, %216 : vector<4x16x16xf32>
    %218 = math.exp %217 : vector<4x16x16xf32>
    %cst_80 = arith.constant dense<0.000000e+00> : vector<4x16xf32>
    %219 = vector.multi_reduction <add>, %218, %cst_80 [2] : vector<4x16x16xf32> to vector<4x16xf32>
    %220 = vector.shape_cast %219 : vector<4x16xf32> to vector<4x16x1xf32>
    %221 = tpu.reciprocal %220 {approx = true} : vector<4x16x1xf32> -> vector<4x16x1xf32>
    %222 = vector.broadcast %221 : vector<4x16x1xf32> to vector<4x16x16xf32>
    %223 = arith.mulf %218, %222 : vector<4x16x16xf32>
    %224 = arith.truncf %223 : vector<4x16x16xf32> to vector<4x16x16xbf16>
    "tpu.trace_start"() <{level = 10 : i32, message = "hqk,hkd->hqd"}> : () -> ()
    %cst_81 = arith.constant dense<0.000000e+00> : vector<4x16x8xf32>
    %225 = tpu.matmul %224, %207, %cst_81 {dimension_numbers = #tpu.dot_dimension_numbers<[2], [1], [1], [2], [0, 0, 0, 1, 1, 2], [0], [0]>} : vector<4x16x16xbf16>, vector<4x16x8xbf16>, vector<4x16x8xf32> -> vector<4x16x8xf32>
    "tpu.trace_stop"() : () -> ()
    %226 = vector.extract_strided_slice %225 {offsets = [0, 0, 0], sizes = [1, 16, 8], strides = [1, 1, 1]} : vector<4x16x8xf32> to vector<1x16x8xf32>
    %227 = vector.shape_cast %226 : vector<1x16x8xf32> to vector<16x8xf32>
    %228 = vector.extract_strided_slice %225 {offsets = [1, 0, 0], sizes = [1, 16, 8], strides = [1, 1, 1]} : vector<4x16x8xf32> to vector<1x16x8xf32>
    %229 = vector.shape_cast %228 : vector<1x16x8xf32> to vector<16x8xf32>
    %230 = vector.extract_strided_slice %225 {offsets = [2, 0, 0], sizes = [1, 16, 8], strides = [1, 1, 1]} : vector<4x16x8xf32> to vector<1x16x8xf32>
    %231 = vector.shape_cast %230 : vector<1x16x8xf32> to vector<16x8xf32>
    %232 = vector.extract_strided_slice %225 {offsets = [3, 0, 0], sizes = [1, 16, 8], strides = [1, 1, 1]} : vector<4x16x8xf32> to vector<1x16x8xf32>
    %233 = vector.shape_cast %232 : vector<1x16x8xf32> to vector<16x8xf32>
    %234 = tpu.concatenate %227, %229, %231, %233 in 1 : vector<16x8xf32>, vector<16x8xf32>, vector<16x8xf32>, vector<16x8xf32> -> vector<16x32xf32>
    %235 = arith.truncf %234 : vector<16x32xf32> to vector<16x32xbf16>
    %cst_82 = arith.constant dense<0.000000e+00> : vector<16x32xf32>
    %236 = tpu.matmul %235, %8, %cst_82 {dimension_numbers = #tpu.dot_dimension_numbers<[1], [0], [0], [1], [0, 0, 1, 1], [], []>} : vector<16x32xbf16>, vector<32x32xbf16>, vector<16x32xf32> -> vector<16x32xf32>
    %237 = vector.broadcast %10 : vector<1x32xf32> to vector<16x32xf32>
    %238 = arith.addf %236, %237 : vector<16x32xf32>
    %239 = arith.addf %169, %238 : vector<16x32xf32>
    %cst_83 = arith.constant dense<0.000000e+00> : vector<16xf32>
    %240 = vector.multi_reduction <add>, %239, %cst_83 [1] : vector<16x32xf32> to vector<16xf32>
    %241 = vector.shape_cast %240 : vector<16xf32> to vector<16x1xf32>
    %cst_84 = arith.constant 3.200000e+01 : f32
    %242 = vector.broadcast %cst_84 : f32 to vector<16x1xf32>
    %243 = arith.divf %241, %242 : vector<16x1xf32>
    %244 = vector.broadcast %243 : vector<16x1xf32> to vector<16x32xf32>
    %245 = arith.subf %239, %244 : vector<16x32xf32>
    %246 = arith.mulf %245, %245 : vector<16x32xf32>
    %cst_85 = arith.constant dense<0.000000e+00> : vector<16xf32>
    %247 = vector.multi_reduction <add>, %246, %cst_85 [1] : vector<16x32xf32> to vector<16xf32>
    %248 = vector.shape_cast %247 : vector<16xf32> to vector<16x1xf32>
    %cst_86 = arith.constant 3.200000e+01 : f32
    %249 = vector.broadcast %cst_86 : f32 to vector<16x1xf32>
    %250 = arith.divf %248, %249 : vector<16x1xf32>
    %251 = vector.broadcast %243 : vector<16x1xf32> to vector<16x32xf32>
    %252 = arith.subf %239, %251 : vector<16x32xf32>
    %cst_87 = arith.constant 9.99999996E-13 : f32
    %253 = vector.broadcast %cst_87 : f32 to vector<16x1xf32>
    %254 = arith.addf %250, %253 : vector<16x1xf32>
    %255 = math.rsqrt %254 : vector<16x1xf32>
    %256 = vector.broadcast %255 : vector<16x1xf32> to vector<16x32xf32>
    %257 = arith.mulf %252, %256 : vector<16x32xf32>
    %258 = vector.broadcast %12 : vector<1x32xf32> to vector<16x32xf32>
    %259 = arith.mulf %257, %258 : vector<16x32xf32>
    %260 = vector.broadcast %14 : vector<1x32xf32> to vector<16x32xf32>
    %261 = arith.addf %259, %260 : vector<16x32xf32>
    %262 = arith.truncf %261 : vector<16x32xf32> to vector<16x32xbf16>
    %cst_88 = arith.constant dense<0.000000e+00> : vector<16x64xf32>
    %263 = tpu.matmul %262, %16, %cst_88 {dimension_numbers = #tpu.dot_dimension_numbers<[1], [0], [0], [1], [0, 0, 1, 1], [], []>} : vector<16x32xbf16>, vector<32x64xbf16>, vector<16x64xf32> -> vector<16x64xf32>
    %264 = vector.broadcast %18 : vector<1x64xf32> to vector<16x64xf32>
    %265 = arith.addf %263, %264 : vector<16x64xf32>
    %cst_89 = arith.constant 5.000000e-01 : f32
    %266 = vector.broadcast %cst_89 : f32 to vector<16x64xf32>
    %267 = arith.mulf %266, %265 : vector<16x64xf32>
    %cst_90 = arith.constant 4.471500e-02 : f32
    %268 = vector.broadcast %cst_90 : f32 to vector<16x64xf32>
    %269 = arith.mulf %268, %265 : vector<16x64xf32>
    %270 = arith.mulf %269, %265 : vector<16x64xf32>
    %271 = arith.mulf %270, %265 : vector<16x64xf32>
    %272 = arith.addf %265, %271 : vector<16x64xf32>
    %cst_91 = arith.constant 0.797884583 : f32
    %273 = vector.broadcast %cst_91 : f32 to vector<16x64xf32>
    %274 = arith.mulf %273, %272 : vector<16x64xf32>
    %275 = math.tanh %274 : vector<16x64xf32>
    %cst_92 = arith.constant 1.000000e+00 : f32
    %276 = vector.broadcast %cst_92 : f32 to vector<16x64xf32>
    %277 = arith.addf %276, %275 : vector<16x64xf32>
    %278 = arith.mulf %267, %277 : vector<16x64xf32>
    %279 = arith.truncf %278 : vector<16x64xf32> to vector<16x64xbf16>
    %cst_93 = arith.constant dense<0.000000e+00> : vector<16x32xf32>
    %280 = tpu.matmul %279, %20, %cst_93 {dimension_numbers = #tpu.dot_dimension_numbers<[1], [0], [0], [1], [0, 0, 1, 1], [], []>} : vector<16x64xbf16>, vector<64x32xbf16>, vector<16x32xf32> -> vector<16x32xf32>
    %281 = vector.broadcast %22 : vector<1x32xf32> to vector<16x32xf32>
    %282 = arith.addf %280, %281 : vector<16x32xf32>
    %283 = arith.addf %261, %282 : vector<16x32xf32>
    %cst_94 = arith.constant dense<0.000000e+00> : vector<16xf32>
    %284 = vector.multi_reduction <add>, %283, %cst_94 [1] : vector<16x32xf32> to vector<16xf32>
    %285 = vector.shape_cast %284 : vector<16xf32> to vector<16x1xf32>
    %cst_95 = arith.constant 3.200000e+01 : f32
    %286 = vector.broadcast %cst_95 : f32 to vector<16x1xf32>
    %287 = arith.divf %285, %286 : vector<16x1xf32>
    %288 = vector.broadcast %287 : vector<16x1xf32> to vector<16x32xf32>
    %289 = arith.subf %283, %288 : vector<16x32xf32>
    %290 = arith.mulf %289, %289 : vector<16x32xf32>
    %cst_96 = arith.constant dense<0.000000e+00> : vector<16xf32>
    %291 = vector.multi_reduction <add>, %290, %cst_96 [1] : vector<16x32xf32> to vector<16xf32>
    %292 = vector.shape_cast %291 : vector<16xf32> to vector<16x1xf32>
    %cst_97 = arith.constant 3.200000e+01 : f32
    %293 = vector.broadcast %cst_97 : f32 to vector<16x1xf32>
    %294 = arith.divf %292, %293 : vector<16x1xf32>
    %295 = vector.broadcast %287 : vector<16x1xf32> to vector<16x32xf32>
    %296 = arith.subf %283, %295 : vector<16x32xf32>
    %cst_98 = arith.constant 9.99999996E-13 : f32
    %297 = vector.broadcast %cst_98 : f32 to vector<16x1xf32>
    %298 = arith.addf %294, %297 : vector<16x1xf32>
    %299 = math.rsqrt %298 : vector<16x1xf32>
    %300 = vector.broadcast %299 : vector<16x1xf32> to vector<16x32xf32>
    %301 = arith.mulf %296, %300 : vector<16x32xf32>
    %302 = vector.broadcast %24 : vector<1x32xf32> to vector<16x32xf32>
    %303 = arith.mulf %301, %302 : vector<16x32xf32>
    %304 = vector.broadcast %26 : vector<1x32xf32> to vector<16x32xf32>
    %305 = arith.addf %303, %304 : vector<16x32xf32>
    %c1_99 = arith.constant 1 : index
    %c0_100 = arith.constant 0 : index
    %c0_101 = arith.constant 0 : index
    %306 = vector.load %arg16[%c1_99, %c0_100, %c0_101] : memref<2x16x32xf32, #tpu.memory_space<vmem>>, vector<1x16x32xf32>
    %307 = vector.shape_cast %306 : vector<1x16x32xf32> to vector<16x32xf32>
    %308 = vector.shape_cast %305 : vector<16x32xf32> to vector<1x16x32xf32>
    tpu.vector_store %arg16[%c1_99, %c0_100, %c0_101], %308 {strides = array<i32>} : memref<2x16x32xf32, #tpu.memory_space<vmem>>, vector<1x16x32xf32>,
    %c1_i32 = arith.constant 1 : i32
    %309 = arith.cmpi eq, %arg0, %c1_i32 : i32
    %310 = arith.extui %309 : i1 to i32
    %c0_i32_102 = arith.constant 0 : i32
    %311 = arith.cmpi ne, %310, %c0_i32_102 : i32
    scf.if %311 {
      %c0_103 = arith.constant 0 : index
      %c0_104 = arith.constant 0 : index
      %c0_105 = arith.constant 0 : index
      %312 = vector.load %arg16[%c0_103, %c0_104, %c0_105] : memref<2x16x32xf32, #tpu.memory_space<vmem>>, vector<2x16x32xf32>
      %313 = arith.truncf %312 : vector<2x16x32xf32> to vector<2x16x32xbf16>
      %c0_106 = arith.constant 0 : index
      %c0_107 = arith.constant 0 : index
      %c0_108 = arith.constant 0 : index
      %314 = vector.load %arg15[%c0_106, %c0_107, %c0_108] : memref<2x16x32xbf16, #tpu.memory_space<vmem>>, vector<2x16x32xbf16>
      tpu.vector_store %arg15[%c0_106, %c0_107, %c0_108], %313 {strides = array<i32>} : memref<2x16x32xbf16, #tpu.memory_space<vmem>>, vector<2x16x32xbf16>,
    } else {
    }
    return
  }
  func.func @transform_0(%arg0: i32) -> (i32, i32, i32) {
    %c0_i32 = arith.constant 0 : i32
    %c0_i32_0 = arith.constant 0 : i32
    %c0_i32_1 = arith.constant 0 : i32
    %c0_i32_2 = arith.constant 0 : i32
    return %c0_i32, %c0_i32_0, %c0_i32_1 : i32, i32, i32
  }
  func.func @transform_1(%arg0: i32) -> (i32, i32, i32) {
    %c0_i32 = arith.constant 0 : i32
    %c0_i32_0 = arith.constant 0 : i32
    %c0_i32_1 = arith.constant 0 : i32
    %c0_i32_2 = arith.constant 0 : i32
    return %c0_i32, %c0_i32_0, %c0_i32_1 : i32, i32, i32
  }
  func.func @transform_2(%arg0: i32) -> (i32, i32, i32) {
    %c0_i32 = arith.constant 0 : i32
    %c0_i32_0 = arith.constant 0 : i32
    %c0_i32_1 = arith.constant 0 : i32
    return %arg0, %c0_i32, %c0_i32_0 : i32, i32, i32
  }
  func.func @transform_3(%arg0: i32) -> (i32, i32, i32) {
    %c0_i32 = arith.constant 0 : i32
    %c0_i32_0 = arith.constant 0 : i32
    %c0_i32_1 = arith.constant 0 : i32
    return %arg0, %c0_i32, %c0_i32_0 : i32, i32, i32
  }
  func.func @transform_4(%arg0: i32) -> (i32, i32, i32) {
    %c0_i32 = arith.constant 0 : i32
    %c0_i32_0 = arith.constant 0 : i32
    %c0_i32_1 = arith.constant 0 : i32
    return %arg0, %c0_i32, %c0_i32_0 : i32, i32, i32
  }
  func.func @transform_5(%arg0: i32) -> (i32, i32, i32) {
    %c0_i32 = arith.constant 0 : i32
    %c0_i32_0 = arith.constant 0 : i32
    %c0_i32_1 = arith.constant 0 : i32
    return %arg0, %c0_i32, %c0_i32_0 : i32, i32, i32
  }
  func.func @transform_6(%arg0: i32) -> (i32, i32, i32) {
    %c0_i32 = arith.constant 0 : i32
    %c0_i32_0 = arith.constant 0 : i32
    %c0_i32_1 = arith.constant 0 : i32
    return %arg0, %c0_i32, %c0_i32_0 : i32, i32, i32
  }
  func.func @transform_7(%arg0: i32) -> (i32, i32, i32) {
    %c0_i32 = arith.constant 0 : i32
    %c0_i32_0 = arith.constant 0 : i32
    %c0_i32_1 = arith.constant 0 : i32
    return %arg0, %c0_i32, %c0_i32_0 : i32, i32, i32
  }
  func.func @transform_8(%arg0: i32) -> (i32, i32, i32) {
    %c0_i32 = arith.constant 0 : i32
    %c0_i32_0 = arith.constant 0 : i32
    %c0_i32_1 = arith.constant 0 : i32
    return %arg0, %c0_i32, %c0_i32_0 : i32, i32, i32
  }
  func.func @transform_9(%arg0: i32) -> (i32, i32, i32) {
    %c0_i32 = arith.constant 0 : i32
    %c0_i32_0 = arith.constant 0 : i32
    %c0_i32_1 = arith.constant 0 : i32
    return %arg0, %c0_i32, %c0_i32_0 : i32, i32, i32
  }
  func.func @transform_10(%arg0: i32) -> (i32, i32, i32) {
    %c0_i32 = arith.constant 0 : i32
    %c0_i32_0 = arith.constant 0 : i32
    %c0_i32_1 = arith.constant 0 : i32
    return %arg0, %c0_i32, %c0_i32_0 : i32, i32, i32
  }
  func.func @transform_11(%arg0: i32) -> (i32, i32, i32) {
    %c0_i32 = arith.constant 0 : i32
    %c0_i32_0 = arith.constant 0 : i32
    %c0_i32_1 = arith.constant 0 : i32
    return %arg0, %c0_i32, %c0_i32_0 : i32, i32, i32
  }
  func.func @transform_12(%arg0: i32) -> (i32, i32, i32) {
    %c0_i32 = arith.constant 0 : i32
    %c0_i32_0 = arith.constant 0 : i32
    %c0_i32_1 = arith.constant 0 : i32
    return %arg0, %c0_i32, %c0_i32_0 : i32, i32, i32
  }
  func.func @transform_13(%arg0: i32) -> (i32, i32, i32) {
    %c0_i32 = arith.constant 0 : i32
    %c0_i32_0 = arith.constant 0 : i32
    %c0_i32_1 = arith.constant 0 : i32
    return %arg0, %c0_i32, %c0_i32_0 : i32, i32, i32
  }
  func.func @transform_14(%arg0: i32) -> (i32, i32, i32) {
    %c0_i32 = arith.constant 0 : i32
    %c0_i32_0 = arith.constant 0 : i32
    %c0_i32_1 = arith.constant 0 : i32
    %c0_i32_2 = arith.constant 0 : i32
    return %c0_i32, %c0_i32_0, %c0_i32_1 : i32, i32, i32
  }
}

</mosaic_0001>

<llo_original>
// kernel: tpu_custom_call.1
$region0: #{tpu_custom_call.1}
  #allocation0 [shape = 'u32[]', space=smem, size = 0x4, offset = 0x4, fixed_abs, tag = 'smem constant byte address 0x4 - core index']
  #allocation1 [shape = 'u32[144,128]{1,0:T(1,128)}', space=vmem, size = 0x12000, scoped, tag = 'internal scratch']
  #allocation2 [shape = 'f32[2,16,32]{2,1,0:T(8,128)}', space=vmem, size = 0x4000, scoped, tag = 'scratch operand']
  %s0 = inlined_call_operand.vmem [shape: f32[2,16,32], index: 0, kind: input, shape index: {}]
  %s1 = inlined_call_operand.vmem [shape: f32[2,1,16], index: 1, kind: input, shape index: {}]
  %s2 = inlined_call_operand.vmem [shape: bf16[2,32,96], index: 2, kind: input, shape index: {}]
  %s3 = inlined_call_operand.vmem [shape: f32[2,1,96], index: 3, kind: input, shape index: {}]
  %s4 = inlined_call_operand.vmem [shape: bf16[2,32,32], index: 4, kind: input, shape index: {}]
  %s5 = inlined_call_operand.hbm [shape: f32[2,1,32], index: 5, kind: input, shape index: {}]
  %s6 = inlined_call_operand.hbm [shape: f32[2,1,32], index: 6, kind: input, shape index: {}]
  %s7 = inlined_call_operand.hbm [shape: f32[2,1,32], index: 7, kind: input, shape index: {}]
  %s8 = inlined_call_operand.hbm [shape: bf16[2,32,64], index: 8, kind: input, shape index: {}]
  %s9 = inlined_call_operand.hbm [shape: f32[2,1,64], index: 9, kind: input, shape index: {}]
  %s10 = inlined_call_operand.vmem [shape: bf16[2,64,32], index: 10, kind: input, shape index: {}]
  %s11 = inlined_call_operand.vmem [shape: f32[2,1,32], index: 11, kind: input, shape index: {}]
  %s12 = inlined_call_operand.vmem [shape: f32[2,1,32], index: 12, kind: input, shape index: {}]
  %s13 = inlined_call_operand.vmem [shape: f32[2,1,32], index: 13, kind: input, shape index: {}]
  %s14 = inlined_call_operand.hbm [shape: bf16[2,16,32], index: 14, kind: output, shape index: {}]
  %s15 = sld [smem:[#allocation0]]
  $region117: #{tpu_custom_call.1} parent=0
    _
  %s17 = ssub.s32 1, %s15
  %s18 = scalar_select 0, %s17, %s15
  $region1: #{tpu_custom_call.1} parent=0
    #allocation3 [shape = 'u8[1024]{0}', space=vmem, size = 0x400, scoped, tag = 'input window, operand 5']
    #allocation4 [shape = 's32[2]{0}', space=sflag, size = 0x8, scoped, tag = 'scoped memory for tpu_custom_call.1']
    #allocation5 [shape = 's32[2]{0}', space=sflag, size = 0x8, scoped, tag = 'scoped memory for tpu_custom_call.1']
    #allocation6 [shape = 'u8[1024]{0}', space=vmem, size = 0x400, scoped, tag = 'input window, operand 6']
    #allocation7 [shape = 's32[2]{0}', space=sflag, size = 0x8, scoped, tag = 'scoped memory for tpu_custom_call.1']
    #allocation8 [shape = 'u8[1024]{0}', space=vmem, size = 0x400, scoped, tag = 'input window, operand 7']
    #allocation9 [shape = 'u8[16384]{0}', space=vmem, size = 0x4000, scoped, tag = 'input window, operand 8']
    #allocation10 [shape = 's32[2]{0}', space=sflag, size = 0x8, scoped, tag = 'scoped memory for tpu_custom_call.1']
    #allocation11 [shape = 'u8[1024]{0}', space=vmem, size = 0x400, scoped, tag = 'input window, operand 9']
    #allocation12 [shape = 'u8[8192]{0}', space=vmem, size = 0x2000, scoped, tag = 'output window, operand 0, single buffered']
    %19 = vsyncpa [#allocation4], 0
    %s20 = scalar_lea.sflag [#allocation4], 1
    %21 = vsyncpa %s20, 0
    %22 = vsyncpa [#allocation7], 0
    %s23 = scalar_lea.sflag [#allocation7], 1
    %24 = vsyncpa %s23, 0
    %25 = vsyncpa [#allocation10], 0
    %s26 = scalar_lea.sflag [#allocation10], 1
    %27 = vsyncpa %s26, 0
    %28 = vsyncpa [#allocation5], 0
    loop: start=0, step=1, limit=4
    $region2: #{tpu_custom_call.1} parent=1 // loop_pre_header
      _
    $region3: #{tpu_custom_call.1} parent=1 // loop_header
      %s30 = sphi 0, %s34
      %p31 = scmp.ge.s32.totalorder %s30, 4
      %s38 = sphi 0, %s38
      %s40 = sphi 0, %s38
      %s41 = sphi 0, %s40
      %s55 = sphi 0, %s41
      %s59 = sphi 0, %s59
      %s61 = sphi 0, %s59
      %s62 = sphi 0, %s61
      %s76 = sphi 0, %s62
      %s82 = sphi 0, %s84
      %s85 = sphi 0, %s82
      %s86 = sphi 0, %s85
      %s102 = sphi 0, %s86
      %s108 = sphi 0, %s110
      %s111 = sphi 0, %s108
      %s112 = sphi 0, %s111
      %s128 = sphi 0, %s112
      %s134 = sphi 0, %s136
      %s137 = sphi 0, %s134
      %s138 = sphi 0, %s137
      %s154 = sphi 0, %s138
      %s160 = sphi 0, %s162
      %s163 = sphi 0, %s160
      %s164 = sphi 0, %s163
      %s180 = sphi 0, %s164
      %s186 = sphi 0, %s188
      %s189 = sphi 0, %s186
      %s190 = sphi 0, %s189
      %s206 = sphi 0, %s190
      %s212 = sphi 0, %s214
      %s215 = sphi 0, %s212
      %s216 = sphi 0, %s215
      %s232 = sphi 0, %s216
      %s238 = sphi 0, %s240
      %s241 = sphi 0, %s238
      %s242 = sphi 0, %s241
      %s258 = sphi 0, %s242
      %s264 = sphi 0, %s266
      %s267 = sphi 0, %s264
      %s268 = sphi 0, %s267
      %s284 = sphi 0, %s268
      %s290 = sphi 0, %s292
      %s293 = sphi 0, %s290
      %s294 = sphi 0, %s293
      %s310 = sphi 0, %s294
      %s316 = sphi 0, %s318
      %s319 = sphi 0, %s316
      %s320 = sphi 0, %s319
      %s336 = sphi 0, %s320
      %s342 = sphi 0, %s344
      %s345 = sphi 0, %s342
      %s346 = sphi 0, %s345
      %s362 = sphi 0, %s346
      %s368 = sphi 0, %s370
      %s371 = sphi 0, %s368
      %s372 = sphi 0, %s371
      %s388 = sphi 0, %s372
      %s392 = sphi 0, %s392
      %s394 = sphi 0, %s392
      %s395 = sphi 0, %s394
      %s409 = sphi 0, %s395
    $region4: #{tpu_custom_call.1} parent=1 // loop_header_branch
      %33 = sbr.rel (%p31) target = $region8
    $region5: #{tpu_custom_call.1} parent=1 // loop_body
      %s35 = ssub.s32 %s30, 1
      %s36 = ssub.s32 %s30, 2
      %s37 = sadd.s32 %s30, 1
      %s39 = sadd.s32 %s38, 1
      %p42 = scmp.eq.s32.totalorder %s30, 1
      %p43 = scmp.ne.s32.totalorder %s38, %s40
      %p44 = scmp.eq.s32.totalorder %s30, 0
      %p45 = por %p43, %p44
      %p46 = scmp.ne.s32.totalorder %s38, %s40
      %p47 = scmp.eq.s32.totalorder %s35, 1
      %p48 = por %p46, %p47
      %p49 = scmp.ne.s32.totalorder %s40, %s41
      %p50 = scmp.eq.s32.totalorder %s35, 0
      %p51 = por %p49, %p50
      %p52 = scmp.ne.s32.totalorder %s40, %s41
      %p53 = scmp.eq.s32.totalorder %s36, 1
      %p54 = por %p52, %p53
      %p56 = scmp.ne.s32.totalorder %s41, %s55
      %p57 = scmp.eq.s32.totalorder %s36, 0
      %p58 = por %p56, %p57
      %s60 = sadd.s32 %s59, 1
      %p63 = scmp.eq.s32.totalorder %s30, 1
      %p64 = scmp.ne.s32.totalorder %s59, %s61
      %p65 = scmp.eq.s32.totalorder %s30, 0
      %p66 = por %p64, %p65
      %p67 = scmp.ne.s32.totalorder %s59, %s61
      %p68 = scmp.eq.s32.totalorder %s35, 1
      %p69 = por %p67, %p68
      %p70 = scmp.ne.s32.totalorder %s61, %s62
      %p71 = scmp.eq.s32.totalorder %s35, 0
      %p72 = por %p70, %p71
      %p73 = scmp.ne.s32.totalorder %s61, %s62
      %p74 = scmp.eq.s32.totalorder %s36, 1
      %p75 = por %p73, %p74
      %p77 = scmp.ne.s32.totalorder %s62, %s76
      %p78 = scmp.eq.s32.totalorder %s36, 0
      %p79 = por %p77, %p78
      %s80 = ssub.s32 %s30, %s37
      %p81 = scmp.eq.s32.totalorder %s80, 0
      %s83 = sadd.s32 %s82, 1
      %s84 = scalar_select %p81, %s82, %s83
      %p87 = pneg %p81
      %p88 = scmp.eq.s32.totalorder %s30, 1
      %p89 = por %p87, %p88
      %p90 = scmp.ne.s32.totalorder %s82, %s85
      %p91 = scmp.eq.s32.totalorder %s30, 0
      %p92 = por %p90, %p91
      %p93 = scmp.ne.s32.totalorder %s82, %s85
      %p94 = scmp.eq.s32.totalorder %s35, 1
      %p95 = por %p93, %p94
      %p96 = scmp.ne.s32.totalorder %s85, %s86
      %p97 = scmp.eq.s32.totalorder %s35, 0
      %p98 = por %p96, %p97
      %p99 = scmp.ne.s32.totalorder %s85, %s86
      %p100 = scmp.eq.s32.totalorder %s36, 1
      %p101 = por %p99, %p100
      %p103 = scmp.ne.s32.totalorder %s86, %s102
      %p104 = scmp.eq.s32.totalorder %s36, 0
      %p105 = por %p103, %p104
      %s106 = ssub.s32 %s30, %s37
      %p107 = scmp.eq.s32.totalorder %s106, 0
      %s109 = sadd.s32 %s108, 1
      %s110 = scalar_select %p107, %s108, %s109
      %p113 = pneg %p107
      %p114 = scmp.eq.s32.totalorder %s30, 1
      %p115 = por %p113, %p114
      %p116 = scmp.ne.s32.totalorder %s108, %s111
      %p117 = scmp.eq.s32.totalorder %s30, 0
      %p118 = por %p116, %p117
      %p119 = scmp.ne.s32.totalorder %s108, %s111
      %p120 = scmp.eq.s32.totalorder %s35, 1
      %p121 = por %p119, %p120
      %p122 = scmp.ne.s32.totalorder %s111, %s112
      %p123 = scmp.eq.s32.totalorder %s35, 0
      %p124 = por %p122, %p123
      %p125 = scmp.ne.s32.totalorder %s111, %s112
      %p126 = scmp.eq.s32.totalorder %s36, 1
      %p127 = por %p125, %p126
      %p129 = scmp.ne.s32.totalorder %s112, %s128
      %p130 = scmp.eq.s32.totalorder %s36, 0
      %p131 = por %p129, %p130
      %s132 = ssub.s32 %s30, %s37
      %p133 = scmp.eq.s32.totalorder %s132, 0
      %s135 = sadd.s32 %s134, 1
      %s136 = scalar_select %p133, %s134, %s135
      %p139 = pneg %p133
      %p140 = scmp.eq.s32.totalorder %s30, 1
      %p141 = por %p139, %p140
      %p142 = scmp.ne.s32.totalorder %s134, %s137
      %p143 = scmp.eq.s32.totalorder %s30, 0
      %p144 = por %p142, %p143
      %p145 = scmp.ne.s32.totalorder %s134, %s137
      %p146 = scmp.eq.s32.totalorder %s35, 1
      %p147 = por %p145, %p146
      %p148 = scmp.ne.s32.totalorder %s137, %s138
      %p149 = scmp.eq.s32.totalorder %s35, 0
      %p150 = por %p148, %p149
      %p151 = scmp.ne.s32.totalorder %s137, %s138
      %p152 = scmp.eq.s32.totalorder %s36, 1
      %p153 = por %p151, %p152
      %p155 = scmp.ne.s32.totalorder %s138, %s154
      %p156 = scmp.eq.s32.totalorder %s36, 0
      %p157 = por %p155, %p156
      %s158 = ssub.s32 %s30, %s37
      %p159 = scmp.eq.s32.totalorder %s158, 0
      %s161 = sadd.s32 %s160, 1
      %s162 = scalar_select %p159, %s160, %s161
      %p165 = pneg %p159
      %p166 = scmp.eq.s32.totalorder %s30, 1
      %p167 = por %p165, %p166
      %p168 = scmp.ne.s32.totalorder %s160, %s163
      %p169 = scmp.eq.s32.totalorder %s30, 0
      %p170 = por %p168, %p169
      %p171 = scmp.ne.s32.totalorder %s160, %s163
      %p172 = scmp.eq.s32.totalorder %s35, 1
      %p173 = por %p171, %p172
      %p174 = scmp.ne.s32.totalorder %s163, %s164
      %p175 = scmp.eq.s32.totalorder %s35, 0
      %p176 = por %p174, %p175
      %p177 = scmp.ne.s32.totalorder %s163, %s164
      %p178 = scmp.eq.s32.totalorder %s36, 1
      %p179 = por %p177, %p178
      %p181 = scmp.ne.s32.totalorder %s164, %s180
      %p182 = scmp.eq.s32.totalorder %s36, 0
      %p183 = por %p181, %p182
      %s184 = ssub.s32 %s30, %s37
      %p185 = scmp.eq.s32.totalorder %s184, 0
      %s187 = sadd.s32 %s186, 1
      %s188 = scalar_select %p185, %s186, %s187
      %p191 = pneg %p185
      %p192 = scmp.eq.s32.totalorder %s30, 1
      %p193 = por %p191, %p192
      %p194 = scmp.ne.s32.totalorder %s186, %s189
      %p195 = scmp.eq.s32.totalorder %s30, 0
      %p196 = por %p194, %p195
      %p197 = scmp.ne.s32.totalorder %s186, %s189
      %p198 = scmp.eq.s32.totalorder %s35, 1
      %p199 = por %p197, %p198
      %p200 = scmp.ne.s32.totalorder %s189, %s190
      %p201 = scmp.eq.s32.totalorder %s35, 0
      %p202 = por %p200, %p201
      %p203 = scmp.ne.s32.totalorder %s189, %s190
      %p204 = scmp.eq.s32.totalorder %s36, 1
      %p205 = por %p203, %p204
      %p207 = scmp.ne.s32.totalorder %s190, %s206
      %p208 = scmp.eq.s32.totalorder %s36, 0
      %p209 = por %p207, %p208
      %s210 = ssub.s32 %s30, %s37
      %p211 = scmp.eq.s32.totalorder %s210, 0
      %s213 = sadd.s32 %s212, 1
      %s214 = scalar_select %p211, %s212, %s213
      %p217 = pneg %p211
      %p218 = scmp.eq.s32.totalorder %s30, 1
      %p219 = por %p217, %p218
      %p220 = scmp.ne.s32.totalorder %s212, %s215
      %p221 = scmp.eq.s32.totalorder %s30, 0
      %p222 = por %p220, %p221
      %p223 = scmp.ne.s32.totalorder %s212, %s215
      %p224 = scmp.eq.s32.totalorder %s35, 1
      %p225 = por %p223, %p224
      %p226 = scmp.ne.s32.totalorder %s215, %s216
      %p227 = scmp.eq.s32.totalorder %s35, 0
      %p228 = por %p226, %p227
      %p229 = scmp.ne.s32.totalorder %s215, %s216
      %p230 = scmp.eq.s32.totalorder %s36, 1
      %p231 = por %p229, %p230
      %p233 = scmp.ne.s32.totalorder %s216, %s232
      %p234 = scmp.eq.s32.totalorder %s36, 0
      %p235 = por %p233, %p234
      %s236 = ssub.s32 %s30, %s37
      %p237 = scmp.eq.s32.totalorder %s236, 0
      %s239 = sadd.s32 %s238, 1
      %s240 = scalar_select %p237, %s238, %s239
      %p243 = pneg %p237
      %p244 = scmp.eq.s32.totalorder %s30, 1
      %p245 = por %p243, %p244
      %p246 = scmp.ne.s32.totalorder %s238, %s241
      %p247 = scmp.eq.s32.totalorder %s30, 0
      %p248 = por %p246, %p247
      %p249 = scmp.ne.s32.totalorder %s238, %s241
      %p250 = scmp.eq.s32.totalorder %s35, 1
      %p251 = por %p249, %p250
      %p252 = scmp.ne.s32.totalorder %s241, %s242
      %p253 = scmp.eq.s32.totalorder %s35, 0
      %p254 = por %p252, %p253
      %p255 = scmp.ne.s32.totalorder %s241, %s242
      %p256 = scmp.eq.s32.totalorder %s36, 1
      %p257 = por %p255, %p256
      %p259 = scmp.ne.s32.totalorder %s242, %s258
      %p260 = scmp.eq.s32.totalorder %s36, 0
      %p261 = por %p259, %p260
      %s262 = ssub.s32 %s30, %s37
      %p263 = scmp.eq.s32.totalorder %s262, 0
      %s265 = sadd.s32 %s264, 1
      %s266 = scalar_select %p263, %s264, %s265
      %p269 = pneg %p263
      %p270 = scmp.eq.s32.totalorder %s30, 1
      %p271 = por %p269, %p270
      %p272 = scmp.ne.s32.totalorder %s264, %s267
      %p273 = scmp.eq.s32.totalorder %s30, 0
      %p274 = por %p272, %p273
      %p275 = scmp.ne.s32.totalorder %s264, %s267
      %p276 = scmp.eq.s32.totalorder %s35, 1
      %p277 = por %p275, %p276
      %p278 = scmp.ne.s32.totalorder %s267, %s268
      %p279 = scmp.eq.s32.totalorder %s35, 0
      %p280 = por %p278, %p279
      %p281 = scmp.ne.s32.totalorder %s267, %s268
      %p282 = scmp.eq.s32.totalorder %s36, 1
      %p283 = por %p281, %p282
      %p285 = scmp.ne.s32.totalorder %s268, %s284
      %p286 = scmp.eq.s32.totalorder %s36, 0
      %p287 = por %p285, %p286
      %s288 = ssub.s32 %s30, %s37
      %p289 = scmp.eq.s32.totalorder %s288, 0
      %s291 = sadd.s32 %s290, 1
      %s292 = scalar_select %p289, %s290, %s291
      %p295 = pneg %p289
      %p296 = scmp.eq.s32.totalorder %s30, 1
      %p297 = por %p295, %p296
      %p298 = scmp.ne.s32.totalorder %s290, %s293
      %p299 = scmp.eq.s32.totalorder %s30, 0
      %p300 = por %p298, %p299
      %p301 = scmp.ne.s32.totalorder %s290, %s293
      %p302 = scmp.eq.s32.totalorder %s35, 1
      %p303 = por %p301, %p302
      %p304 = scmp.ne.s32.totalorder %s293, %s294
      %p305 = scmp.eq.s32.totalorder %s35, 0
      %p306 = por %p304, %p305
      %p307 = scmp.ne.s32.totalorder %s293, %s294
      %p308 = scmp.eq.s32.totalorder %s36, 1
      %p309 = por %p307, %p308
      %p311 = scmp.ne.s32.totalorder %s294, %s310
      %p312 = scmp.eq.s32.totalorder %s36, 0
      %p313 = por %p311, %p312
      %s314 = ssub.s32 %s30, %s37
      %p315 = scmp.eq.s32.totalorder %s314, 0
      %s317 = sadd.s32 %s316, 1
      %s318 = scalar_select %p315, %s316, %s317
      %p321 = pneg %p315
      %p322 = scmp.eq.s32.totalorder %s30, 1
      %p323 = por %p321, %p322
      %p324 = scmp.ne.s32.totalorder %s316, %s319
      %p325 = scmp.eq.s32.totalorder %s30, 0
      %p326 = por %p324, %p325
      %p327 = scmp.ne.s32.totalorder %s316, %s319
      %p328 = scmp.eq.s32.totalorder %s35, 1
      %p329 = por %p327, %p328
      %p330 = scmp.ne.s32.totalorder %s319, %s320
      %p331 = scmp.eq.s32.totalorder %s35, 0
      %p332 = por %p330, %p331
      %p333 = scmp.ne.s32.totalorder %s319, %s320
      %p334 = scmp.eq.s32.totalorder %s36, 1
      %p335 = por %p333, %p334
      %p337 = scmp.ne.s32.totalorder %s320, %s336
      %p338 = scmp.eq.s32.totalorder %s36, 0
      %p339 = por %p337, %p338
      %s340 = ssub.s32 %s30, %s37
      %p341 = scmp.eq.s32.totalorder %s340, 0
      %s343 = sadd.s32 %s342, 1
      %s344 = scalar_select %p341, %s342, %s343
      %p347 = pneg %p341
      %p348 = scmp.eq.s32.totalorder %s30, 1
      %p349 = por %p347, %p348
      %p350 = scmp.ne.s32.totalorder %s342, %s345
      %p351 = scmp.eq.s32.totalorder %s30, 0
      %p352 = por %p350, %p351
      %p353 = scmp.ne.s32.totalorder %s342, %s345
      %p354 = scmp.eq.s32.totalorder %s35, 1
      %p355 = por %p353, %p354
      %p356 = scmp.ne.s32.totalorder %s345, %s346
      %p357 = scmp.eq.s32.totalorder %s35, 0
      %p358 = por %p356, %p357
      %p359 = scmp.ne.s32.totalorder %s345, %s346
      %p360 = scmp.eq.s32.totalorder %s36, 1
      %p361 = por %p359, %p360
      %p363 = scmp.ne.s32.totalorder %s346, %s362
      %p364 = scmp.eq.s32.totalorder %s36, 0
      %p365 = por %p363, %p364
      %s366 = ssub.s32 %s30, %s37
      %p367 = scmp.eq.s32.totalorder %s366, 0
      %s369 = sadd.s32 %s368, 1
      %s370 = scalar_select %p367, %s368, %s369
      %p373 = pneg %p367
      %p374 = scmp.eq.s32.totalorder %s30, 1
      %p375 = por %p373, %p374
      %p376 = scmp.ne.s32.totalorder %s368, %s371
      %p377 = scmp.eq.s32.totalorder %s30, 0
      %p378 = por %p376, %p377
      %p379 = scmp.ne.s32.totalorder %s368, %s371
      %p380 = scmp.eq.s32.totalorder %s35, 1
      %p381 = por %p379, %p380
      %p382 = scmp.ne.s32.totalorder %s371, %s372
      %p383 = scmp.eq.s32.totalorder %s35, 0
      %p384 = por %p382, %p383
      %p385 = scmp.ne.s32.totalorder %s371, %s372
      %p386 = scmp.eq.s32.totalorder %s36, 1
      %p387 = por %p385, %p386
      %p389 = scmp.ne.s32.totalorder %s372, %s388
      %p390 = scmp.eq.s32.totalorder %s36, 0
      %p391 = por %p389, %p390
      %s393 = sadd.s32 %s392, 1
      %p396 = scmp.eq.s32.totalorder %s30, 1
      %p397 = scmp.ne.s32.totalorder %s392, %s394
      %p398 = scmp.eq.s32.totalorder %s30, 0
      %p399 = por %p397, %p398
      %p400 = scmp.ne.s32.totalorder %s392, %s394
      %p401 = scmp.eq.s32.totalorder %s35, 1
      %p402 = por %p400, %p401
      %p403 = scmp.ne.s32.totalorder %s394, %s395
      %p404 = scmp.eq.s32.totalorder %s35, 0
      %p405 = por %p403, %p404
      %p406 = scmp.ne.s32.totalorder %s394, %s395
      %p407 = scmp.eq.s32.totalorder %s36, 1
      %p408 = por %p406, %p407
      %p410 = scmp.ne.s32.totalorder %s395, %s409
      %p411 = scmp.eq.s32.totalorder %s36, 0
      %p412 = por %p410, %p411
      %p413 = scmp.le.s32.totalorder 1, %s30
      %p414 = scmp.lt.s32.totalorder %s30, 3
      %p415 = pnand %p413, %p414
      %p416 = pneg %p415
      // Predicated region
      $region9: #{tpu_custom_call.1} parent=5 // pred_check
        _
      $region10: #{tpu_custom_call.1} parent=5 // pred_check_branch
        %418 = sbr.rel (%p415) target = $region12
      $region11: #{tpu_custom_call.1} parent=5 // pred_region
        %s419 = ssub.s32 %s30, 1
        // Predicated region
        $region13: #{tpu_custom_call.1} parent=11 // pred_check
          %p420 = pneg %p51
        $region14: #{tpu_custom_call.1} parent=11 // pred_check_branch
          %422 = sbr.rel (%p420) target = $region16
        $region15: #{tpu_custom_call.1} parent=11 // pred_region
          _
        $region16: #{tpu_custom_call.1} parent=11 // pred_fallthru
          _
        // Predicated region
        $region17: #{tpu_custom_call.1} parent=11 // pred_check
          %p423 = pneg %p72
        $region18: #{tpu_custom_call.1} parent=11 // pred_check_branch
          %425 = sbr.rel (%p423) target = $region20
        $region19: #{tpu_custom_call.1} parent=11 // pred_region
          _
        $region20: #{tpu_custom_call.1} parent=11 // pred_fallthru
          _
      $region12: #{tpu_custom_call.1} parent=5 // pred_fallthru
        _
      %p426 = scmp.lt.s32.totalorder %s30, 2
      // Predicated region
      $region21: #{tpu_custom_call.1} parent=5 // pred_check
        %p427 = pneg %p426
      $region22: #{tpu_custom_call.1} parent=5 // pred_check_branch
        %429 = sbr.rel (%p427) target = $region24
      $region23: #{tpu_custom_call.1} parent=5 // pred_region
        // Predicated region
        $region25: #{tpu_custom_call.1} parent=23 // pred_check
          %p430 = pneg %p92
        $region26: #{tpu_custom_call.1} parent=23 // pred_check_branch
          %432 = sbr.rel (%p430) target = $region28
        $region27: #{tpu_custom_call.1} parent=23 // pred_region
          %p433 = scmp.lt.s32.totalorder %s30, 1
          %s434 = scalar_select %p433, %s30, 1
          %s435 = smul.addr %s434, 4
          %s436 = smul.addr %s435, 4
          %s437 = scalar_lea.vmem %s2, %s436
        $region28: #{tpu_custom_call.1} parent=23 // pred_fallthru
          _
        // Predicated region
        $region29: #{tpu_custom_call.1} parent=23 // pred_check
          %p438 = pneg %p118
        $region30: #{tpu_custom_call.1} parent=23 // pred_check_branch
          %440 = sbr.rel (%p438) target = $region32
        $region31: #{tpu_custom_call.1} parent=23 // pred_region
          %p441 = scmp.lt.s32.totalorder %s30, 1
          %s442 = scalar_select %p441, %s30, 1
          %s443 = scalar_lea.vmem %s3, %s442
        $region32: #{tpu_custom_call.1} parent=23 // pred_fallthru
          _
        // Predicated region
        $region33: #{tpu_custom_call.1} parent=23 // pred_check
          %p444 = pneg %p144
        $region34: #{tpu_custom_call.1} parent=23 // pred_check_branch
          %446 = sbr.rel (%p444) target = $region36
        $region35: #{tpu_custom_call.1} parent=23 // pred_region
          %p447 = scmp.lt.s32.totalorder %s30, 1
          %s448 = scalar_select %p447, %s30, 1
          %s449 = smul.addr %s448, 4
          %s450 = smul.addr %s449, 4
          %s451 = scalar_lea.vmem %s4, %s450
        $region36: #{tpu_custom_call.1} parent=23 // pred_fallthru
          _
        // Predicated region
        $region37: #{tpu_custom_call.1} parent=23 // pred_check
          %p452 = pneg %p170
        $region38: #{tpu_custom_call.1} parent=23 // pred_check_branch
          %454 = sbr.rel (%p452) target = $region40
        $region39: #{tpu_custom_call.1} parent=23 // pred_region
          %s455 = sand.u32 %s160, 1
          %s456 = scalar_lea.sflag [#allocation4], %s455
          %s457 = sand.u32 %s160, 1
          %s458 = scalar_lea.vmem [#allocation3], %s457
          %s460 = ssub.s32 16, 16
          %461 = vsyncadd %s456, %s460
          %s462 = smul.addr %s30, 16
          %s463 = scalar_lea.hbm %s5, %s462
          %s465 = sshll.u32 %s458, 4
          %s466 = int_to_ptr.vmem [resolvable:$true] %s465
          %468 = dma.hbm_to_vmem [thread:$0]  %s463, 16, %s466, %s456
        $region40: #{tpu_custom_call.1} parent=23 // pred_fallthru
          _
        // Predicated region
        $region41: #{tpu_custom_call.1} parent=23 // pred_check
          %p469 = pneg %p196
        $region42: #{tpu_custom_call.1} parent=23 // pred_check_branch
          %471 = sbr.rel (%p469) target = $region44
        $region43: #{tpu_custom_call.1} parent=23 // pred_region
          %s472 = sand.u32 %s30, 1
          %s473 = scalar_lea.sflag [#allocation7], %s472
          %s474 = sand.u32 %s186, 1
          %s475 = scalar_lea.vmem [#allocation6], %s474
          %s477 = ssub.s32 16, 16
          %478 = vsyncadd %s473, %s477
          %s479 = smul.addr %s30, 16
          %s480 = scalar_lea.hbm %s6, %s479
          %s482 = sshll.u32 %s475, 4
          %s483 = int_to_ptr.vmem [resolvable:$true] %s482
          %485 = dma.hbm_to_vmem [thread:$0]  %s480, 16, %s483, %s473
        $region44: #{tpu_custom_call.1} parent=23 // pred_fallthru
          _
        // Predicated region
        $region45: #{tpu_custom_call.1} parent=23 // pred_check
          %p486 = pneg %p222
        $region46: #{tpu_custom_call.1} parent=23 // pred_check_branch
          %488 = sbr.rel (%p486) target = $region48
        $region47: #{tpu_custom_call.1} parent=23 // pred_region
          %s489 = sand.u32 %s30, 1
          %s490 = scalar_lea.sflag [#allocation7], %s489
          %s491 = sand.u32 %s212, 1
          %s492 = scalar_lea.vmem [#allocation8], %s491
          %s494 = ssub.s32 16, 16
          %495 = vsyncadd %s490, %s494
          %s496 = smul.addr %s30, 16
          %s497 = scalar_lea.hbm %s7, %s496
          %s499 = sshll.u32 %s492, 4
          %s500 = int_to_ptr.vmem [resolvable:$true] %s499
          %502 = dma.hbm_to_vmem [thread:$0]  %s497, 16, %s500, %s490
        $region48: #{tpu_custom_call.1} parent=23 // pred_fallthru
          _
        // Predicated region
        $region49: #{tpu_custom_call.1} parent=23 // pred_check
          %p503 = pneg %p248
        $region50: #{tpu_custom_call.1} parent=23 // pred_check_branch
          %505 = sbr.rel (%p503) target = $region52
        $region51: #{tpu_custom_call.1} parent=23 // pred_region
          %s506 = sand.u32 %s30, 1
          %s507 = scalar_lea.sflag [#allocation10], %s506
          %s508 = sand.u32 %s238, 1
          %s509 = smul.addr %s508, 16
          %s510 = scalar_lea.vmem [#allocation9], %s509
          %s512 = ssub.s32 256, 256
          %513 = vsyncadd %s507, %s512
          %s514 = smul.addr %s30, 4
          %s515 = smul.addr %s514, 64
          %s516 = scalar_lea.hbm %s8, %s515
          %s517 = sshll.u32 %s510, 4
          %s518 = int_to_ptr.vmem [resolvable:$true] %s517
          %523 = dma.hbm_to_vmem [thread:$0]  %s516, 256, %s518, %s507, 64, 64, 4
        $region52: #{tpu_custom_call.1} parent=23 // pred_fallthru
          _
        // Predicated region
        $region53: #{tpu_custom_call.1} parent=23 // pred_check
          %p524 = pneg %p274
        $region54: #{tpu_custom_call.1} parent=23 // pred_check_branch
          %526 = sbr.rel (%p524) target = $region56
        $region55: #{tpu_custom_call.1} parent=23 // pred_region
          %s527 = sand.u32 %s30, 1
          %s528 = scalar_lea.sflag [#allocation10], %s527
          %s529 = sand.u32 %s264, 1
          %s530 = scalar_lea.vmem [#allocation11], %s529
          %s532 = ssub.s32 16, 16
          %533 = vsyncadd %s528, %s532
          %s534 = smul.addr %s30, 16
          %s535 = scalar_lea.hbm %s9, %s534
          %s537 = sshll.u32 %s530, 4
          %s538 = int_to_ptr.vmem [resolvable:$true] %s537
          %540 = dma.hbm_to_vmem [thread:$0]  %s535, 16, %s538, %s528
        $region56: #{tpu_custom_call.1} parent=23 // pred_fallthru
          _
        // Predicated region
        $region57: #{tpu_custom_call.1} parent=23 // pred_check
          %p541 = pneg %p300
        $region58: #{tpu_custom_call.1} parent=23 // pred_check_branch
          %543 = sbr.rel (%p541) target = $region60
        $region59: #{tpu_custom_call.1} parent=23 // pred_region
          %p544 = scmp.lt.s32.totalorder %s30, 1
          %s545 = scalar_select %p544, %s30, 1
          %s546 = smul.addr %s545, 8
          %s547 = smul.addr %s546, 4
          %s548 = scalar_lea.vmem %s10, %s547
        $region60: #{tpu_custom_call.1} parent=23 // pred_fallthru
          _
        // Predicated region
        $region61: #{tpu_custom_call.1} parent=23 // pred_check
          %p549 = pneg %p326
        $region62: #{tpu_custom_call.1} parent=23 // pred_check_branch
          %551 = sbr.rel (%p549) target = $region64
        $region63: #{tpu_custom_call.1} parent=23 // pred_region
          %p552 = scmp.lt.s32.totalorder %s30, 1
          %s553 = scalar_select %p552, %s30, 1
          %s554 = scalar_lea.vmem %s11, %s553
        $region64: #{tpu_custom_call.1} parent=23 // pred_fallthru
          _
        // Predicated region
        $region65: #{tpu_custom_call.1} parent=23 // pred_check
          %p555 = pneg %p352
        $region66: #{tpu_custom_call.1} parent=23 // pred_check_branch
          %557 = sbr.rel (%p555) target = $region68
        $region67: #{tpu_custom_call.1} parent=23 // pred_region
          %p558 = scmp.lt.s32.totalorder %s30, 1
          %s559 = scalar_select %p558, %s30, 1
          %s560 = scalar_lea.vmem %s12, %s559
        $region68: #{tpu_custom_call.1} parent=23 // pred_fallthru
          _
        // Predicated region
        $region69: #{tpu_custom_call.1} parent=23 // pred_check
          %p561 = pneg %p378
        $region70: #{tpu_custom_call.1} parent=23 // pred_check_branch
          %563 = sbr.rel (%p561) target = $region72
        $region71: #{tpu_custom_call.1} parent=23 // pred_region
          %p564 = scmp.lt.s32.totalorder %s30, 1
          %s565 = scalar_select %p564, %s30, 1
          %s566 = scalar_lea.vmem %s13, %s565
        $region72: #{tpu_custom_call.1} parent=23 // pred_fallthru
          _
      $region24: #{tpu_custom_call.1} parent=5 // pred_fallthru
        _
      %p567 = scmp.le.s32.totalorder 1, %s30
      %p568 = scmp.lt.s32.totalorder %s30, 3
      %p569 = pnand %p567, %p568
      %p570 = pneg %p569
      // Predicated region
      $region73: #{tpu_custom_call.1} parent=5 // pred_check
        _
      $region74: #{tpu_custom_call.1} parent=5 // pred_check_branch
        %572 = sbr.rel (%p569) target = $region76
      $region75: #{tpu_custom_call.1} parent=5 // pred_region
        %s573 = ssub.s32 %s30, 1
        %s574 = sand.u32 %s163, 1
        %s575 = scalar_lea.sflag [#allocation4], %s574
        %s576 = sand.u32 %s163, 1
        %s577 = scalar_lea.vmem [#allocation3], %s576
        // Predicated region
        $region77: #{tpu_custom_call.1} parent=75 // pred_check
          %p578 = pneg %p176
        $region78: #{tpu_custom_call.1} parent=75 // pred_check_branch
          %580 = sbr.rel (%p578) target = $region80
        $region79: #{tpu_custom_call.1} parent=75 // pred_region
          %581 = dma.done %s575, 16
        $region80: #{tpu_custom_call.1} parent=75 // pred_fallthru
          _
        %s582 = sand.u32 %s35, 1
        %s583 = scalar_lea.sflag [#allocation7], %s582
        %s584 = sand.u32 %s189, 1
        %s585 = scalar_lea.vmem [#allocation6], %s584
        // Predicated region
        $region81: #{tpu_custom_call.1} parent=75 // pred_check
          %p586 = pneg %p202
        $region82: #{tpu_custom_call.1} parent=75 // pred_check_branch
          %588 = sbr.rel (%p586) target = $region84
        $region83: #{tpu_custom_call.1} parent=75 // pred_region
          %589 = dma.done %s583, 16
        $region84: #{tpu_custom_call.1} parent=75 // pred_fallthru
          _
        %s590 = sand.u32 %s35, 1
        %s591 = scalar_lea.sflag [#allocation7], %s590
        %s592 = sand.u32 %s215, 1
        %s593 = scalar_lea.vmem [#allocation8], %s592
        // Predicated region
        $region85: #{tpu_custom_call.1} parent=75 // pred_check
          %p594 = pneg %p228
        $region86: #{tpu_custom_call.1} parent=75 // pred_check_branch
          %596 = sbr.rel (%p594) target = $region88
        $region87: #{tpu_custom_call.1} parent=75 // pred_region
          %597 = dma.done %s591, 16
        $region88: #{tpu_custom_call.1} parent=75 // pred_fallthru
          _
        %s598 = sand.u32 %s35, 1
        %s599 = scalar_lea.sflag [#allocation10], %s598
        %s600 = sand.u32 %s241, 1
        %s601 = smul.addr %s600, 16
        %s602 = scalar_lea.vmem [#allocation9], %s601
        // Predicated region
        $region89: #{tpu_custom_call.1} parent=75 // pred_check
          %p603 = pneg %p254
        $region90: #{tpu_custom_call.1} parent=75 // pred_check_branch
          %605 = sbr.rel (%p603) target = $region92
        $region91: #{tpu_custom_call.1} parent=75 // pred_region
          %606 = dma.done %s599, 256
        $region92: #{tpu_custom_call.1} parent=75 // pred_fallthru
          _
        %s607 = sand.u32 %s35, 1
        %s608 = scalar_lea.sflag [#allocation10], %s607
        %s609 = sand.u32 %s267, 1
        %s610 = scalar_lea.vmem [#allocation11], %s609
        // Predicated region
        $region93: #{tpu_custom_call.1} parent=75 // pred_check
          %p611 = pneg %p280
        $region94: #{tpu_custom_call.1} parent=75 // pred_check_branch
          %613 = sbr.rel (%p611) target = $region96
        $region95: #{tpu_custom_call.1} parent=75 // pred_region
          %614 = dma.done %s608, 16
        $region96: #{tpu_custom_call.1} parent=75 // pred_fallthru
          _
        %p615 = pneg %p51
        %p616 = pneg %p48
        %p617 = pneg %p72
        %p618 = pneg %p69
        %p619 = scmp.lt.s32.totalorder %s35, 1
        %s620 = scalar_select %p619, %s35, 1
        %s621 = smul.addr %s620, 4
        %s622 = smul.addr %s621, 4
        %s623 = scalar_lea.vmem %s2, %s622
        %p624 = pneg %p98
        %p625 = pneg %p95
        %p626 = scmp.lt.s32.totalorder %s35, 1
        %s627 = scalar_select %p626, %s35, 1
        %s628 = scalar_lea.vmem %s3, %s627
        %p629 = pneg %p124
        %p630 = pneg %p121
        %p631 = scmp.lt.s32.totalorder %s35, 1
        %s632 = scalar_select %p631, %s35, 1
        %s633 = smul.addr %s632, 4
        %s634 = smul.addr %s633, 4
        %s635 = scalar_lea.vmem %s4, %s634
        %p636 = pneg %p150
        %p637 = pneg %p147
        %s638 = sand.u32 %s163, 1
        %s639 = scalar_lea.sflag [#allocation4], %s638
        %s640 = sand.u32 %s163, 1
        %s641 = scalar_lea.vmem [#allocation3], %s640
        %p642 = pneg %p176
        %p643 = pneg %p173
        %s644 = sand.u32 %s35, 1
        %s645 = scalar_lea.sflag [#allocation7], %s644
        %s646 = sand.u32 %s189, 1
        %s647 = scalar_lea.vmem [#allocation6], %s646
        %p648 = pneg %p202
        %p649 = pneg %p199
        %s650 = sand.u32 %s35, 1
        %s651 = scalar_lea.sflag [#allocation7], %s650
        %s652 = sand.u32 %s215, 1
        %s653 = scalar_lea.vmem [#allocation8], %s652
        %p654 = pneg %p228
        %p655 = pneg %p225
        %s656 = sand.u32 %s35, 1
        %s657 = scalar_lea.sflag [#allocation10], %s656
        %s658 = sand.u32 %s241, 1
        %s659 = smul.addr %s658, 16
        %s660 = scalar_lea.vmem [#allocation9], %s659
        %p661 = pneg %p254
        %p662 = pneg %p251
        %s663 = sand.u32 %s35, 1
        %s664 = scalar_lea.sflag [#allocation10], %s663
        %s665 = sand.u32 %s267, 1
        %s666 = scalar_lea.vmem [#allocation11], %s665
        %p667 = pneg %p280
        %p668 = pneg %p277
        %p669 = scmp.lt.s32.totalorder %s35, 1
        %s670 = scalar_select %p669, %s35, 1
        %s671 = smul.addr %s670, 8
        %s672 = smul.addr %s671, 4
        %s673 = scalar_lea.vmem %s10, %s672
        %p674 = pneg %p306
        %p675 = pneg %p303
        %p676 = scmp.lt.s32.totalorder %s35, 1
        %s677 = scalar_select %p676, %s35, 1
        %s678 = scalar_lea.vmem %s11, %s677
        %p679 = pneg %p332
        %p680 = pneg %p329
        %p681 = scmp.lt.s32.totalorder %s35, 1
        %s682 = scalar_select %p681, %s35, 1
        %s683 = scalar_lea.vmem %s12, %s682
        %p684 = pneg %p358
        %p685 = pneg %p355
        %p686 = scmp.lt.s32.totalorder %s35, 1
        %s687 = scalar_select %p686, %s35, 1
        %s688 = scalar_lea.vmem %s13, %s687
        %p689 = pneg %p384
        %p690 = pneg %p381
        %p691 = pneg %p405
        %p692 = pneg %p402
        %p693 = scmp.lt.s32.totalorder %s35, 1
        %s694 = scalar_select %p693, %s35, 1
        %s695 = smul.addr %s694, 4
        %s696 = smul.addr %s695, 4
        %s697 = scalar_lea.vmem %s2, %s696
        %p698 = scmp.lt.s32.totalorder %s35, 1
        %s699 = scalar_select %p698, %s35, 1
        %s700 = scalar_lea.vmem %s3, %s699
        %p701 = scmp.lt.s32.totalorder %s35, 1
        %s702 = scalar_select %p701, %s35, 1
        %s703 = smul.addr %s702, 4
        %s704 = smul.addr %s703, 4
        %s705 = scalar_lea.vmem %s4, %s704
        %p706 = scmp.lt.s32.totalorder %s35, 1
        %s707 = scalar_select %p706, %s35, 1
        %s708 = smul.addr %s707, 8
        %s709 = smul.addr %s708, 4
        %s710 = scalar_lea.vmem %s10, %s709
        %p711 = scmp.lt.s32.totalorder %s35, 1
        %s712 = scalar_select %p711, %s35, 1
        %s713 = scalar_lea.vmem %s11, %s712
        %p714 = scmp.lt.s32.totalorder %s35, 1
        %s715 = scalar_select %p714, %s35, 1
        %s716 = scalar_lea.vmem %s12, %s715
        %p717 = scmp.lt.s32.totalorder %s35, 1
        %s718 = scalar_select %p717, %s35, 1
        %s719 = scalar_lea.vmem %s13, %s718
        %p721 = scmp.eq.s32.totalorder %s35, 0
        // Predicated region
        $region97: #{tpu_custom_call.1} parent=75 // pred_check
          %p722 = pneg %p721
        $region98: #{tpu_custom_call.1} parent=75 // pred_check_branch
          %724 = sbr.rel (%p722) target = $region100
        $region99: #{tpu_custom_call.1} parent=75 // pred_region
          %v725 = vld [vmem:[%s0] sm:$0xff]
          %v726 = vld [vmem:[%s0 + $0x8] sm:$0xff]
          %v727 = vld [vmem:[%s0 + $0x10] sm:$0xff]
          %v728 = vld [vmem:[%s0 + $0x18] sm:$0xff]
          %vm729 = vcmask 261120
          %730 = vst.msk [vmem:[#allocation2] sm:$0xff] %vm729, %v725
          %731 = vst.msk [vmem:[#allocation2 + $0x8] sm:$0xff] %vm729, %v726
          %732 = vst.msk [vmem:[#allocation2 + $0x10] sm:$0xff] %vm729, %v727
          %733 = vst.msk [vmem:[#allocation2 + $0x18] sm:$0xff] %vm729, %v728
        $region100: #{tpu_custom_call.1} parent=75 // pred_fallthru
          _
        %v734 = vld [vmem:[%s697] sm:$0xf]
        %v735 = vld [vmem:[%s697 + $0x4] sm:$0xf]
        %v736 = vld [vmem:[%s697 + $0x8] sm:$0xf]
        %v737 = vld [vmem:[%s697 + $0xc] sm:$0xf]
        %v738 = vld [vmem:[%s700] sm:$0x1]
        %v739 = vld [vmem:[%s705] sm:$0xf]
        %v740 = vld [vmem:[%s705 + $0x4] sm:$0xf]
        %v741 = vld [vmem:[%s705 + $0x8] sm:$0xf]
        %v742 = vld [vmem:[%s705 + $0xc] sm:$0xf]
        %v743 = vld [vmem:[%s577] sm:$0x1]
        %v744 = vld [vmem:[%s585] sm:$0x1]
        %v745 = vld [vmem:[%s593] sm:$0x1]
        %v746 = vld [vmem:[%s602] sm:$0xf]
        %v747 = vld [vmem:[%s602 + $0x4] sm:$0xf]
        %v748 = vld [vmem:[%s602 + $0x8] sm:$0xf]
        %v749 = vld [vmem:[%s602 + $0xc] sm:$0xf]
        %v750 = vld [vmem:[%s610] sm:$0x1]
        %v751 = vld [vmem:[%s710] sm:$0xf]
        %v752 = vld [vmem:[%s710 + $0x4] sm:$0xf]
        %v753 = vld [vmem:[%s710 + $0x8] sm:$0xf]
        %v754 = vld [vmem:[%s710 + $0xc] sm:$0xf]
        %v755 = vld [vmem:[%s710 + $0x10] sm:$0xf]
        %v756 = vld [vmem:[%s710 + $0x14] sm:$0xf]
        %v757 = vld [vmem:[%s710 + $0x18] sm:$0xf]
        %v758 = vld [vmem:[%s710 + $0x1c] sm:$0xf]
        %v759 = vld [vmem:[%s713] sm:$0x1]
        %v760 = vld [vmem:[%s716] sm:$0x1]
        %v761 = vld [vmem:[%s719] sm:$0x1]
        %v762 = vld [vmem:[#allocation2] sm:$0xff]
        %v763 = vld [vmem:[#allocation2 + $0x8] sm:$0xff]
        %v764 = vld [vmem:[%s1] sm:$0x1]
        %v765 = vsub.f32 1.0, %v764
        %v766 = vmul.f32 %v765, -10000.0
        %v767 = vpack.c.bf16 %v763, %v762
        %v769 = vlaneseq
        %v770 = vshrl.u32 %v769, 7
        %v771 = vsub.s32 0, %v770
        %v772 = vrot.slane %v738, %v771
        %v778 = vunpack.c.l.b16 %v734
        %v779 = vunpack.c.l.b16 %v735
        %v780 = vunpack.c.l.b16 %v736
        %v781 = vunpack.c.l.b16 %v737
        %v782 = vpack.c.b16 %v779, %v778
        %v783 = vpack.c.b16 %v781, %v780
        %vm786 = vcmask 261120
        %v788 = vsel %vm786, %v767, 0
        %790 = vmatprep.subr.bf16.mxu0 0
        %791 = vmatpush1.bf16.msra.mxu0 %v782
        %792 = vmatprep.subr.bf16.mxu0 0
        %793 = vmatpush1.bf16.msra.mxu0 %v783
        %794 = vmatprep.subr.bf16.mxu0 0
        %795 = vmatpush1.bf16.msra.mxu0 0
        %796 = vmatprep.subr.bf16.mxu0 0
        %797 = vmatpush1.bf16.msra.mxu0 0
        %798 = vmatprep.subr.bf16.mxu0 0
        %799 = vmatpush1.bf16.msra.mxu0 0
        %800 = vmatprep.subr.bf16.mxu0 0
        %801 = vmatpush1.bf16.msra.mxu0 0
        %802 = vmatprep.subr.bf16.mxu0 0
        %803 = vmatpush1.bf16.msra.mxu0 0
        %804 = vmatprep.subr.bf16.mxu0 0
        %805 = vmatpush1.bf16.msra.mxu0 0
        %806 = vmatprep.subr.bf16.mxu0 0
        %807 = vmatpush1.bf16.msra.mxu0 0
        %808 = vmatprep.subr.bf16.mxu0 0
        %809 = vmatpush1.bf16.msra.mxu0 0
        %810 = vmatprep.subr.bf16.mxu0 0
        %811 = vmatpush1.bf16.msra.mxu0 0
        %812 = vmatprep.subr.bf16.mxu0 0
        %813 = vmatpush1.bf16.msra.mxu0 0
        %814 = vmatprep.subr.bf16.mxu0 0
        %815 = vmatpush1.bf16.msra.mxu0 0
        %816 = vmatprep.subr.bf16.mxu0 0
        %817 = vmatpush1.bf16.msra.mxu0 0
        %818 = vmatprep.subr.bf16.mxu0 0
        %819 = vmatpush1.bf16.msra.mxu0 0
        %820 = vmatprep.subr.bf16.mxu0 0
        %821 = vmatpush1.bf16.msra.mxu0 0
        %822 = vmatprep.mubr.bf16.mxu0 0
        %823 = vmatmul.mubr.bf16.gmra.mrb[0].mxu0 %v788
        %v824 = vpop.f32.mrb[0].mxu0
        %v825 = vadd.f32 %v772, %v824
        %v826 = vpop.f32.mrb[0].mxu0
        %v827 = vpop.f32.mrb[0].mxu0
        %v828 = vadd.f32 %v772, %v827
        %v829 = vpop.f32.mrb[0].mxu0
        %830 = vdwg.mxu0
        %v831 = vpack.c.bf16 %v828, %v825
        %833 = vrot.lane.b32.xlu0 %v831, 120
        %v834 = vpop.permute.xlu0 %833
        %835 = vrot.lane.b32.xlu0 %v831, 112
        %v836 = vpop.permute.xlu0 %835
        %837 = vrot.lane.b32.xlu0 %v831, 104
        %v838 = vpop.permute.xlu0 %837
        %839 = vrot.lane.b32.xlu0 %v831, 96
        %v840 = vpop.permute.xlu0 %839
        %vm841 = vcmask 64512
        %v843 = vsel %vm841, %v831, 0
        %v846 = vsel %vm841, %v840, 0
        %848 = vmatprep.subr.bf16.mxu0 0
        %849 = vmatpush1.bf16.xpose.msra.mxu0 %v846
        %850 = vmatprep.subr.bf16.mxu0 0
        %851 = vmatpush1.bf16.xpose.msra.mxu0 0
        %852 = vmatprep.subr.bf16.mxu0 0
        %853 = vmatpush1.bf16.xpose.msra.mxu0 0
        %854 = vmatprep.subr.bf16.mxu0 0
        %855 = vmatpush1.bf16.xpose.msra.mxu0 0
        %856 = vmatprep.subr.bf16.mxu0 0
        %857 = vmatpush1.bf16.xpose.msra.mxu0 0
        %858 = vmatprep.subr.bf16.mxu0 0
        %859 = vmatpush1.bf16.xpose.msra.mxu0 0
        %860 = vmatprep.subr.bf16.mxu0 0
        %861 = vmatpush1.bf16.xpose.msra.mxu0 0
        %862 = vmatprep.subr.bf16.mxu0 0
        %863 = vmatpush1.bf16.xpose.msra.mxu0 0
        %864 = vmatprep.subr.bf16.mxu0 0
        %865 = vmatpush1.bf16.xpose.msra.mxu0 0
        %866 = vmatprep.subr.bf16.mxu0 0
        %867 = vmatpush1.bf16.xpose.msra.mxu0 0
        %868 = vmatprep.subr.bf16.mxu0 0
        %869 = vmatpush1.bf16.xpose.msra.mxu0 0
        %870 = vmatprep.subr.bf16.mxu0 0
        %871 = vmatpush1.bf16.xpose.msra.mxu0 0
        %872 = vmatprep.subr.bf16.mxu0 0
        %873 = vmatpush1.bf16.xpose.msra.mxu0 0
        %874 = vmatprep.subr.bf16.mxu0 0
        %875 = vmatpush1.bf16.xpose.msra.mxu0 0
        %876 = vmatprep.subr.bf16.mxu0 0
        %877 = vmatpush1.bf16.xpose.msra.mxu0 0
        %878 = vmatprep.subr.bf16.mxu0 0
        %879 = vmatpush1.bf16.xpose.msra.mxu0 0
        %880 = vmatprep.mubr.bf16.mxu0 0
        %881 = vmatmul.mubr.bf16.gmra.mrb[0].mxu0 %v843
        %v882 = vpop.f32.mrb[0].mxu0
        %v883 = vadd.f32 0.0, %v882
        %v884 = vpop.f32.mrb[0].mxu0
        %v885 = vpop.f32.mrb[0].mxu0
        %v886 = vadd.f32 0.0, %v885
        %v887 = vpop.f32.mrb[0].mxu0
        %888 = vdwg.mxu0
        %889 = vrot.lane.b32.xlu0 %v834, 96
        %v890 = vpop.permute.xlu0 %889
        %v892 = vsel %vm841, %v834, 0
        %v895 = vsel %vm841, %v890, 0
        %897 = vmatprep.subr.bf16.mxu0 0
        %898 = vmatpush1.bf16.xpose.msra.mxu0 %v895
        %899 = vmatprep.subr.bf16.mxu0 0
        %900 = vmatpush1.bf16.xpose.msra.mxu0 0
        %901 = vmatprep.subr.bf16.mxu0 0
        %902 = vmatpush1.bf16.xpose.msra.mxu0 0
        %903 = vmatprep.subr.bf16.mxu0 0
        %904 = vmatpush1.bf16.xpose.msra.mxu0 0
        %905 = vmatprep.subr.bf16.mxu0 0
        %906 = vmatpush1.bf16.xpose.msra.mxu0 0
        %907 = vmatprep.subr.bf16.mxu0 0
        %908 = vmatpush1.bf16.xpose.msra.mxu0 0
        %909 = vmatprep.subr.bf16.mxu0 0
        %910 = vmatpush1.bf16.xpose.msra.mxu0 0
        %911 = vmatprep.subr.bf16.mxu0 0
        %912 = vmatpush1.bf16.xpose.msra.mxu0 0
        %913 = vmatprep.subr.bf16.mxu0 0
        %914 = vmatpush1.bf16.xpose.msra.mxu0 0
        %915 = vmatprep.subr.bf16.mxu0 0
        %916 = vmatpush1.bf16.xpose.msra.mxu0 0
        %917 = vmatprep.subr.bf16.mxu0 0
        %918 = vmatpush1.bf16.xpose.msra.mxu0 0
        %919 = vmatprep.subr.bf16.mxu0 0
        %920 = vmatpush1.bf16.xpose.msra.mxu0 0
        %921 = vmatprep.subr.bf16.mxu0 0
        %922 = vmatpush1.bf16.xpose.msra.mxu0 0
        %923 = vmatprep.subr.bf16.mxu0 0
        %924 = vmatpush1.bf16.xpose.msra.mxu0 0
        %925 = vmatprep.subr.bf16.mxu0 0
        %926 = vmatpush1.bf16.xpose.msra.mxu0 0
        %927 = vmatprep.subr.bf16.mxu0 0
        %928 = vmatpush1.bf16.xpose.msra.mxu0 0
        %929 = vmatprep.mubr.bf16.mxu0 0
        %930 = vmatmul.mubr.bf16.gmra.mrb[0].mxu0 %v892
        %v931 = vpop.f32.mrb[0].mxu0
        %v932 = vadd.f32 0.0, %v931
        %v933 = vpop.f32.mrb[0].mxu0
        %v934 = vpop.f32.mrb[0].mxu0
        %v935 = vadd.f32 0.0, %v934
        %v936 = vpop.f32.mrb[0].mxu0
        %937 = vdwg.mxu0
        %938 = vrot.lane.b32.xlu0 %v836, 96
        %v939 = vpop.permute.xlu0 %938
        %v941 = vsel %vm841, %v836, 0
        %v944 = vsel %vm841, %v939, 0
        %946 = vmatprep.subr.bf16.mxu0 0
        %947 = vmatpush1.bf16.xpose.msra.mxu0 %v944
        %948 = vmatprep.subr.bf16.mxu0 0
        %949 = vmatpush1.bf16.xpose.msra.mxu0 0
        %950 = vmatprep.subr.bf16.mxu0 0
        %951 = vmatpush1.bf16.xpose.msra.mxu0 0
        %952 = vmatprep.subr.bf16.mxu0 0
        %953 = vmatpush1.bf16.xpose.msra.mxu0 0
        %954 = vmatprep.subr.bf16.mxu0 0
        %955 = vmatpush1.bf16.xpose.msra.mxu0 0
        %956 = vmatprep.subr.bf16.mxu0 0
        %957 = vmatpush1.bf16.xpose.msra.mxu0 0
        %958 = vmatprep.subr.bf16.mxu0 0
        %959 = vmatpush1.bf16.xpose.msra.mxu0 0
        %960 = vmatprep.subr.bf16.mxu0 0
        %961 = vmatpush1.bf16.xpose.msra.mxu0 0
        %962 = vmatprep.subr.bf16.mxu0 0
        %963 = vmatpush1.bf16.xpose.msra.mxu0 0
        %964 = vmatprep.subr.bf16.mxu0 0
        %965 = vmatpush1.bf16.xpose.msra.mxu0 0
        %966 = vmatprep.subr.bf16.mxu0 0
        %967 = vmatpush1.bf16.xpose.msra.mxu0 0
        %968 = vmatprep.subr.bf16.mxu0 0
        %969 = vmatpush1.bf16.xpose.msra.mxu0 0
        %970 = vmatprep.subr.bf16.mxu0 0
        %971 = vmatpush1.bf16.xpose.msra.mxu0 0
        %972 = vmatprep.subr.bf16.mxu0 0
        %973 = vmatpush1.bf16.xpose.msra.mxu0 0
        %974 = vmatprep.subr.bf16.mxu0 0
        %975 = vmatpush1.bf16.xpose.msra.mxu0 0
        %976 = vmatprep.subr.bf16.mxu0 0
        %977 = vmatpush1.bf16.xpose.msra.mxu0 0
        %978 = vmatprep.mubr.bf16.mxu0 0
        %979 = vmatmul.mubr.bf16.gmra.mrb[0].mxu0 %v941
        %v980 = vpop.f32.mrb[0].mxu0
        %v981 = vadd.f32 0.0, %v980
        %v982 = vpop.f32.mrb[0].mxu0
        %v983 = vpop.f32.mrb[0].mxu0
        %v984 = vadd.f32 0.0, %v983
        %v985 = vpop.f32.mrb[0].mxu0
        %986 = vdwg.mxu0
        %987 = vrot.lane.b32.xlu0 %v838, 96
        %v988 = vpop.permute.xlu0 %987
        %v990 = vsel %vm841, %v838, 0
        %v993 = vsel %vm841, %v988, 0
        %995 = vmatprep.subr.bf16.mxu0 0
        %996 = vmatpush1.bf16.xpose.msra.mxu0 %v993
        %997 = vmatprep.subr.bf16.mxu0 0
        %998 = vmatpush1.bf16.xpose.msra.mxu0 0
        %999 = vmatprep.subr.bf16.mxu0 0
        %1000 = vmatpush1.bf16.xpose.msra.mxu0 0
        %1001 = vmatprep.subr.bf16.mxu0 0
        %1002 = vmatpush1.bf16.xpose.msra.mxu0 0
        %1003 = vmatprep.subr.bf16.mxu0 0
        %1004 = vmatpush1.bf16.xpose.msra.mxu0 0
        %1005 = vmatprep.subr.bf16.mxu0 0
        %1006 = vmatpush1.bf16.xpose.msra.mxu0 0
        %1007 = vmatprep.subr.bf16.mxu0 0
        %1008 = vmatpush1.bf16.xpose.msra.mxu0 0
        %1009 = vmatprep.subr.bf16.mxu0 0
        %1010 = vmatpush1.bf16.xpose.msra.mxu0 0
        %1011 = vmatprep.subr.bf16.mxu0 0
        %1012 = vmatpush1.bf16.xpose.msra.mxu0 0
        %1013 = vmatprep.subr.bf16.mxu0 0
        %1014 = vmatpush1.bf16.xpose.msra.mxu0 0
        %1015 = vmatprep.subr.bf16.mxu0 0
        %1016 = vmatpush1.bf16.xpose.msra.mxu0 0
        %1017 = vmatprep.subr.bf16.mxu0 0
        %1018 = vmatpush1.bf16.xpose.msra.mxu0 0
        %1019 = vmatprep.subr.bf16.mxu0 0
        %1020 = vmatpush1.bf16.xpose.msra.mxu0 0
        %1021 = vmatprep.subr.bf16.mxu0 0
        %1022 = vmatpush1.bf16.xpose.msra.mxu0 0
        %1023 = vmatprep.subr.bf16.mxu0 0
        %1024 = vmatpush1.bf16.xpose.msra.mxu0 0
        %1025 = vmatprep.subr.bf16.mxu0 0
        %1026 = vmatpush1.bf16.xpose.msra.mxu0 0
        %1027 = vmatprep.mubr.bf16.mxu0 0
        %1028 = vmatmul.mubr.bf16.gmra.mrb[0].mxu0 %v990
        %v1029 = vpop.f32.mrb[0].mxu0
        %v1030 = vadd.f32 0.0, %v1029
        %v1031 = vpop.f32.mrb[0].mxu0
        %v1032 = vpop.f32.mrb[0].mxu0
        %v1033 = vadd.f32 0.0, %v1032
        %v1034 = vpop.f32.mrb[0].mxu0
        %1035 = vdwg.mxu0
        %v1036 = vmul.f32 %v883, 0.35355338
        %v1037 = vmul.f32 %v886, 0.35355338
        %v1038 = vmul.f32 %v932, 0.35355338
        %v1039 = vmul.f32 %v935, 0.35355338
        %v1040 = vmul.f32 %v981, 0.35355338
        %v1041 = vmul.f32 %v984, 0.35355338
        %v1042 = vmul.f32 %v1030, 0.35355338
        %v1043 = vmul.f32 %v1033, 0.35355338
        %v1045 = vlaneseq
        %v1046 = vshrl.u32 %v1045, 7
        %v1047 = vsub.s32 0, %v1046
        %v1048 = vrot.slane %v766, %v1047
        %v1050 = vadd.f32 %v1036, %v1048
        %v1051 = vadd.f32 %v1037, %v1048
        %v1052 = vadd.f32 %v1038, %v1048
        %v1053 = vadd.f32 %v1039, %v1048
        %v1054 = vadd.f32 %v1040, %v1048
        %v1055 = vadd.f32 %v1041, %v1048
        %v1056 = vadd.f32 %v1042, %v1048
        %v1057 = vadd.f32 %v1043, %v1048
        %vm1058 = vcmask 130048
        %v1059 = vsel %vm1058, %v1050, -inf
        %1060 = vmax.xlane.f32.xlu0 %v1059
        %v1061 = vpop.xlane.xlu0 %1060
        %v1062 = vsel %vm1058, %v1051, -inf
        %1063 = vmax.xlane.f32.xlu0 %v1062
        %v1064 = vpop.xlane.xlu0 %1063
        %v1065 = vsel %vm1058, %v1052, -inf
        %1066 = vmax.xlane.f32.xlu0 %v1065
        %v1067 = vpop.xlane.xlu0 %1066
        %v1068 = vsel %vm1058, %v1053, -inf
        %1069 = vmax.xlane.f32.xlu0 %v1068
        %v1070 = vpop.xlane.xlu0 %1069
        %v1071 = vsel %vm1058, %v1054, -inf
        %1072 = vmax.xlane.f32.xlu0 %v1071
        %v1073 = vpop.xlane.xlu0 %1072
        %v1074 = vsel %vm1058, %v1055, -inf
        %1075 = vmax.xlane.f32.xlu0 %v1074
        %v1076 = vpop.xlane.xlu0 %1075
        %v1077 = vsel %vm1058, %v1056, -inf
        %1078 = vmax.xlane.f32.xlu0 %v1077
        %v1079 = vpop.xlane.xlu0 %1078
        %v1080 = vsel %vm1058, %v1057, -inf
        %1081 = vmax.xlane.f32.xlu0 %v1080
        %v1082 = vpop.xlane.xlu0 %1081
        %v1083 = vsub.f32 %v1050, %v1061
        %v1084 = vsub.f32 %v1051, %v1064
        %v1085 = vsub.f32 %v1052, %v1067
        %v1086 = vsub.f32 %v1053, %v1070
        %v1087 = vsub.f32 %v1054, %v1073
        %v1088 = vsub.f32 %v1055, %v1076
        %v1089 = vsub.f32 %v1056, %v1079
        %v1090 = vsub.f32 %v1057, %v1082
        %v1091 = vmul.f32 %v1083, 1.442695
        %v1092 = vpow.pop %v1091
        %v1093 = vmul.f32 %v1084, 1.442695
        %v1094 = vpow.pop %v1093
        %v1095 = vmul.f32 %v1085, 1.442695
        %v1096 = vpow.pop %v1095
        %v1097 = vmul.f32 %v1086, 1.442695
        %v1098 = vpow.pop %v1097
        %v1099 = vmul.f32 %v1087, 1.442695
        %v1100 = vpow.pop %v1099
        %v1101 = vmul.f32 %v1088, 1.442695
        %v1102 = vpow.pop %v1101
        %v1103 = vmul.f32 %v1089, 1.442695
        %v1104 = vpow.pop %v1103
        %v1105 = vmul.f32 %v1090, 1.442695
        %v1106 = vpow.pop %v1105
        %v1107 = vsel %vm1058, %v1092, 0.0
        %1108 = vadd.xlane.f32.xlu0 %v1107
        %v1109 = vpop.xlane.xlu0 %1108
        %v1110 = vsel %vm1058, %v1094, 0.0
        %1111 = vadd.xlane.f32.xlu0 %v1110
        %v1112 = vpop.xlane.xlu0 %1111
        %v1113 = vsel %vm1058, %v1096, 0.0
        %1114 = vadd.xlane.f32.xlu0 %v1113
        %v1115 = vpop.xlane.xlu0 %1114
        %v1116 = vsel %vm1058, %v1098, 0.0
        %1117 = vadd.xlane.f32.xlu0 %v1116
        %v1118 = vpop.xlane.xlu0 %1117
        %v1119 = vsel %vm1058, %v1100, 0.0
        %1120 = vadd.xlane.f32.xlu0 %v1119
        %v1121 = vpop.xlane.xlu0 %1120
        %v1122 = vsel %vm1058, %v1102, 0.0
        %1123 = vadd.xlane.f32.xlu0 %v1122
        %v1124 = vpop.xlane.xlu0 %1123
        %v1125 = vsel %vm1058, %v1104, 0.0
        %1126 = vadd.xlane.f32.xlu0 %v1125
        %v1127 = vpop.xlane.xlu0 %1126
        %v1128 = vsel %vm1058, %v1106, 0.0
        %1129 = vadd.xlane.f32.xlu0 %v1128
        %v1130 = vpop.xlane.xlu0 %1129
        %v1131 = vrcp.pop %v1109
        %v1132 = vrcp.pop %v1112
        %v1133 = vrcp.pop %v1115
        %v1134 = vrcp.pop %v1118
        %v1135 = vrcp.pop %v1121
        %v1136 = vrcp.pop %v1124
        %v1137 = vrcp.pop %v1127
        %v1138 = vrcp.pop %v1130
        %v1139 = vmul.f32 %v1092, %v1131
        %v1140 = vmul.f32 %v1094, %v1132
        %v1141 = vmul.f32 %v1096, %v1133
        %v1142 = vmul.f32 %v1098, %v1134
        %v1143 = vmul.f32 %v1100, %v1135
        %v1144 = vmul.f32 %v1102, %v1136
        %v1145 = vmul.f32 %v1104, %v1137
        %v1146 = vmul.f32 %v1106, %v1138
        %v1147 = vpack.c.bf16 %v1140, %v1139
        %v1148 = vpack.c.bf16 %v1142, %v1141
        %v1149 = vpack.c.bf16 %v1144, %v1143
        %v1150 = vpack.c.bf16 %v1146, %v1145
        %1151 = vrot.lane.b32.xlu0 %v831, 64
        %v1152 = vpop.permute.xlu0 %1151
        %v1155 = vsel %vm1058, %v1147, 0
        %1157 = vmatprep.subr.bf16.mxu0 0
        %1158 = vmatpush1.bf16.msra.mxu0 %v1152
        %1159 = vmatprep.subr.bf16.mxu0 0
        %1160 = vmatpush1.bf16.msra.mxu0 0
        %1161 = vmatprep.subr.bf16.mxu0 0
        %1162 = vmatpush1.bf16.msra.mxu0 0
        %1163 = vmatprep.subr.bf16.mxu0 0
        %1164 = vmatpush1.bf16.msra.mxu0 0
        %1165 = vmatprep.subr.bf16.mxu0 0
        %1166 = vmatpush1.bf16.msra.mxu0 0
        %1167 = vmatprep.subr.bf16.mxu0 0
        %1168 = vmatpush1.bf16.msra.mxu0 0
        %1169 = vmatprep.subr.bf16.mxu0 0
        %1170 = vmatpush1.bf16.msra.mxu0 0
        %1171 = vmatprep.subr.bf16.mxu0 0
        %1172 = vmatpush1.bf16.msra.mxu0 0
        %1173 = vmatprep.subr.bf16.mxu0 0
        %1174 = vmatpush1.bf16.msra.mxu0 0
        %1175 = vmatprep.subr.bf16.mxu0 0
        %1176 = vmatpush1.bf16.msra.mxu0 0
        %1177 = vmatprep.subr.bf16.mxu0 0
        %1178 = vmatpush1.bf16.msra.mxu0 0
        %1179 = vmatprep.subr.bf16.mxu0 0
        %1180 = vmatpush1.bf16.msra.mxu0 0
        %1181 = vmatprep.subr.bf16.mxu0 0
        %1182 = vmatpush1.bf16.msra.mxu0 0
        %1183 = vmatprep.subr.bf16.mxu0 0
        %1184 = vmatpush1.bf16.msra.mxu0 0
        %1185 = vmatprep.subr.bf16.mxu0 0
        %1186 = vmatpush1.bf16.msra.mxu0 0
        %1187 = vmatprep.subr.bf16.mxu0 0
        %1188 = vmatpush1.bf16.msra.mxu0 0
        %1189 = vmatprep.mubr.bf16.mxu0 0
        %1190 = vmatmul.mubr.bf16.gmra.mrb[0].mxu0 %v1155
        %v1191 = vpop.f32.mrb[0].mxu0
        %v1192 = vadd.f32 0.0, %v1191
        %v1193 = vpop.f32.mrb[0].mxu0
        %v1194 = vpop.f32.mrb[0].mxu0
        %v1195 = vadd.f32 0.0, %v1194
        %v1196 = vpop.f32.mrb[0].mxu0
        %1197 = vdwg.mxu0
        %1198 = vrot.lane.b32.xlu0 %v834, 64
        %v1199 = vpop.permute.xlu0 %1198
        %v1202 = vsel %vm1058, %v1148, 0
        %1204 = vmatprep.subr.bf16.mxu0 0
        %1205 = vmatpush1.bf16.msra.mxu0 %v1199
        %1206 = vmatprep.subr.bf16.mxu0 0
        %1207 = vmatpush1.bf16.msra.mxu0 0
        %1208 = vmatprep.subr.bf16.mxu0 0
        %1209 = vmatpush1.bf16.msra.mxu0 0
        %1210 = vmatprep.subr.bf16.mxu0 0
        %1211 = vmatpush1.bf16.msra.mxu0 0
        %1212 = vmatprep.subr.bf16.mxu0 0
        %1213 = vmatpush1.bf16.msra.mxu0 0
        %1214 = vmatprep.subr.bf16.mxu0 0
        %1215 = vmatpush1.bf16.msra.mxu0 0
        %1216 = vmatprep.subr.bf16.mxu0 0
        %1217 = vmatpush1.bf16.msra.mxu0 0
        %1218 = vmatprep.subr.bf16.mxu0 0
        %1219 = vmatpush1.bf16.msra.mxu0 0
        %1220 = vmatprep.subr.bf16.mxu0 0
        %1221 = vmatpush1.bf16.msra.mxu0 0
        %1222 = vmatprep.subr.bf16.mxu0 0
        %1223 = vmatpush1.bf16.msra.mxu0 0
        %1224 = vmatprep.subr.bf16.mxu0 0
        %1225 = vmatpush1.bf16.msra.mxu0 0
        %1226 = vmatprep.subr.bf16.mxu0 0
        %1227 = vmatpush1.bf16.msra.mxu0 0
        %1228 = vmatprep.subr.bf16.mxu0 0
        %1229 = vmatpush1.bf16.msra.mxu0 0
        %1230 = vmatprep.subr.bf16.mxu0 0
        %1231 = vmatpush1.bf16.msra.mxu0 0
        %1232 = vmatprep.subr.bf16.mxu0 0
        %1233 = vmatpush1.bf16.msra.mxu0 0
        %1234 = vmatprep.subr.bf16.mxu0 0
        %1235 = vmatpush1.bf16.msra.mxu0 0
        %1236 = vmatprep.mubr.bf16.mxu0 0
        %1237 = vmatmul.mubr.bf16.gmra.mrb[0].mxu0 %v1202
        %v1238 = vpop.f32.mrb[0].mxu0
        %v1239 = vadd.f32 0.0, %v1238
        %v1240 = vpop.f32.mrb[0].mxu0
        %v1241 = vpop.f32.mrb[0].mxu0
        %v1242 = vadd.f32 0.0, %v1241
        %v1243 = vpop.f32.mrb[0].mxu0
        %1244 = vdwg.mxu0
        %1245 = vrot.lane.b32.xlu0 %v836, 64
        %v1246 = vpop.permute.xlu0 %1245
        %v1249 = vsel %vm1058, %v1149, 0
        %1251 = vmatprep.subr.bf16.mxu0 0
        %1252 = vmatpush1.bf16.msra.mxu0 %v1246
        %1253 = vmatprep.subr.bf16.mxu0 0
        %1254 = vmatpush1.bf16.msra.mxu0 0
        %1255 = vmatprep.subr.bf16.mxu0 0
        %1256 = vmatpush1.bf16.msra.mxu0 0
        %1257 = vmatprep.subr.bf16.mxu0 0
        %1258 = vmatpush1.bf16.msra.mxu0 0
        %1259 = vmatprep.subr.bf16.mxu0 0
        %1260 = vmatpush1.bf16.msra.mxu0 0
        %1261 = vmatprep.subr.bf16.mxu0 0
        %1262 = vmatpush1.bf16.msra.mxu0 0
        %1263 = vmatprep.subr.bf16.mxu0 0
        %1264 = vmatpush1.bf16.msra.mxu0 0
        %1265 = vmatprep.subr.bf16.mxu0 0
        %1266 = vmatpush1.bf16.msra.mxu0 0
        %1267 = vmatprep.subr.bf16.mxu0 0
        %1268 = vmatpush1.bf16.msra.mxu0 0
        %1269 = vmatprep.subr.bf16.mxu0 0
        %1270 = vmatpush1.bf16.msra.mxu0 0
        %1271 = vmatprep.subr.bf16.mxu0 0
        %1272 = vmatpush1.bf16.msra.mxu0 0
        %1273 = vmatprep.subr.bf16.mxu0 0
        %1274 = vmatpush1.bf16.msra.mxu0 0
        %1275 = vmatprep.subr.bf16.mxu0 0
        %1276 = vmatpush1.bf16.msra.mxu0 0
        %1277 = vmatprep.subr.bf16.mxu0 0
        %1278 = vmatpush1.bf16.msra.mxu0 0
        %1279 = vmatprep.subr.bf16.mxu0 0
        %1280 = vmatpush1.bf16.msra.mxu0 0
        %1281 = vmatprep.subr.bf16.mxu0 0
        %1282 = vmatpush1.bf16.msra.mxu0 0
        %1283 = vmatprep.mubr.bf16.mxu0 0
        %1284 = vmatmul.mubr.bf16.gmra.mrb[0].mxu0 %v1249
        %v1285 = vpop.f32.mrb[0].mxu0
        %v1286 = vadd.f32 0.0, %v1285
        %v1287 = vpop.f32.mrb[0].mxu0
        %v1288 = vpop.f32.mrb[0].mxu0
        %v1289 = vadd.f32 0.0, %v1288
        %v1290 = vpop.f32.mrb[0].mxu0
        %1291 = vdwg.mxu0
        %1292 = vrot.lane.b32.xlu0 %v838, 64
        %v1293 = vpop.permute.xlu0 %1292
        %v1296 = vsel %vm1058, %v1150, 0
        %1298 = vmatprep.subr.bf16.mxu0 0
        %1299 = vmatpush1.bf16.msra.mxu0 %v1293
        %1300 = vmatprep.subr.bf16.mxu0 0
        %1301 = vmatpush1.bf16.msra.mxu0 0
        %1302 = vmatprep.subr.bf16.mxu0 0
        %1303 = vmatpush1.bf16.msra.mxu0 0
        %1304 = vmatprep.subr.bf16.mxu0 0
        %1305 = vmatpush1.bf16.msra.mxu0 0
        %1306 = vmatprep.subr.bf16.mxu0 0
        %1307 = vmatpush1.bf16.msra.mxu0 0
        %1308 = vmatprep.subr.bf16.mxu0 0
        %1309 = vmatpush1.bf16.msra.mxu0 0
        %1310 = vmatprep.subr.bf16.mxu0 0
        %1311 = vmatpush1.bf16.msra.mxu0 0
        %1312 = vmatprep.subr.bf16.mxu0 0
        %1313 = vmatpush1.bf16.msra.mxu0 0
        %1314 = vmatprep.subr.bf16.mxu0 0
        %1315 = vmatpush1.bf16.msra.mxu0 0
        %1316 = vmatprep.subr.bf16.mxu0 0
        %1317 = vmatpush1.bf16.msra.mxu0 0
        %1318 = vmatprep.subr.bf16.mxu0 0
        %1319 = vmatpush1.bf16.msra.mxu0 0
        %1320 = vmatprep.subr.bf16.mxu0 0
        %1321 = vmatpush1.bf16.msra.mxu0 0
        %1322 = vmatprep.subr.bf16.mxu0 0
        %1323 = vmatpush1.bf16.msra.mxu0 0
        %1324 = vmatprep.subr.bf16.mxu0 0
        %1325 = vmatpush1.bf16.msra.mxu0 0
        %1326 = vmatprep.subr.bf16.mxu0 0
        %1327 = vmatpush1.bf16.msra.mxu0 0
        %1328 = vmatprep.subr.bf16.mxu0 0
        %1329 = vmatpush1.bf16.msra.mxu0 0
        %1330 = vmatprep.mubr.bf16.mxu0 0
        %1331 = vmatmul.mubr.bf16.gmra.mrb[0].mxu0 %v1296
        %v1332 = vpop.f32.mrb[0].mxu0
        %v1333 = vadd.f32 0.0, %v1332
        %v1334 = vpop.f32.mrb[0].mxu0
        %v1335 = vpop.f32.mrb[0].mxu0
        %v1336 = vadd.f32 0.0, %v1335
        %v1337 = vpop.f32.mrb[0].mxu0
        %1338 = vdwg.mxu0
        %1341 = vrot.lane.b32.xlu0 %v1239, 8
        %v1342 = vpop.permute.xlu0 %1341
        %1343 = vrot.lane.b32.xlu0 %v1242, 8
        %v1344 = vpop.permute.xlu0 %1343
        %1349 = vrot.lane.b32.xlu0 %v1286, 16
        %v1350 = vpop.permute.xlu0 %1349
        %1351 = vrot.lane.b32.xlu0 %v1289, 16
        %v1352 = vpop.permute.xlu0 %1351
        %1357 = vrot.lane.b32.xlu0 %v1333, 24
        %v1358 = vpop.permute.xlu0 %1357
        %1359 = vrot.lane.b32.xlu0 %v1336, 24
        %v1360 = vpop.permute.xlu0 %1359
        %v1363 = vsel %vm841, %v1192, %v1342
        %v1364 = vsel %vm841, %v1195, %v1344
        %v1365 = vsel %vm1058, %v1363, %v1350
        %v1366 = vsel %vm1058, %v1364, %v1352
        %vm1367 = vcmask 195584
        %v1368 = vsel %vm1367, %v1365, %v1358
        %v1369 = vsel %vm1367, %v1366, %v1360
        %v1370 = vpack.c.bf16 %v1369, %v1368
        %v1372 = vlaneseq
        %v1373 = vshrl.u32 %v1372, 7
        %v1374 = vsub.s32 0, %v1373
        %v1375 = vrot.slane %v743, %v1374
        %v1381 = vunpack.c.l.b16 %v739
        %v1382 = vunpack.c.l.b16 %v740
        %v1383 = vunpack.c.l.b16 %v741
        %v1384 = vunpack.c.l.b16 %v742
        %v1385 = vpack.c.b16 %v1382, %v1381
        %v1386 = vpack.c.b16 %v1384, %v1383
        %v1390 = vsel %vm786, %v1370, 0
        %1392 = vmatprep.subr.bf16.mxu0 0
        %1393 = vmatpush1.bf16.msra.mxu0 %v1385
        %1394 = vmatprep.subr.bf16.mxu0 0
        %1395 = vmatpush1.bf16.msra.mxu0 %v1386
        %1396 = vmatprep.subr.bf16.mxu0 0
        %1397 = vmatpush1.bf16.msra.mxu0 0
        %1398 = vmatprep.subr.bf16.mxu0 0
        %1399 = vmatpush1.bf16.msra.mxu0 0
        %1400 = vmatprep.subr.bf16.mxu0 0
        %1401 = vmatpush1.bf16.msra.mxu0 0
        %1402 = vmatprep.subr.bf16.mxu0 0
        %1403 = vmatpush1.bf16.msra.mxu0 0
        %1404 = vmatprep.subr.bf16.mxu0 0
        %1405 = vmatpush1.bf16.msra.mxu0 0
        %1406 = vmatprep.subr.bf16.mxu0 0
        %1407 = vmatpush1.bf16.msra.mxu0 0
        %1408 = vmatprep.subr.bf16.mxu0 0
        %1409 = vmatpush1.bf16.msra.mxu0 0
        %1410 = vmatprep.subr.bf16.mxu0 0
        %1411 = vmatpush1.bf16.msra.mxu0 0
        %1412 = vmatprep.subr.bf16.mxu0 0
        %1413 = vmatpush1.bf16.msra.mxu0 0
        %1414 = vmatprep.subr.bf16.mxu0 0
        %1415 = vmatpush1.bf16.msra.mxu0 0
        %1416 = vmatprep.subr.bf16.mxu0 0
        %1417 = vmatpush1.bf16.msra.mxu0 0
        %1418 = vmatprep.subr.bf16.mxu0 0
        %1419 = vmatpush1.bf16.msra.mxu0 0
        %1420 = vmatprep.subr.bf16.mxu0 0
        %1421 = vmatpush1.bf16.msra.mxu0 0
        %1422 = vmatprep.subr.bf16.mxu0 0
        %1423 = vmatpush1.bf16.msra.mxu0 0
        %1424 = vmatprep.mubr.bf16.mxu0 0
        %1425 = vmatmul.mubr.bf16.gmra.mrb[0].mxu0 %v1390
        %v1426 = vpop.f32.mrb[0].mxu0
        %v1427 = vadd.f32 %v1375, %v1426
        %v1428 = vpop.f32.mrb[0].mxu0
        %v1429 = vpop.f32.mrb[0].mxu0
        %v1430 = vadd.f32 %v1375, %v1429
        %v1431 = vpop.f32.mrb[0].mxu0
        %1432 = vdwg.mxu0
        %v1433 = vadd.f32 %v762, %v1427
        %v1434 = vadd.f32 %v763, %v1430
        %v1435 = vsel %vm786, %v1433, 0.0
        %1436 = vadd.xlane.f32.xlu0 %v1435
        %v1437 = vpop.xlane.xlu0 %1436
        %v1438 = vsel %vm786, %v1434, 0.0
        %1439 = vadd.xlane.f32.xlu0 %v1438
        %v1440 = vpop.xlane.xlu0 %1439
        %v1441 = vrcp.pop 32.0
        %v1442 = vmul.f32 %v1437, %v1441
        %v1443 = vmul.f32 %v1440, %v1441
        %v1444 = vsub.f32 %v1433, %v1442
        %v1445 = vsub.f32 %v1434, %v1443
        %v1446 = vmul.f32 %v1444, %v1444
        %v1447 = vmul.f32 %v1445, %v1445
        %v1448 = vsel %vm786, %v1446, 0.0
        %1449 = vadd.xlane.f32.xlu0 %v1448
        %v1450 = vpop.xlane.xlu0 %1449
        %v1451 = vsel %vm786, %v1447, 0.0
        %1452 = vadd.xlane.f32.xlu0 %v1451
        %v1453 = vpop.xlane.xlu0 %1452
        %v1454 = vmul.f32 %v1450, %v1441
        %v1455 = vmul.f32 %v1453, %v1441
        %v1456 = vadd.f32 %v1454, 1e-12
        %v1457 = vadd.f32 %v1455, 1e-12
        %v1458 = vrsqrt.pop %v1456
        %v1459 = vrsqrt.pop %v1457
        %v1460 = vmul.f32 %v1444, %v1458
        %v1461 = vmul.f32 %v1445, %v1459
        %v1463 = vlaneseq
        %v1464 = vshrl.u32 %v1463, 7
        %v1465 = vsub.s32 0, %v1464
        %v1466 = vrot.slane %v744, %v1465
        %v1468 = vmul.f32 %v1460, %v1466
        %v1469 = vmul.f32 %v1461, %v1466
        %v1471 = vlaneseq
        %v1472 = vshrl.u32 %v1471, 7
        %v1473 = vsub.s32 0, %v1472
        %v1474 = vrot.slane %v745, %v1473
        %v1476 = vadd.f32 %v1468, %v1474
        %v1477 = vadd.f32 %v1469, %v1474
        %v1478 = vpack.c.bf16 %v1477, %v1476
        %v1480 = vlaneseq
        %v1481 = vshrl.u32 %v1480, 7
        %v1482 = vsub.s32 0, %v1481
        %v1483 = vrot.slane %v750, %v1482
        %v1489 = vunpack.c.l.b16 %v746
        %v1490 = vunpack.c.l.b16 %v747
        %v1491 = vunpack.c.l.b16 %v748
        %v1492 = vunpack.c.l.b16 %v749
        %v1493 = vpack.c.b16 %v1490, %v1489
        %v1494 = vpack.c.b16 %v1492, %v1491
        %v1498 = vsel %vm786, %v1478, 0
        %1500 = vmatprep.subr.bf16.mxu0 0
        %1501 = vmatpush1.bf16.msra.mxu0 %v1493
        %1502 = vmatprep.subr.bf16.mxu0 0
        %1503 = vmatpush1.bf16.msra.mxu0 %v1494
        %1504 = vmatprep.subr.bf16.mxu0 0
        %1505 = vmatpush1.bf16.msra.mxu0 0
        %1506 = vmatprep.subr.bf16.mxu0 0
        %1507 = vmatpush1.bf16.msra.mxu0 0
        %1508 = vmatprep.subr.bf16.mxu0 0
        %1509 = vmatpush1.bf16.msra.mxu0 0
        %1510 = vmatprep.subr.bf16.mxu0 0
        %1511 = vmatpush1.bf16.msra.mxu0 0
        %1512 = vmatprep.subr.bf16.mxu0 0
        %1513 = vmatpush1.bf16.msra.mxu0 0
        %1514 = vmatprep.subr.bf16.mxu0 0
        %1515 = vmatpush1.bf16.msra.mxu0 0
        %1516 = vmatprep.subr.bf16.mxu0 0
        %1517 = vmatpush1.bf16.msra.mxu0 0
        %1518 = vmatprep.subr.bf16.mxu0 0
        %1519 = vmatpush1.bf16.msra.mxu0 0
        %1520 = vmatprep.subr.bf16.mxu0 0
        %1521 = vmatpush1.bf16.msra.mxu0 0
        %1522 = vmatprep.subr.bf16.mxu0 0
        %1523 = vmatpush1.bf16.msra.mxu0 0
        %1524 = vmatprep.subr.bf16.mxu0 0
        %1525 = vmatpush1.bf16.msra.mxu0 0
        %1526 = vmatprep.subr.bf16.mxu0 0
        %1527 = vmatpush1.bf16.msra.mxu0 0
        %1528 = vmatprep.subr.bf16.mxu0 0
        %1529 = vmatpush1.bf16.msra.mxu0 0
        %1530 = vmatprep.subr.bf16.mxu0 0
        %1531 = vmatpush1.bf16.msra.mxu0 0
        %1532 = vmatprep.mubr.bf16.mxu0 0
        %1533 = vmatmul.mubr.bf16.gmra.mrb[0].mxu0 %v1498
        %v1534 = vpop.f32.mrb[0].mxu0
        %v1535 = vadd.f32 %v1483, %v1534
        %v1536 = vpop.f32.mrb[0].mxu0
        %v1537 = vpop.f32.mrb[0].mxu0
        %v1538 = vadd.f32 %v1483, %v1537
        %v1539 = vpop.f32.mrb[0].mxu0
        %1540 = vdwg.mxu0
        %v1541 = vmul.f32 %v1535, 0.5
        %v1542 = vmul.f32 %v1538, 0.5
        %v1543 = vmul.f32 %v1535, 0.044715
        %v1544 = vmul.f32 %v1538, 0.044715
        %v1545 = vmul.f32 %v1543, %v1535
        %v1546 = vmul.f32 %v1544, %v1538
        %v1547 = vmul.f32 %v1545, %v1535
        %v1548 = vmul.f32 %v1546, %v1538
        %v1549 = vadd.f32 %v1535, %v1547
        %v1550 = vadd.f32 %v1538, %v1548
        %v1551 = vmul.f32 %v1549, 0.7978846
        %v1552 = vmul.f32 %v1550, 0.7978846
        %v1553 = vtanh.pop %v1551
        %v1554 = vtanh.pop %v1552
        %v1555 = vadd.f32 %v1553, 1.0
        %v1556 = vadd.f32 %v1554, 1.0
        %v1557 = vmul.f32 %v1541, %v1555
        %v1558 = vmul.f32 %v1542, %v1556
        %v1559 = vpack.c.bf16 %v1558, %v1557
        %v1561 = vlaneseq
        %v1562 = vshrl.u32 %v1561, 7
        %v1563 = vsub.s32 0, %v1562
        %v1564 = vrot.slane %v759, %v1563
        %v1574 = vunpack.c.l.b16 %v751
        %v1575 = vunpack.c.l.b16 %v752
        %v1576 = vunpack.c.l.b16 %v753
        %v1577 = vunpack.c.l.b16 %v754
        %v1578 = vunpack.c.l.b16 %v755
        %v1579 = vunpack.c.l.b16 %v756
        %v1580 = vunpack.c.l.b16 %v757
        %v1581 = vunpack.c.l.b16 %v758
        %v1582 = vpack.c.b16 %v1575, %v1574
        %v1583 = vpack.c.b16 %v1577, %v1576
        %v1584 = vpack.c.b16 %v1579, %v1578
        %v1585 = vpack.c.b16 %v1581, %v1580
        %vm1590 = vcmask 523264
        %v1592 = vsel %vm1590, %v1559, 0
        %1594 = vmatprep.subr.bf16.mxu0 0
        %1595 = vmatpush1.bf16.msra.mxu0 %v1582
        %1596 = vmatprep.subr.bf16.mxu0 0
        %1597 = vmatpush1.bf16.msra.mxu0 %v1583
        %1598 = vmatprep.subr.bf16.mxu0 0
        %1599 = vmatpush1.bf16.msra.mxu0 %v1584
        %1600 = vmatprep.subr.bf16.mxu0 0
        %1601 = vmatpush1.bf16.msra.mxu0 %v1585
        %1602 = vmatprep.subr.bf16.mxu0 0
        %1603 = vmatpush1.bf16.msra.mxu0 0
        %1604 = vmatprep.subr.bf16.mxu0 0
        %1605 = vmatpush1.bf16.msra.mxu0 0
        %1606 = vmatprep.subr.bf16.mxu0 0
        %1607 = vmatpush1.bf16.msra.mxu0 0
        %1608 = vmatprep.subr.bf16.mxu0 0
        %1609 = vmatpush1.bf16.msra.mxu0 0
        %1610 = vmatprep.subr.bf16.mxu0 0
        %1611 = vmatpush1.bf16.msra.mxu0 0
        %1612 = vmatprep.subr.bf16.mxu0 0
        %1613 = vmatpush1.bf16.msra.mxu0 0
        %1614 = vmatprep.subr.bf16.mxu0 0
        %1615 = vmatpush1.bf16.msra.mxu0 0
        %1616 = vmatprep.subr.bf16.mxu0 0
        %1617 = vmatpush1.bf16.msra.mxu0 0
        %1618 = vmatprep.subr.bf16.mxu0 0
        %1619 = vmatpush1.bf16.msra.mxu0 0
        %1620 = vmatprep.subr.bf16.mxu0 0
        %1621 = vmatpush1.bf16.msra.mxu0 0
        %1622 = vmatprep.subr.bf16.mxu0 0
        %1623 = vmatpush1.bf16.msra.mxu0 0
        %1624 = vmatprep.subr.bf16.mxu0 0
        %1625 = vmatpush1.bf16.msra.mxu0 0
        %1626 = vmatprep.mubr.bf16.mxu0 0
        %1627 = vmatmul.mubr.bf16.gmra.mrb[0].mxu0 %v1592
        %v1628 = vpop.f32.mrb[0].mxu0
        %v1629 = vadd.f32 %v1564, %v1628
        %v1630 = vpop.f32.mrb[0].mxu0
        %v1631 = vpop.f32.mrb[0].mxu0
        %v1632 = vadd.f32 %v1564, %v1631
        %v1633 = vpop.f32.mrb[0].mxu0
        %1634 = vdwg.mxu0
        %v1635 = vadd.f32 %v1476, %v1629
        %v1636 = vadd.f32 %v1477, %v1632
        %v1637 = vsel %vm786, %v1635, 0.0
        %1638 = vadd.xlane.f32.xlu0 %v1637
        %v1639 = vpop.xlane.xlu0 %1638
        %v1640 = vsel %vm786, %v1636, 0.0
        %1641 = vadd.xlane.f32.xlu0 %v1640
        %v1642 = vpop.xlane.xlu0 %1641
        %v1643 = vmul.f32 %v1639, %v1441
        %v1644 = vmul.f32 %v1642, %v1441
        %v1645 = vsub.f32 %v1635, %v1643
        %v1646 = vsub.f32 %v1636, %v1644
        %v1647 = vmul.f32 %v1645, %v1645
        %v1648 = vmul.f32 %v1646, %v1646
        %v1649 = vsel %vm786, %v1647, 0.0
        %1650 = vadd.xlane.f32.xlu0 %v1649
        %v1651 = vpop.xlane.xlu0 %1650
        %v1652 = vsel %vm786, %v1648, 0.0
        %1653 = vadd.xlane.f32.xlu0 %v1652
        %v1654 = vpop.xlane.xlu0 %1653
        %v1655 = vmul.f32 %v1651, %v1441
        %v1656 = vmul.f32 %v1654, %v1441
        %v1657 = vadd.f32 %v1655, 1e-12
        %v1658 = vadd.f32 %v1656, 1e-12
        %v1659 = vrsqrt.pop %v1657
        %v1660 = vrsqrt.pop %v1658
        %v1661 = vmul.f32 %v1645, %v1659
        %v1662 = vmul.f32 %v1646, %v1660
        %v1664 = vlaneseq
        %v1665 = vshrl.u32 %v1664, 7
        %v1666 = vsub.s32 0, %v1665
        %v1667 = vrot.slane %v760, %v1666
        %v1669 = vmul.f32 %v1661, %v1667
        %v1670 = vmul.f32 %v1662, %v1667
        %v1672 = vlaneseq
        %v1673 = vshrl.u32 %v1672, 7
        %v1674 = vsub.s32 0, %v1673
        %v1675 = vrot.slane %v761, %v1674
        %v1677 = vadd.f32 %v1669, %v1675
        %v1678 = vadd.f32 %v1670, %v1675
        %1679 = vst.msk [vmem:[#allocation2] sm:$0xff] %vm786, %v1677
        %1680 = vst.msk [vmem:[#allocation2 + $0x8] sm:$0xff] %vm786, %v1678
        %s1681 = scalar_lea.vmem [#allocation2], 16
        %v1682 = vld [vmem:[%s1681] sm:$0xff]
        %v1683 = vld [vmem:[%s1681 + $0x8] sm:$0xff]
        %s1684 = scalar_lea.vmem %s1, 1
        %v1685 = vld [vmem:[%s1684] sm:$0x1]
        %v1686 = vsub.f32 1.0, %v1685
        %v1687 = vmul.f32 %v1686, -10000.0
        %v1688 = vpack.c.bf16 %v1683, %v1682
        %v1690 = vsel %vm786, %v1688, 0
        %1692 = vmatprep.subr.bf16.mxu0 0
        %1693 = vmatpush1.bf16.msra.mxu0 %v782
        %1694 = vmatprep.subr.bf16.mxu0 0
        %1695 = vmatpush1.bf16.msra.mxu0 %v783
        %1696 = vmatprep.subr.bf16.mxu0 0
        %1697 = vmatpush1.bf16.msra.mxu0 0
        %1698 = vmatprep.subr.bf16.mxu0 0
        %1699 = vmatpush1.bf16.msra.mxu0 0
        %1700 = vmatprep.subr.bf16.mxu0 0
        %1701 = vmatpush1.bf16.msra.mxu0 0
        %1702 = vmatprep.subr.bf16.mxu0 0
        %1703 = vmatpush1.bf16.msra.mxu0 0
        %1704 = vmatprep.subr.bf16.mxu0 0
        %1705 = vmatpush1.bf16.msra.mxu0 0
        %1706 = vmatprep.subr.bf16.mxu0 0
        %1707 = vmatpush1.bf16.msra.mxu0 0
        %1708 = vmatprep.subr.bf16.mxu0 0
        %1709 = vmatpush1.bf16.msra.mxu0 0
        %1710 = vmatprep.subr.bf16.mxu0 0
        %1711 = vmatpush1.bf16.msra.mxu0 0
        %1712 = vmatprep.subr.bf16.mxu0 0
        %1713 = vmatpush1.bf16.msra.mxu0 0
        %1714 = vmatprep.subr.bf16.mxu0 0
        %1715 = vmatpush1.bf16.msra.mxu0 0
        %1716 = vmatprep.subr.bf16.mxu0 0
        %1717 = vmatpush1.bf16.msra.mxu0 0
        %1718 = vmatprep.subr.bf16.mxu0 0
        %1719 = vmatpush1.bf16.msra.mxu0 0
        %1720 = vmatprep.subr.bf16.mxu0 0
        %1721 = vmatpush1.bf16.msra.mxu0 0
        %1722 = vmatprep.subr.bf16.mxu0 0
        %1723 = vmatpush1.bf16.msra.mxu0 0
        %1724 = vmatprep.mubr.bf16.mxu0 0
        %1725 = vmatmul.mubr.bf16.gmra.mrb[0].mxu0 %v1690
        %v1726 = vpop.f32.mrb[0].mxu0
        %v1727 = vadd.f32 %v772, %v1726
        %v1728 = vpop.f32.mrb[0].mxu0
        %v1729 = vpop.f32.mrb[0].mxu0
        %v1730 = vadd.f32 %v772, %v1729
        %v1731 = vpop.f32.mrb[0].mxu0
        %1732 = vdwg.mxu0
        %v1733 = vpack.c.bf16 %v1730, %v1727
        %1735 = vrot.lane.b32.xlu0 %v1733, 120
        %v1736 = vpop.permute.xlu0 %1735
        %1737 = vrot.lane.b32.xlu0 %v1733, 112
        %v1738 = vpop.permute.xlu0 %1737
        %1739 = vrot.lane.b32.xlu0 %v1733, 104
        %v1740 = vpop.permute.xlu0 %1739
        %1741 = vrot.lane.b32.xlu0 %v1733, 96
        %v1742 = vpop.permute.xlu0 %1741
        %v1744 = vsel %vm841, %v1733, 0
        %v1747 = vsel %vm841, %v1742, 0
        %1749 = vmatprep.subr.bf16.mxu0 0
        %1750 = vmatpush1.bf16.xpose.msra.mxu0 %v1747
        %1751 = vmatprep.subr.bf16.mxu0 0
        %1752 = vmatpush1.bf16.xpose.msra.mxu0 0
        %1753 = vmatprep.subr.bf16.mxu0 0
        %1754 = vmatpush1.bf16.xpose.msra.mxu0 0
        %1755 = vmatprep.subr.bf16.mxu0 0
        %1756 = vmatpush1.bf16.xpose.msra.mxu0 0
        %1757 = vmatprep.subr.bf16.mxu0 0
        %1758 = vmatpush1.bf16.xpose.msra.mxu0 0
        %1759 = vmatprep.subr.bf16.mxu0 0
        %1760 = vmatpush1.bf16.xpose.msra.mxu0 0
        %1761 = vmatprep.subr.bf16.mxu0 0
        %1762 = vmatpush1.bf16.xpose.msra.mxu0 0
        %1763 = vmatprep.subr.bf16.mxu0 0
        %1764 = vmatpush1.bf16.xpose.msra.mxu0 0
        %1765 = vmatprep.subr.bf16.mxu0 0
        %1766 = vmatpush1.bf16.xpose.msra.mxu0 0
        %1767 = vmatprep.subr.bf16.mxu0 0
        %1768 = vmatpush1.bf16.xpose.msra.mxu0 0
        %1769 = vmatprep.subr.bf16.mxu0 0
        %1770 = vmatpush1.bf16.xpose.msra.mxu0 0
        %1771 = vmatprep.subr.bf16.mxu0 0
        %1772 = vmatpush1.bf16.xpose.msra.mxu0 0
        %1773 = vmatprep.subr.bf16.mxu0 0
        %1774 = vmatpush1.bf16.xpose.msra.mxu0 0
        %1775 = vmatprep.subr.bf16.mxu0 0
        %1776 = vmatpush1.bf16.xpose.msra.mxu0 0
        %1777 = vmatprep.subr.bf16.mxu0 0
        %1778 = vmatpush1.bf16.xpose.msra.mxu0 0
        %1779 = vmatprep.subr.bf16.mxu0 0
        %1780 = vmatpush1.bf16.xpose.msra.mxu0 0
        %1781 = vmatprep.mubr.bf16.mxu0 0
        %1782 = vmatmul.mubr.bf16.gmra.mrb[0].mxu0 %v1744
        %v1783 = vpop.f32.mrb[0].mxu0
        %v1784 = vadd.f32 0.0, %v1783
        %v1785 = vpop.f32.mrb[0].mxu0
        %v1786 = vpop.f32.mrb[0].mxu0
        %v1787 = vadd.f32 0.0, %v1786
        %v1788 = vpop.f32.mrb[0].mxu0
        %1789 = vdwg.mxu0
        %1790 = vrot.lane.b32.xlu0 %v1736, 96
        %v1791 = vpop.permute.xlu0 %1790
        %v1793 = vsel %vm841, %v1736, 0
        %v1796 = vsel %vm841, %v1791, 0
        %1798 = vmatprep.subr.bf16.mxu0 0
        %1799 = vmatpush1.bf16.xpose.msra.mxu0 %v1796
        %1800 = vmatprep.subr.bf16.mxu0 0
        %1801 = vmatpush1.bf16.xpose.msra.mxu0 0
        %1802 = vmatprep.subr.bf16.mxu0 0
        %1803 = vmatpush1.bf16.xpose.msra.mxu0 0
        %1804 = vmatprep.subr.bf16.mxu0 0
        %1805 = vmatpush1.bf16.xpose.msra.mxu0 0
        %1806 = vmatprep.subr.bf16.mxu0 0
        %1807 = vmatpush1.bf16.xpose.msra.mxu0 0
        %1808 = vmatprep.subr.bf16.mxu0 0
        %1809 = vmatpush1.bf16.xpose.msra.mxu0 0
        %1810 = vmatprep.subr.bf16.mxu0 0
        %1811 = vmatpush1.bf16.xpose.msra.mxu0 0
        %1812 = vmatprep.subr.bf16.mxu0 0
        %1813 = vmatpush1.bf16.xpose.msra.mxu0 0
        %1814 = vmatprep.subr.bf16.mxu0 0
        %1815 = vmatpush1.bf16.xpose.msra.mxu0 0
        %1816 = vmatprep.subr.bf16.mxu0 0
        %1817 = vmatpush1.bf16.xpose.msra.mxu0 0
        %1818 = vmatprep.subr.bf16.mxu0 0
        %1819 = vmatpush1.bf16.xpose.msra.mxu0 0
        %1820 = vmatprep.subr.bf16.mxu0 0
        %1821 = vmatpush1.bf16.xpose.msra.mxu0 0
        %1822 = vmatprep.subr.bf16.mxu0 0
        %1823 = vmatpush1.bf16.xpose.msra.mxu0 0
        %1824 = vmatprep.subr.bf16.mxu0 0
        %1825 = vmatpush1.bf16.xpose.msra.mxu0 0
        %1826 = vmatprep.subr.bf16.mxu0 0
        %1827 = vmatpush1.bf16.xpose.msra.mxu0 0
        %1828 = vmatprep.subr.bf16.mxu0 0
        %1829 = vmatpush1.bf16.xpose.msra.mxu0 0
        %1830 = vmatprep.mubr.bf16.mxu0 0
        %1831 = vmatmul.mubr.bf16.gmra.mrb[0].mxu0 %v1793
        %v1832 = vpop.f32.mrb[0].mxu0
        %v1833 = vadd.f32 0.0, %v1832
        %v1834 = vpop.f32.mrb[0].mxu0
        %v1835 = vpop.f32.mrb[0].mxu0
        %v1836 = vadd.f32 0.0, %v1835
        %v1837 = vpop.f32.mrb[0].mxu0
        %1838 = vdwg.mxu0
        %1839 = vrot.lane.b32.xlu0 %v1738, 96
        %v1840 = vpop.permute.xlu0 %1839
        %v1842 = vsel %vm841, %v1738, 0
        %v1845 = vsel %vm841, %v1840, 0
        %1847 = vmatprep.subr.bf16.mxu0 0
        %1848 = vmatpush1.bf16.xpose.msra.mxu0 %v1845
        %1849 = vmatprep.subr.bf16.mxu0 0
        %1850 = vmatpush1.bf16.xpose.msra.mxu0 0
        %1851 = vmatprep.subr.bf16.mxu0 0
        %1852 = vmatpush1.bf16.xpose.msra.mxu0 0
        %1853 = vmatprep.subr.bf16.mxu0 0
        %1854 = vmatpush1.bf16.xpose.msra.mxu0 0
        %1855 = vmatprep.subr.bf16.mxu0 0
        %1856 = vmatpush1.bf16.xpose.msra.mxu0 0
        %1857 = vmatprep.subr.bf16.mxu0 0
        %1858 = vmatpush1.bf16.xpose.msra.mxu0 0
        %1859 = vmatprep.subr.bf16.mxu0 0
        %1860 = vmatpush1.bf16.xpose.msra.mxu0 0
        %1861 = vmatprep.subr.bf16.mxu0 0
        %1862 = vmatpush1.bf16.xpose.msra.mxu0 0
        %1863 = vmatprep.subr.bf16.mxu0 0
        %1864 = vmatpush1.bf16.xpose.msra.mxu0 0
        %1865 = vmatprep.subr.bf16.mxu0 0
        %1866 = vmatpush1.bf16.xpose.msra.mxu0 0
        %1867 = vmatprep.subr.bf16.mxu0 0
        %1868 = vmatpush1.bf16.xpose.msra.mxu0 0
        %1869 = vmatprep.subr.bf16.mxu0 0
        %1870 = vmatpush1.bf16.xpose.msra.mxu0 0
        %1871 = vmatprep.subr.bf16.mxu0 0
        %1872 = vmatpush1.bf16.xpose.msra.mxu0 0
        %1873 = vmatprep.subr.bf16.mxu0 0
        %1874 = vmatpush1.bf16.xpose.msra.mxu0 0
        %1875 = vmatprep.subr.bf16.mxu0 0
        %1876 = vmatpush1.bf16.xpose.msra.mxu0 0
        %1877 = vmatprep.subr.bf16.mxu0 0
        %1878 = vmatpush1.bf16.xpose.msra.mxu0 0
        %1879 = vmatprep.mubr.bf16.mxu0 0
        %1880 = vmatmul.mubr.bf16.gmra.mrb[0].mxu0 %v1842
        %v1881 = vpop.f32.mrb[0].mxu0
        %v1882 = vadd.f32 0.0, %v1881
        %v1883 = vpop.f32.mrb[0].mxu0
        %v1884 = vpop.f32.mrb[0].mxu0
        %v1885 = vadd.f32 0.0, %v1884
        %v1886 = vpop.f32.mrb[0].mxu0
        %1887 = vdwg.mxu0
        %1888 = vrot.lane.b32.xlu0 %v1740, 96
        %v1889 = vpop.permute.xlu0 %1888
        %v1891 = vsel %vm841, %v1740, 0
        %v1894 = vsel %vm841, %v1889, 0
        %1896 = vmatprep.subr.bf16.mxu0 0
        %1897 = vmatpush1.bf16.xpose.msra.mxu0 %v1894
        %1898 = vmatprep.subr.bf16.mxu0 0
        %1899 = vmatpush1.bf16.xpose.msra.mxu0 0
        %1900 = vmatprep.subr.bf16.mxu0 0
        %1901 = vmatpush1.bf16.xpose.msra.mxu0 0
        %1902 = vmatprep.subr.bf16.mxu0 0
        %1903 = vmatpush1.bf16.xpose.msra.mxu0 0
        %1904 = vmatprep.subr.bf16.mxu0 0
        %1905 = vmatpush1.bf16.xpose.msra.mxu0 0
        %1906 = vmatprep.subr.bf16.mxu0 0
        %1907 = vmatpush1.bf16.xpose.msra.mxu0 0
        %1908 = vmatprep.subr.bf16.mxu0 0
        %1909 = vmatpush1.bf16.xpose.msra.mxu0 0
        %1910 = vmatprep.subr.bf16.mxu0 0
        %1911 = vmatpush1.bf16.xpose.msra.mxu0 0
        %1912 = vmatprep.subr.bf16.mxu0 0
        %1913 = vmatpush1.bf16.xpose.msra.mxu0 0
        %1914 = vmatprep.subr.bf16.mxu0 0
        %1915 = vmatpush1.bf16.xpose.msra.mxu0 0
        %1916 = vmatprep.subr.bf16.mxu0 0
        %1917 = vmatpush1.bf16.xpose.msra.mxu0 0
        %1918 = vmatprep.subr.bf16.mxu0 0
        %1919 = vmatpush1.bf16.xpose.msra.mxu0 0
        %1920 = vmatprep.subr.bf16.mxu0 0
        %1921 = vmatpush1.bf16.xpose.msra.mxu0 0
        %1922 = vmatprep.subr.bf16.mxu0 0
        %1923 = vmatpush1.bf16.xpose.msra.mxu0 0
        %1924 = vmatprep.subr.bf16.mxu0 0
        %1925 = vmatpush1.bf16.xpose.msra.mxu0 0
        %1926 = vmatprep.subr.bf16.mxu0 0
        %1927 = vmatpush1.bf16.xpose.msra.mxu0 0
        %1928 = vmatprep.mubr.bf16.mxu0 0
        %1929 = vmatmul.mubr.bf16.gmra.mrb[0].mxu0 %v1891
        %v1930 = vpop.f32.mrb[0].mxu0
        %v1931 = vadd.f32 0.0, %v1930
        %v1932 = vpop.f32.mrb[0].mxu0
        %v1933 = vpop.f32.mrb[0].mxu0
        %v1934 = vadd.f32 0.0, %v1933
        %v1935 = vpop.f32.mrb[0].mxu0
        %1936 = vdwg.mxu0
        %v1937 = vmul.f32 %v1784, 0.35355338
        %v1938 = vmul.f32 %v1787, 0.35355338
        %v1939 = vmul.f32 %v1833, 0.35355338
        %v1940 = vmul.f32 %v1836, 0.35355338
        %v1941 = vmul.f32 %v1882, 0.35355338
        %v1942 = vmul.f32 %v1885, 0.35355338
        %v1943 = vmul.f32 %v1931, 0.35355338
        %v1944 = vmul.f32 %v1934, 0.35355338
        %v1946 = vlaneseq
        %v1947 = vshrl.u32 %v1946, 7
        %v1948 = vsub.s32 0, %v1947
        %v1949 = vrot.slane %v1687, %v1948
        %v1951 = vadd.f32 %v1937, %v1949
        %v1952 = vadd.f32 %v1938, %v1949
        %v1953 = vadd.f32 %v1939, %v1949
        %v1954 = vadd.f32 %v1940, %v1949
        %v1955 = vadd.f32 %v1941, %v1949
        %v1956 = vadd.f32 %v1942, %v1949
        %v1957 = vadd.f32 %v1943, %v1949
        %v1958 = vadd.f32 %v1944, %v1949
        %v1959 = vsel %vm1058, %v1951, -inf
        %1960 = vmax.xlane.f32.xlu0 %v1959
        %v1961 = vpop.xlane.xlu0 %1960
        %v1962 = vsel %vm1058, %v1952, -inf
        %1963 = vmax.xlane.f32.xlu0 %v1962
        %v1964 = vpop.xlane.xlu0 %1963
        %v1965 = vsel %vm1058, %v1953, -inf
        %1966 = vmax.xlane.f32.xlu0 %v1965
        %v1967 = vpop.xlane.xlu0 %1966
        %v1968 = vsel %vm1058, %v1954, -inf
        %1969 = vmax.xlane.f32.xlu0 %v1968
        %v1970 = vpop.xlane.xlu0 %1969
        %v1971 = vsel %vm1058, %v1955, -inf
        %1972 = vmax.xlane.f32.xlu0 %v1971
        %v1973 = vpop.xlane.xlu0 %1972
        %v1974 = vsel %vm1058, %v1956, -inf
        %1975 = vmax.xlane.f32.xlu0 %v1974
        %v1976 = vpop.xlane.xlu0 %1975
        %v1977 = vsel %vm1058, %v1957, -inf
        %1978 = vmax.xlane.f32.xlu0 %v1977
        %v1979 = vpop.xlane.xlu0 %1978
        %v1980 = vsel %vm1058, %v1958, -inf
        %1981 = vmax.xlane.f32.xlu0 %v1980
        %v1982 = vpop.xlane.xlu0 %1981
        %v1983 = vsub.f32 %v1951, %v1961
        %v1984 = vsub.f32 %v1952, %v1964
        %v1985 = vsub.f32 %v1953, %v1967
        %v1986 = vsub.f32 %v1954, %v1970
        %v1987 = vsub.f32 %v1955, %v1973
        %v1988 = vsub.f32 %v1956, %v1976
        %v1989 = vsub.f32 %v1957, %v1979
        %v1990 = vsub.f32 %v1958, %v1982
        %v1991 = vmul.f32 %v1983, 1.442695
        %v1992 = vpow.pop %v1991
        %v1993 = vmul.f32 %v1984, 1.442695
        %v1994 = vpow.pop %v1993
        %v1995 = vmul.f32 %v1985, 1.442695
        %v1996 = vpow.pop %v1995
        %v1997 = vmul.f32 %v1986, 1.442695
        %v1998 = vpow.pop %v1997
        %v1999 = vmul.f32 %v1987, 1.442695
        %v2000 = vpow.pop %v1999
        %v2001 = vmul.f32 %v1988, 1.442695
        %v2002 = vpow.pop %v2001
        %v2003 = vmul.f32 %v1989, 1.442695
        %v2004 = vpow.pop %v2003
        %v2005 = vmul.f32 %v1990, 1.442695
        %v2006 = vpow.pop %v2005
        %v2007 = vsel %vm1058, %v1992, 0.0
        %2008 = vadd.xlane.f32.xlu0 %v2007
        %v2009 = vpop.xlane.xlu0 %2008
        %v2010 = vsel %vm1058, %v1994, 0.0
        %2011 = vadd.xlane.f32.xlu0 %v2010
        %v2012 = vpop.xlane.xlu0 %2011
        %v2013 = vsel %vm1058, %v1996, 0.0
        %2014 = vadd.xlane.f32.xlu0 %v2013
        %v2015 = vpop.xlane.xlu0 %2014
        %v2016 = vsel %vm1058, %v1998, 0.0
        %2017 = vadd.xlane.f32.xlu0 %v2016
        %v2018 = vpop.xlane.xlu0 %2017
        %v2019 = vsel %vm1058, %v2000, 0.0
        %2020 = vadd.xlane.f32.xlu0 %v2019
        %v2021 = vpop.xlane.xlu0 %2020
        %v2022 = vsel %vm1058, %v2002, 0.0
        %2023 = vadd.xlane.f32.xlu0 %v2022
        %v2024 = vpop.xlane.xlu0 %2023
        %v2025 = vsel %vm1058, %v2004, 0.0
        %2026 = vadd.xlane.f32.xlu0 %v2025
        %v2027 = vpop.xlane.xlu0 %2026
        %v2028 = vsel %vm1058, %v2006, 0.0
        %2029 = vadd.xlane.f32.xlu0 %v2028
        %v2030 = vpop.xlane.xlu0 %2029
        %v2031 = vrcp.pop %v2009
        %v2032 = vrcp.pop %v2012
        %v2033 = vrcp.pop %v2015
        %v2034 = vrcp.pop %v2018
        %v2035 = vrcp.pop %v2021
        %v2036 = vrcp.pop %v2024
        %v2037 = vrcp.pop %v2027
        %v2038 = vrcp.pop %v2030
        %v2039 = vmul.f32 %v1992, %v2031
        %v2040 = vmul.f32 %v1994, %v2032
        %v2041 = vmul.f32 %v1996, %v2033
        %v2042 = vmul.f32 %v1998, %v2034
        %v2043 = vmul.f32 %v2000, %v2035
        %v2044 = vmul.f32 %v2002, %v2036
        %v2045 = vmul.f32 %v2004, %v2037
        %v2046 = vmul.f32 %v2006, %v2038
        %v2047 = vpack.c.bf16 %v2040, %v2039
        %v2048 = vpack.c.bf16 %v2042, %v2041
        %v2049 = vpack.c.bf16 %v2044, %v2043
        %v2050 = vpack.c.bf16 %v2046, %v2045
        %2051 = vrot.lane.b32.xlu0 %v1733, 64
        %v2052 = vpop.permute.xlu0 %2051
        %v2055 = vsel %vm1058, %v2047, 0
        %2057 = vmatprep.subr.bf16.mxu0 0
        %2058 = vmatpush1.bf16.msra.mxu0 %v2052
        %2059 = vmatprep.subr.bf16.mxu0 0
        %2060 = vmatpush1.bf16.msra.mxu0 0
        %2061 = vmatprep.subr.bf16.mxu0 0
        %2062 = vmatpush1.bf16.msra.mxu0 0
        %2063 = vmatprep.subr.bf16.mxu0 0
        %2064 = vmatpush1.bf16.msra.mxu0 0
        %2065 = vmatprep.subr.bf16.mxu0 0
        %2066 = vmatpush1.bf16.msra.mxu0 0
        %2067 = vmatprep.subr.bf16.mxu0 0
        %2068 = vmatpush1.bf16.msra.mxu0 0
        %2069 = vmatprep.subr.bf16.mxu0 0
        %2070 = vmatpush1.bf16.msra.mxu0 0
        %2071 = vmatprep.subr.bf16.mxu0 0
        %2072 = vmatpush1.bf16.msra.mxu0 0
        %2073 = vmatprep.subr.bf16.mxu0 0
        %2074 = vmatpush1.bf16.msra.mxu0 0
        %2075 = vmatprep.subr.bf16.mxu0 0
        %2076 = vmatpush1.bf16.msra.mxu0 0
        %2077 = vmatprep.subr.bf16.mxu0 0
        %2078 = vmatpush1.bf16.msra.mxu0 0
        %2079 = vmatprep.subr.bf16.mxu0 0
        %2080 = vmatpush1.bf16.msra.mxu0 0
        %2081 = vmatprep.subr.bf16.mxu0 0
        %2082 = vmatpush1.bf16.msra.mxu0 0
        %2083 = vmatprep.subr.bf16.mxu0 0
        %2084 = vmatpush1.bf16.msra.mxu0 0
        %2085 = vmatprep.subr.bf16.mxu0 0
        %2086 = vmatpush1.bf16.msra.mxu0 0
        %2087 = vmatprep.subr.bf16.mxu0 0
        %2088 = vmatpush1.bf16.msra.mxu0 0
        %2089 = vmatprep.mubr.bf16.mxu0 0
        %2090 = vmatmul.mubr.bf16.gmra.mrb[0].mxu0 %v2055
        %v2091 = vpop.f32.mrb[0].mxu0
        %v2092 = vadd.f32 0.0, %v2091
        %v2093 = vpop.f32.mrb[0].mxu0
        %v2094 = vpop.f32.mrb[0].mxu0
        %v2095 = vadd.f32 0.0, %v2094
        %v2096 = vpop.f32.mrb[0].mxu0
        %2097 = vdwg.mxu0
        %2098 = vrot.lane.b32.xlu0 %v1736, 64
        %v2099 = vpop.permute.xlu0 %2098
        %v2102 = vsel %vm1058, %v2048, 0
        %2104 = vmatprep.subr.bf16.mxu0 0
        %2105 = vmatpush1.bf16.msra.mxu0 %v2099
        %2106 = vmatprep.subr.bf16.mxu0 0
        %2107 = vmatpush1.bf16.msra.mxu0 0
        %2108 = vmatprep.subr.bf16.mxu0 0
        %2109 = vmatpush1.bf16.msra.mxu0 0
        %2110 = vmatprep.subr.bf16.mxu0 0
        %2111 = vmatpush1.bf16.msra.mxu0 0
        %2112 = vmatprep.subr.bf16.mxu0 0
        %2113 = vmatpush1.bf16.msra.mxu0 0
        %2114 = vmatprep.subr.bf16.mxu0 0
        %2115 = vmatpush1.bf16.msra.mxu0 0
        %2116 = vmatprep.subr.bf16.mxu0 0
        %2117 = vmatpush1.bf16.msra.mxu0 0
        %2118 = vmatprep.subr.bf16.mxu0 0
        %2119 = vmatpush1.bf16.msra.mxu0 0
        %2120 = vmatprep.subr.bf16.mxu0 0
        %2121 = vmatpush1.bf16.msra.mxu0 0
        %2122 = vmatprep.subr.bf16.mxu0 0
        %2123 = vmatpush1.bf16.msra.mxu0 0
        %2124 = vmatprep.subr.bf16.mxu0 0
        %2125 = vmatpush1.bf16.msra.mxu0 0
        %2126 = vmatprep.subr.bf16.mxu0 0
        %2127 = vmatpush1.bf16.msra.mxu0 0
        %2128 = vmatprep.subr.bf16.mxu0 0
        %2129 = vmatpush1.bf16.msra.mxu0 0
        %2130 = vmatprep.subr.bf16.mxu0 0
        %2131 = vmatpush1.bf16.msra.mxu0 0
        %2132 = vmatprep.subr.bf16.mxu0 0
        %2133 = vmatpush1.bf16.msra.mxu0 0
        %2134 = vmatprep.subr.bf16.mxu0 0
        %2135 = vmatpush1.bf16.msra.mxu0 0
        %2136 = vmatprep.mubr.bf16.mxu0 0
        %2137 = vmatmul.mubr.bf16.gmra.mrb[0].mxu0 %v2102
        %v2138 = vpop.f32.mrb[0].mxu0
        %v2139 = vadd.f32 0.0, %v2138
        %v2140 = vpop.f32.mrb[0].mxu0
        %v2141 = vpop.f32.mrb[0].mxu0
        %v2142 = vadd.f32 0.0, %v2141
        %v2143 = vpop.f32.mrb[0].mxu0
        %2144 = vdwg.mxu0
        %2145 = vrot.lane.b32.xlu0 %v1738, 64
        %v2146 = vpop.permute.xlu0 %2145
        %v2149 = vsel %vm1058, %v2049, 0
        %2151 = vmatprep.subr.bf16.mxu0 0
        %2152 = vmatpush1.bf16.msra.mxu0 %v2146
        %2153 = vmatprep.subr.bf16.mxu0 0
        %2154 = vmatpush1.bf16.msra.mxu0 0
        %2155 = vmatprep.subr.bf16.mxu0 0
        %2156 = vmatpush1.bf16.msra.mxu0 0
        %2157 = vmatprep.subr.bf16.mxu0 0
        %2158 = vmatpush1.bf16.msra.mxu0 0
        %2159 = vmatprep.subr.bf16.mxu0 0
        %2160 = vmatpush1.bf16.msra.mxu0 0
        %2161 = vmatprep.subr.bf16.mxu0 0
        %2162 = vmatpush1.bf16.msra.mxu0 0
        %2163 = vmatprep.subr.bf16.mxu0 0
        %2164 = vmatpush1.bf16.msra.mxu0 0
        %2165 = vmatprep.subr.bf16.mxu0 0
        %2166 = vmatpush1.bf16.msra.mxu0 0
        %2167 = vmatprep.subr.bf16.mxu0 0
        %2168 = vmatpush1.bf16.msra.mxu0 0
        %2169 = vmatprep.subr.bf16.mxu0 0
        %2170 = vmatpush1.bf16.msra.mxu0 0
        %2171 = vmatprep.subr.bf16.mxu0 0
        %2172 = vmatpush1.bf16.msra.mxu0 0
        %2173 = vmatprep.subr.bf16.mxu0 0
        %2174 = vmatpush1.bf16.msra.mxu0 0
        %2175 = vmatprep.subr.bf16.mxu0 0
        %2176 = vmatpush1.bf16.msra.mxu0 0
        %2177 = vmatprep.subr.bf16.mxu0 0
        %2178 = vmatpush1.bf16.msra.mxu0 0
        %2179 = vmatprep.subr.bf16.mxu0 0
        %2180 = vmatpush1.bf16.msra.mxu0 0
        %2181 = vmatprep.subr.bf16.mxu0 0
        %2182 = vmatpush1.bf16.msra.mxu0 0
        %2183 = vmatprep.mubr.bf16.mxu0 0
        %2184 = vmatmul.mubr.bf16.gmra.mrb[0].mxu0 %v2149
        %v2185 = vpop.f32.mrb[0].mxu0
        %v2186 = vadd.f32 0.0, %v2185
        %v2187 = vpop.f32.mrb[0].mxu0
        %v2188 = vpop.f32.mrb[0].mxu0
        %v2189 = vadd.f32 0.0, %v2188
        %v2190 = vpop.f32.mrb[0].mxu0
        %2191 = vdwg.mxu0
        %2192 = vrot.lane.b32.xlu0 %v1740, 64
        %v2193 = vpop.permute.xlu0 %2192
        %v2196 = vsel %vm1058, %v2050, 0
        %2198 = vmatprep.subr.bf16.mxu0 0
        %2199 = vmatpush1.bf16.msra.mxu0 %v2193
        %2200 = vmatprep.subr.bf16.mxu0 0
        %2201 = vmatpush1.bf16.msra.mxu0 0
        %2202 = vmatprep.subr.bf16.mxu0 0
        %2203 = vmatpush1.bf16.msra.mxu0 0
        %2204 = vmatprep.subr.bf16.mxu0 0
        %2205 = vmatpush1.bf16.msra.mxu0 0
        %2206 = vmatprep.subr.bf16.mxu0 0
        %2207 = vmatpush1.bf16.msra.mxu0 0
        %2208 = vmatprep.subr.bf16.mxu0 0
        %2209 = vmatpush1.bf16.msra.mxu0 0
        %2210 = vmatprep.subr.bf16.mxu0 0
        %2211 = vmatpush1.bf16.msra.mxu0 0
        %2212 = vmatprep.subr.bf16.mxu0 0
        %2213 = vmatpush1.bf16.msra.mxu0 0
        %2214 = vmatprep.subr.bf16.mxu0 0
        %2215 = vmatpush1.bf16.msra.mxu0 0
        %2216 = vmatprep.subr.bf16.mxu0 0
        %2217 = vmatpush1.bf16.msra.mxu0 0
        %2218 = vmatprep.subr.bf16.mxu0 0
        %2219 = vmatpush1.bf16.msra.mxu0 0
        %2220 = vmatprep.subr.bf16.mxu0 0
        %2221 = vmatpush1.bf16.msra.mxu0 0
        %2222 = vmatprep.subr.bf16.mxu0 0
        %2223 = vmatpush1.bf16.msra.mxu0 0
        %2224 = vmatprep.subr.bf16.mxu0 0
        %2225 = vmatpush1.bf16.msra.mxu0 0
        %2226 = vmatprep.subr.bf16.mxu0 0
        %2227 = vmatpush1.bf16.msra.mxu0 0
        %2228 = vmatprep.subr.bf16.mxu0 0
        %2229 = vmatpush1.bf16.msra.mxu0 0
        %2230 = vmatprep.mubr.bf16.mxu0 0
        %2231 = vmatmul.mubr.bf16.gmra.mrb[0].mxu0 %v2196
        %v2232 = vpop.f32.mrb[0].mxu0
        %v2233 = vadd.f32 0.0, %v2232
        %v2234 = vpop.f32.mrb[0].mxu0
        %v2235 = vpop.f32.mrb[0].mxu0
        %v2236 = vadd.f32 0.0, %v2235
        %v2237 = vpop.f32.mrb[0].mxu0
        %2238 = vdwg.mxu0
        %2241 = vrot.lane.b32.xlu0 %v2139, 8
        %v2242 = vpop.permute.xlu0 %2241
        %2243 = vrot.lane.b32.xlu0 %v2142, 8
        %v2244 = vpop.permute.xlu0 %2243
        %2249 = vrot.lane.b32.xlu0 %v2186, 16
        %v2250 = vpop.permute.xlu0 %2249
        %2251 = vrot.lane.b32.xlu0 %v2189, 16
        %v2252 = vpop.permute.xlu0 %2251
        %2257 = vrot.lane.b32.xlu0 %v2233, 24
        %v2258 = vpop.permute.xlu0 %2257
        %2259 = vrot.lane.b32.xlu0 %v2236, 24
        %v2260 = vpop.permute.xlu0 %2259
        %v2263 = vsel %vm841, %v2092, %v2242
        %v2264 = vsel %vm841, %v2095, %v2244
        %v2265 = vsel %vm1058, %v2263, %v2250
        %v2266 = vsel %vm1058, %v2264, %v2252
        %v2267 = vsel %vm1367, %v2265, %v2258
        %v2268 = vsel %vm1367, %v2266, %v2260
        %v2269 = vpack.c.bf16 %v2268, %v2267
        %v2271 = vsel %vm786, %v2269, 0
        %2273 = vmatprep.subr.bf16.mxu0 0
        %2274 = vmatpush1.bf16.msra.mxu0 %v1385
        %2275 = vmatprep.subr.bf16.mxu0 0
        %2276 = vmatpush1.bf16.msra.mxu0 %v1386
        %2277 = vmatprep.subr.bf16.mxu0 0
        %2278 = vmatpush1.bf16.msra.mxu0 0
        %2279 = vmatprep.subr.bf16.mxu0 0
        %2280 = vmatpush1.bf16.msra.mxu0 0
        %2281 = vmatprep.subr.bf16.mxu0 0
        %2282 = vmatpush1.bf16.msra.mxu0 0
        %2283 = vmatprep.subr.bf16.mxu0 0
        %2284 = vmatpush1.bf16.msra.mxu0 0
        %2285 = vmatprep.subr.bf16.mxu0 0
        %2286 = vmatpush1.bf16.msra.mxu0 0
        %2287 = vmatprep.subr.bf16.mxu0 0
        %2288 = vmatpush1.bf16.msra.mxu0 0
        %2289 = vmatprep.subr.bf16.mxu0 0
        %2290 = vmatpush1.bf16.msra.mxu0 0
        %2291 = vmatprep.subr.bf16.mxu0 0
        %2292 = vmatpush1.bf16.msra.mxu0 0
        %2293 = vmatprep.subr.bf16.mxu0 0
        %2294 = vmatpush1.bf16.msra.mxu0 0
        %2295 = vmatprep.subr.bf16.mxu0 0
        %2296 = vmatpush1.bf16.msra.mxu0 0
        %2297 = vmatprep.subr.bf16.mxu0 0
        %2298 = vmatpush1.bf16.msra.mxu0 0
        %2299 = vmatprep.subr.bf16.mxu0 0
        %2300 = vmatpush1.bf16.msra.mxu0 0
        %2301 = vmatprep.subr.bf16.mxu0 0
        %2302 = vmatpush1.bf16.msra.mxu0 0
        %2303 = vmatprep.subr.bf16.mxu0 0
        %2304 = vmatpush1.bf16.msra.mxu0 0
        %2305 = vmatprep.mubr.bf16.mxu0 0
        %2306 = vmatmul.mubr.bf16.gmra.mrb[0].mxu0 %v2271
        %v2307 = vpop.f32.mrb[0].mxu0
        %v2308 = vadd.f32 %v1375, %v2307
        %v2309 = vpop.f32.mrb[0].mxu0
        %v2310 = vpop.f32.mrb[0].mxu0
        %v2311 = vadd.f32 %v1375, %v2310
        %v2312 = vpop.f32.mrb[0].mxu0
        %2313 = vdwg.mxu0
        %v2314 = vadd.f32 %v1682, %v2308
        %v2315 = vadd.f32 %v1683, %v2311
        %v2316 = vsel %vm786, %v2314, 0.0
        %2317 = vadd.xlane.f32.xlu0 %v2316
        %v2318 = vpop.xlane.xlu0 %2317
        %v2319 = vsel %vm786, %v2315, 0.0
        %2320 = vadd.xlane.f32.xlu0 %v2319
        %v2321 = vpop.xlane.xlu0 %2320
        %v2322 = vmul.f32 %v2318, %v1441
        %v2323 = vmul.f32 %v2321, %v1441
        %v2324 = vsub.f32 %v2314, %v2322
        %v2325 = vsub.f32 %v2315, %v2323
        %v2326 = vmul.f32 %v2324, %v2324
        %v2327 = vmul.f32 %v2325, %v2325
        %v2328 = vsel %vm786, %v2326, 0.0
        %2329 = vadd.xlane.f32.xlu0 %v2328
        %v2330 = vpop.xlane.xlu0 %2329
        %v2331 = vsel %vm786, %v2327, 0.0
        %2332 = vadd.xlane.f32.xlu0 %v2331
        %v2333 = vpop.xlane.xlu0 %2332
        %v2334 = vmul.f32 %v2330, %v1441
        %v2335 = vmul.f32 %v2333, %v1441
        %v2336 = vadd.f32 %v2334, 1e-12
        %v2337 = vadd.f32 %v2335, 1e-12
        %v2338 = vrsqrt.pop %v2336
        %v2339 = vrsqrt.pop %v2337
        %v2340 = vmul.f32 %v2324, %v2338
        %v2341 = vmul.f32 %v2325, %v2339
        %v2342 = vmul.f32 %v2340, %v1466
        %v2343 = vmul.f32 %v2341, %v1466
        %v2344 = vadd.f32 %v2342, %v1474
        %v2345 = vadd.f32 %v2343, %v1474
        %v2346 = vpack.c.bf16 %v2345, %v2344
        %v2348 = vsel %vm786, %v2346, 0
        %2350 = vmatprep.subr.bf16.mxu0 0
        %2351 = vmatpush1.bf16.msra.mxu0 %v1493
        %2352 = vmatprep.subr.bf16.mxu0 0
        %2353 = vmatpush1.bf16.msra.mxu0 %v1494
        %2354 = vmatprep.subr.bf16.mxu0 0
        %2355 = vmatpush1.bf16.msra.mxu0 0
        %2356 = vmatprep.subr.bf16.mxu0 0
        %2357 = vmatpush1.bf16.msra.mxu0 0
        %2358 = vmatprep.subr.bf16.mxu0 0
        %2359 = vmatpush1.bf16.msra.mxu0 0
        %2360 = vmatprep.subr.bf16.mxu0 0
        %2361 = vmatpush1.bf16.msra.mxu0 0
        %2362 = vmatprep.subr.bf16.mxu0 0
        %2363 = vmatpush1.bf16.msra.mxu0 0
        %2364 = vmatprep.subr.bf16.mxu0 0
        %2365 = vmatpush1.bf16.msra.mxu0 0
        %2366 = vmatprep.subr.bf16.mxu0 0
        %2367 = vmatpush1.bf16.msra.mxu0 0
        %2368 = vmatprep.subr.bf16.mxu0 0
        %2369 = vmatpush1.bf16.msra.mxu0 0
        %2370 = vmatprep.subr.bf16.mxu0 0
        %2371 = vmatpush1.bf16.msra.mxu0 0
        %2372 = vmatprep.subr.bf16.mxu0 0
        %2373 = vmatpush1.bf16.msra.mxu0 0
        %2374 = vmatprep.subr.bf16.mxu0 0
        %2375 = vmatpush1.bf16.msra.mxu0 0
        %2376 = vmatprep.subr.bf16.mxu0 0
        %2377 = vmatpush1.bf16.msra.mxu0 0
        %2378 = vmatprep.subr.bf16.mxu0 0
        %2379 = vmatpush1.bf16.msra.mxu0 0
        %2380 = vmatprep.subr.bf16.mxu0 0
        %2381 = vmatpush1.bf16.msra.mxu0 0
        %2382 = vmatprep.mubr.bf16.mxu0 0
        %2383 = vmatmul.mubr.bf16.gmra.mrb[0].mxu0 %v2348
        %v2384 = vpop.f32.mrb[0].mxu0
        %v2385 = vadd.f32 %v1483, %v2384
        %v2386 = vpop.f32.mrb[0].mxu0
        %v2387 = vpop.f32.mrb[0].mxu0
        %v2388 = vadd.f32 %v1483, %v2387
        %v2389 = vpop.f32.mrb[0].mxu0
        %2390 = vdwg.mxu0
        %v2391 = vmul.f32 %v2385, 0.5
        %v2392 = vmul.f32 %v2388, 0.5
        %v2393 = vmul.f32 %v2385, 0.044715
        %v2394 = vmul.f32 %v2388, 0.044715
        %v2395 = vmul.f32 %v2393, %v2385
        %v2396 = vmul.f32 %v2394, %v2388
        %v2397 = vmul.f32 %v2395, %v2385
        %v2398 = vmul.f32 %v2396, %v2388
        %v2399 = vadd.f32 %v2385, %v2397
        %v2400 = vadd.f32 %v2388, %v2398
        %v2401 = vmul.f32 %v2399, 0.7978846
        %v2402 = vmul.f32 %v2400, 0.7978846
        %v2403 = vtanh.pop %v2401
        %v2404 = vtanh.pop %v2402
        %v2405 = vadd.f32 %v2403, 1.0
        %v2406 = vadd.f32 %v2404, 1.0
        %v2407 = vmul.f32 %v2391, %v2405
        %v2408 = vmul.f32 %v2392, %v2406
        %v2409 = vpack.c.bf16 %v2408, %v2407
        %v2411 = vsel %vm1590, %v2409, 0
        %2413 = vmatprep.subr.bf16.mxu0 0
        %2414 = vmatpush1.bf16.msra.mxu0 %v1582
        %2415 = vmatprep.subr.bf16.mxu0 0
        %2416 = vmatpush1.bf16.msra.mxu0 %v1583
        %2417 = vmatprep.subr.bf16.mxu0 0
        %2418 = vmatpush1.bf16.msra.mxu0 %v1584
        %2419 = vmatprep.subr.bf16.mxu0 0
        %2420 = vmatpush1.bf16.msra.mxu0 %v1585
        %2421 = vmatprep.subr.bf16.mxu0 0
        %2422 = vmatpush1.bf16.msra.mxu0 0
        %2423 = vmatprep.subr.bf16.mxu0 0
        %2424 = vmatpush1.bf16.msra.mxu0 0
        %2425 = vmatprep.subr.bf16.mxu0 0
        %2426 = vmatpush1.bf16.msra.mxu0 0
        %2427 = vmatprep.subr.bf16.mxu0 0
        %2428 = vmatpush1.bf16.msra.mxu0 0
        %2429 = vmatprep.subr.bf16.mxu0 0
        %2430 = vmatpush1.bf16.msra.mxu0 0
        %2431 = vmatprep.subr.bf16.mxu0 0
        %2432 = vmatpush1.bf16.msra.mxu0 0
        %2433 = vmatprep.subr.bf16.mxu0 0
        %2434 = vmatpush1.bf16.msra.mxu0 0
        %2435 = vmatprep.subr.bf16.mxu0 0
        %2436 = vmatpush1.bf16.msra.mxu0 0
        %2437 = vmatprep.subr.bf16.mxu0 0
        %2438 = vmatpush1.bf16.msra.mxu0 0
        %2439 = vmatprep.subr.bf16.mxu0 0
        %2440 = vmatpush1.bf16.msra.mxu0 0
        %2441 = vmatprep.subr.bf16.mxu0 0
        %2442 = vmatpush1.bf16.msra.mxu0 0
        %2443 = vmatprep.subr.bf16.mxu0 0
        %2444 = vmatpush1.bf16.msra.mxu0 0
        %2445 = vmatprep.mubr.bf16.mxu0 0
        %2446 = vmatmul.mubr.bf16.gmra.mrb[0].mxu0 %v2411
        %v2447 = vpop.f32.mrb[0].mxu0
        %v2448 = vadd.f32 %v1564, %v2447
        %v2449 = vpop.f32.mrb[0].mxu0
        %v2450 = vpop.f32.mrb[0].mxu0
        %v2451 = vadd.f32 %v1564, %v2450
        %v2452 = vpop.f32.mrb[0].mxu0
        %2453 = vdwg.mxu0
        %v2454 = vadd.f32 %v2344, %v2448
        %v2455 = vadd.f32 %v2345, %v2451
        %v2456 = vsel %vm786, %v2454, 0.0
        %2457 = vadd.xlane.f32.xlu0 %v2456
        %v2458 = vpop.xlane.xlu0 %2457
        %v2459 = vsel %vm786, %v2455, 0.0
        %2460 = vadd.xlane.f32.xlu0 %v2459
        %v2461 = vpop.xlane.xlu0 %2460
        %v2462 = vmul.f32 %v2458, %v1441
        %v2463 = vmul.f32 %v2461, %v1441
        %v2464 = vsub.f32 %v2454, %v2462
        %v2465 = vsub.f32 %v2455, %v2463
        %v2466 = vmul.f32 %v2464, %v2464
        %v2467 = vmul.f32 %v2465, %v2465
        %v2468 = vsel %vm786, %v2466, 0.0
        %2469 = vadd.xlane.f32.xlu0 %v2468
        %v2470 = vpop.xlane.xlu0 %2469
        %v2471 = vsel %vm786, %v2467, 0.0
        %2472 = vadd.xlane.f32.xlu0 %v2471
        %v2473 = vpop.xlane.xlu0 %2472
        %v2474 = vmul.f32 %v2470, %v1441
        %v2475 = vmul.f32 %v2473, %v1441
        %v2476 = vadd.f32 %v2474, 1e-12
        %v2477 = vadd.f32 %v2475, 1e-12
        %v2478 = vrsqrt.pop %v2476
        %v2479 = vrsqrt.pop %v2477
        %v2480 = vmul.f32 %v2464, %v2478
        %v2481 = vmul.f32 %v2465, %v2479
        %v2482 = vmul.f32 %v2480, %v1667
        %v2483 = vmul.f32 %v2481, %v1667
        %v2484 = vadd.f32 %v2482, %v1675
        %v2485 = vadd.f32 %v2483, %v1675
        %2486 = vst.msk [vmem:[%s1681] sm:$0xff] %vm786, %v2484
        %2487 = vst.msk [vmem:[%s1681 + $0x8] sm:$0xff] %vm786, %v2485
        %p2488 = scmp.eq.s32.totalorder %s35, 1
        // Predicated region
        $region101: #{tpu_custom_call.1} parent=75 // pred_check
          %p2489 = pneg %p2488
        $region102: #{tpu_custom_call.1} parent=75 // pred_check_branch
          %2491 = sbr.rel (%p2489) target = $region104
        $region103: #{tpu_custom_call.1} parent=75 // pred_region
          %v2492 = vld [vmem:[#allocation2] sm:$0xff]
          %v2493 = vld [vmem:[#allocation2 + $0x8] sm:$0xff]
          %v2494 = vld [vmem:[#allocation2 + $0x10] sm:$0xff]
          %v2495 = vld [vmem:[#allocation2 + $0x18] sm:$0xff]
          %v2496 = vpack.c.bf16 %v2493, %v2492
          %v2497 = vpack.c.bf16 %v2495, %v2494
          %v2500 = vunpack.c.l.b16 %v2496
          %v2501 = vunpack.c.h.b16 %v2496
          %v2502 = vunpack.c.l.b16 %v2497
          %v2503 = vunpack.c.h.b16 %v2497
          %v2504 = vpack.c.b16 %v2500, %v2500
          %v2505 = vpack.c.b16 %v2501, %v2501
          %v2506 = vpack.c.b16 %v2502, %v2502
          %v2507 = vpack.c.b16 %v2503, %v2503
          %vm2512 = vcmask 257024
          %2513 = vst.msk [vmem:[#allocation12] sm:$0xf] %vm2512, %v2504
          %2514 = vst.msk [vmem:[#allocation12 + $0x4] sm:$0xf] %vm2512, %v2505
          %2515 = vst.msk [vmem:[#allocation12 + $0x8] sm:$0xf] %vm2512, %v2506
          %2516 = vst.msk [vmem:[#allocation12 + $0xc] sm:$0xf] %vm2512, %v2507
        $region104: #{tpu_custom_call.1} parent=75 // pred_fallthru
          _
        // Predicated region
        $region105: #{tpu_custom_call.1} parent=75 // pred_check
          %p2517 = pneg %p402
        $region106: #{tpu_custom_call.1} parent=75 // pred_check_branch
          %2519 = sbr.rel (%p2517) target = $region108
        $region107: #{tpu_custom_call.1} parent=75 // pred_region
          %s2521 = ssub.s32 256, 256
          %2522 = vsyncadd [#allocation5], %s2521
          %s2523 = sshll.u32 [#allocation12], 4
          %s2524 = int_to_ptr.vmem [resolvable:$true] %s2523
          %2529 = dma.vmem_to_hbm [thread:$0]  %s2524, 256, %s14, [#allocation5], 64, 64, 4
        $region108: #{tpu_custom_call.1} parent=75 // pred_fallthru
          _
        // Predicated region
        $region109: #{tpu_custom_call.1} parent=75 // pred_check
          %p2530 = pneg %p402
        $region110: #{tpu_custom_call.1} parent=75 // pred_check_branch
          %2532 = sbr.rel (%p2530) target = $region112
        $region111: #{tpu_custom_call.1} parent=75 // pred_region
          %2533 = dma.done [#allocation5], 256
        $region112: #{tpu_custom_call.1} parent=75 // pred_fallthru
          _
      $region76: #{tpu_custom_call.1} parent=5 // pred_fallthru
        _
      %p2534 = scmp.le.s32.totalorder 2, %s30
      // Predicated region
      $region113: #{tpu_custom_call.1} parent=5 // pred_check
        %p2535 = pneg %p2534
      $region114: #{tpu_custom_call.1} parent=5 // pred_check_branch
        %2537 = sbr.rel (%p2535) target = $region116
      $region115: #{tpu_custom_call.1} parent=5 // pred_region
        %s2538 = ssub.s32 %s30, 2
      $region116: #{tpu_custom_call.1} parent=5 // pred_fallthru
        _
    $region6: #{tpu_custom_call.1} parent=1 // loop_footer
      %s34 = sadd.s32 1, %s30
    $region7: #{tpu_custom_call.1} parent=1 // loop_footer_branch
      %29 = sbr.rel target = $region3
    $region8: #{tpu_custom_call.1} parent=1 // loop_exit
      _
    %2539 = vsyncpa [#allocation4], 1
    %s2540 = scalar_lea.sflag [#allocation4], 1
    %2541 = vsyncpa %s2540, 1
    %2542 = vsyncpa [#allocation7], 1
    %s2543 = scalar_lea.sflag [#allocation7], 1
    %2544 = vsyncpa %s2543, 1
    %2545 = vsyncpa [#allocation10], 1
    %s2546 = scalar_lea.sflag [#allocation10], 1
    %2547 = vsyncpa %s2546, 1
    %2548 = vsyncpa [#allocation5], 1
    %s2549 = scalar_lea.sflag [#allocation5], 1
    %2550 = vsyncpa %s2549, 1

</llo_original>
